<compile_context>
chip_gen: v5e
topology: v5e:2x2
jax: 0.10.0
libtpu: 0.0.40
codegen_flags: <defaults>
</compile_context>

<pallas_src>
import jax
import jax.numpy as jnp
from jax import lax
from jax.experimental import pallas as pl
from jax.experimental.pallas import tpu as pltpu


def _vmem_limit_bytes():
    """~3/4 of physical VMEM, capped at 96 MiB (96 MiB on v5e/v6e, 48 MiB on v7x)."""
    cap = 64 * 1024 * 1024  # conservative fallback (v7x per-core size)
    try:
        cap = int(getattr(pltpu.get_tpu_info(), "vmem_capacity_bytes", cap))
    except Exception:
        pass
    return min(96 * 1024 * 1024, (cap * 3) // 4)


# Contract LHS dim 0 with RHS dim 0 (transposed-LHS matmul): (K,M) x (K,N) -> (M,N)
_DN_T = (((0,), (0,)), ((), ()))


def rfm_edge_kernel(
    # per-edge tiles (tiled along the grid)
    edge_ref, ids_ref,
    # whole-graph data (resident in VMEM, fetched once)
    node_ref, g_ref,
    # edge MLP weights (fc_edge split along the concat axis + fc_edge2)
    we1_e, we1_s, we1_d, we1_u, be1, we2, be2,
    # outputs
    e_out_ref, h_part_ref, ec_part_ref,
    # scratch (bf16 projections, computed once per core)
    sproj, dproj, ugproj,
):
    f32 = jnp.float32
    bf16 = jnp.bfloat16
    t = pl.program_id(1)
    TE = edge_ref.shape[0]
    N = node_ref.shape[0]
    B = g_ref.shape[0]

    # ---- once per core, at the first edge tile: projections + accumulator init
    @pl.when(t == 0)
    def _init():
        nf = node_ref[...]
        sproj[...] = jnp.dot(nf, we1_s[...], preferred_element_type=f32).astype(bf16)
        dproj[...] = jnp.dot(nf, we1_d[...], preferred_element_type=f32).astype(bf16)
        ugproj[...] = jnp.dot(g_ref[...], we1_u[...],
                              preferred_element_type=f32).astype(bf16)
        h_part_ref[...] = jnp.zeros(h_part_ref.shape, h_part_ref.dtype)
        ec_part_ref[...] = jnp.zeros(ec_part_ref.shape, ec_part_ref.dtype)

    # ---- edge stage: one tile of TE edges per grid step ----------------------
    ids = ids_ref[...]                 # (8, TE) int32; rows 0/1/2 = src/dst/e_gid
    src_ids = ids[0:1, :]
    dst_ids = ids[1:2, :]
    eg_ids = ids[2:3, :]

    # column-oriented exact 0/1 selectors, built in registers (single cast)
    oh_src = (src_ids == lax.broadcasted_iota(jnp.int32, (N, TE), 0)).astype(bf16)
    oh_dst = (dst_ids == lax.broadcasted_iota(jnp.int32, (N, TE), 0)).astype(bf16)
    oh_eg = (eg_ids == lax.broadcasted_iota(jnp.int32, (B, TE), 0)).astype(bf16)

    # fc_edge(cat[e, src, dst, u]) == e@We_e + gather(node@We_s) + gather(node@We_d)
    #                                 + gather(u@We_u); gathers are oh^T @ proj.
    eh = (jnp.dot(edge_ref[...], we1_e[...], preferred_element_type=f32)
          + lax.dot_general(oh_src, sproj[...], _DN_T, preferred_element_type=f32)
          + lax.dot_general(oh_dst, dproj[...], _DN_T, preferred_element_type=f32)
          + lax.dot_general(oh_eg, ugproj[...], _DN_T, preferred_element_type=f32)
          + be1[...])
    eh = jnp.maximum(eh, 0.0)
    e_new = jnp.dot(eh.astype(bf16), we2[...], preferred_element_type=f32) + be2[...]
    e_out_ref[...] = e_new.astype(e_out_ref.dtype)

    # message passing (h) and per-graph edge readout: reuse the same one-hots
    e_bf = e_new.astype(bf16)
    h_part_ref[0] = h_part_ref[0] + jnp.dot(oh_dst, e_bf, preferred_element_type=f32)
    ec_part_ref[0] = ec_part_ref[0] + jnp.dot(oh_eg, e_bf, preferred_element_type=f32)


def rfm_finalize_kernel(
    h_parts_ref, ec_parts_ref, node_ref, g_ref, ng_ref,
    wn1_n, wn1_h, wn1_u, bn1, wn2, bn2,
    wu1_n, wu1_e, wu1_g, bu1, wu2, bu2,
    n_out_ref, u_out_ref,
):
    f32 = jnp.float32
    bf16 = jnp.bfloat16
    N = node_ref.shape[0]
    B = g_ref.shape[0]

    # reduce the per-core partial accumulators (NC is 1 or 2; static loop)
    h = h_parts_ref[0]
    ec = ec_parts_ref[0]
    for c in range(1, h_parts_ref.shape[0]):
        h = h + h_parts_ref[c]
        ec = ec + ec_parts_ref[c]

    nf = node_ref[...]
    g = g_ref[...]
    oh_ng = (ng_ref[...] == lax.broadcasted_iota(jnp.int32, (B, N), 0)).astype(bf16)

    # node MLP: fc_node(cat[node, h, u[n_gid]])
    un_proj = jnp.dot(g, wn1_u[...], preferred_element_type=f32).astype(bf16)
    nh = (jnp.dot(nf, wn1_n[...], preferred_element_type=f32)
          + jnp.dot(h.astype(bf16), wn1_h[...], preferred_element_type=f32)
          + lax.dot_general(oh_ng, un_proj, _DN_T, preferred_element_type=f32)
          + bn1[...])
    nh = jnp.maximum(nh, 0.0)
    n_new = jnp.dot(nh.astype(bf16), wn2[...], preferred_element_type=f32) + bn2[...]
    n_out_ref[...] = n_new.astype(n_out_ref.dtype)

    # global MLP: fc_u(cat[n_comb, e_comb, u])
    n_comb = jnp.dot(oh_ng, n_new.astype(bf16), preferred_element_type=f32)
    uh = (jnp.dot(n_comb.astype(bf16), wu1_n[...], preferred_element_type=f32)
          + jnp.dot(ec.astype(bf16), wu1_e[...], preferred_element_type=f32)
          + jnp.dot(g, wu1_g[...], preferred_element_type=f32)
          + bu1[...])
    uh = jnp.maximum(uh, 0.0)
    u_out_ref[...] = (jnp.dot(uh.astype(bf16), wu2[...], preferred_element_type=f32)
                      + bu2[...]).astype(u_out_ref.dtype)


def rfm_block_forward(edge_feat, node_feat, g_repr, src, dst, e_gid, n_gid,
                      params, *, edge_tile=1024, e_out_dtype=jnp.bfloat16):
    """Two pallas_calls: an edge-tiled kernel (dominant work, 2-D grid with a
    'parallel' core axis + 'arbitrary' tile axis) and a tiny finalize kernel."""
    E, De = edge_feat.shape
    N, Dn = node_feat.shape
    B, Du = g_repr.shape
    H = params["be1"].shape[-1]
    O = params["be2"].shape[-1]
    bf16, f32, i32 = jnp.bfloat16, jnp.float32, jnp.int32

    assert edge_tile % 128 == 0, "edge_tile must be a multiple of 128"
    T = pl.cdiv(E, edge_tile)
    NC = 2 if T >= 2 else 1          # use both TensorCores on v7x when possible
    T_sub = pl.cdiv(T, NC)
    E_pad = NC * T_sub * edge_tile
    pad = E_pad - E

    # per-edge streams; padded ids = -1 so padded edges select / contribute nothing
    edge_p = jnp.pad(edge_feat.astype(bf16), ((0, pad), (0, 0)))
    ids = jnp.full((8, E_pad), -1, dtype=i32)
    ids = ids.at[0, :E].set(src.astype(i32))
    ids = ids.at[1, :E].set(dst.astype(i32))
    ids = ids.at[2, :E].set(e_gid.astype(i32))

    # split first-layer weights along the concatenation axis
    We1 = params["We1"].astype(bf16)
    we1_e, we1_s = We1[:De], We1[De:De + Dn]
    we1_d, we1_u = We1[De + Dn:De + 2 * Dn], We1[De + 2 * Dn:]
    Wn1 = params["Wn1"].astype(bf16)
    wn1_n, wn1_h, wn1_u = Wn1[:Dn], Wn1[Dn:Dn + O], Wn1[Dn + O:]
    Wu1 = params["Wu1"].astype(bf16)
    wu1_n, wu1_e, wu1_g = Wu1[:O], Wu1[O:2 * O], Wu1[2 * O:]

    # ---------------- stage 1: edge MLP + h / e_comb partial accumulation -----
    edge_inputs = (
        edge_p, ids,
        node_feat.astype(bf16), g_repr.astype(bf16),
        we1_e, we1_s, we1_d, we1_u,
        params["be1"].astype(f32), params["We2"].astype(bf16),
        params["be2"].astype(f32),
    )

    def full2(a):  # whole array resident in VMEM, same block every grid step
        return pl.BlockSpec(a.shape, lambda c, t: (0,) * a.ndim)

    in_specs = [
        pl.BlockSpec((edge_tile, De), lambda c, t: (c * T_sub + t, 0)),  # edge tile
        pl.BlockSpec((8, edge_tile), lambda c, t: (0, c * T_sub + t)),   # packed ids
    ] + [full2(a) for a in edge_inputs[2:]]

    out_shape = (
        jax.ShapeDtypeStruct((E_pad, O), e_out_dtype),
        jax.ShapeDtypeStruct((NC, N, O), f32),
        jax.ShapeDtypeStruct((NC, B, O), f32),
    )
    out_specs = (
        pl.BlockSpec((edge_tile, O), lambda c, t: (c * T_sub + t, 0)),
        pl.BlockSpec((1, N, O), lambda c, t: (c, 0, 0)),
        pl.BlockSpec((1, B, O), lambda c, t: (c, 0, 0)),
    )

    e_out, h_parts, ec_parts = pl.pallas_call(
        rfm_edge_kernel,
        out_shape=out_shape,
        grid_spec=pltpu.PrefetchScalarGridSpec(
            num_scalar_prefetch=0,
            grid=(NC, T_sub),
            in_specs=in_specs,
            out_specs=out_specs,
            scratch_shapes=[
                pltpu.VMEM((N, H), bf16),   # node_feat @ We1_src
                pltpu.VMEM((N, H), bf16),   # node_feat @ We1_dst
                pltpu.VMEM((B, H), bf16),   # g_repr    @ We1_u
            ],
        ),
        compiler_params=pltpu.CompilerParams(
            dimension_semantics=("parallel", "arbitrary"),
            vmem_limit_bytes=_vmem_limit_bytes(),
        ),
    )(*edge_inputs)

    # ---------------- stage 2: partial reduce + node MLP + readouts + global --
    fin_inputs = (
        h_parts, ec_parts,
        node_feat.astype(bf16), g_repr.astype(bf16),
        n_gid.astype(i32).reshape(1, N),
        wn1_n, wn1_h, wn1_u, params["bn1"].astype(f32),
        params["Wn2"].astype(bf16), params["bn2"].astype(f32),
        wu1_n, wu1_e, wu1_g, params["bu1"].astype(f32),
        params["Wu2"].astype(bf16), params["bu2"].astype(f32),
    )

    def full1(a):
        return pl.BlockSpec(a.shape, lambda i: (0,) * a.ndim)

    n_out, u_out = pl.pallas_call(
        rfm_finalize_kernel,
        out_shape=(jax.ShapeDtypeStruct((N, O), f32),
                   jax.ShapeDtypeStruct((B, O), f32)),
        grid_spec=pltpu.PrefetchScalarGridSpec(
            num_scalar_prefetch=0,
            grid=(1,),
            in_specs=[full1(a) for a in fin_inputs],
            out_specs=(pl.BlockSpec((N, O), lambda i: (0, 0)),
                       pl.BlockSpec((B, O), lambda i: (0, 0))),
        ),
        compiler_params=pltpu.CompilerParams(
            dimension_semantics=("arbitrary",),
        ),
    )(*fin_inputs)

    return e_out[:E], n_out, u_out


def rfm_block_reference(edge_feat, node_feat, g_repr, src, dst, e_gid, n_gid, params):
    """Pure-JAX f32 reference mirroring the PyTorch/DGL forward."""
    relu = jax.nn.relu
    N = node_feat.shape[0]
    B = g_repr.shape[0]

    inp_e = jnp.concatenate(
        [edge_feat, node_feat[src], node_feat[dst], g_repr[e_gid]], axis=-1)
    e_new = relu(inp_e @ params["We1"] + params["be1"]) @ params["We2"] + params["be2"]

    h = jax.ops.segment_sum(e_new, dst, num_segments=N)

    inp_n = jnp.concatenate([node_feat, h, g_repr[n_gid]], axis=-1)
    n_new = relu(inp_n @ params["Wn1"] + params["bn1"]) @ params["Wn2"] + params["bn2"]

    e_comb = jax.ops.segment_sum(e_new, e_gid, num_segments=B)
    n_comb = jax.ops.segment_sum(n_new, n_gid, num_segments=B)

    inp_u = jnp.concatenate([n_comb, e_comb, g_repr], axis=-1)
    u_out = relu(inp_u @ params["Wu1"] + params["bu1"]) @ params["Wu2"] + params["bu2"]
    return e_new, n_new, u_out


if __name__ == "__main__":
    # Small synthetic batched graph: B=2 graphs, each 4 nodes, fully connected
    # directed (no self loops) -> 12 edges per graph, 24 edges total.
    B = 2
    nodes_per_graph = 4
    Dn, De, Du = 6, 5, 7       # node / edge / global feature dims
    H, O = 32, 16              # hidden_dim, dim_out

    src_list, dst_list, e_gid_list, n_gid_list = [], [], [], []
    for g in range(B):
        base = g * nodes_per_graph
        for i in range(nodes_per_graph):
            n_gid_list.append(g)
            for j in range(nodes_per_graph):
                if i != j:
                    src_list.append(base + i)
                    dst_list.append(base + j)
                    e_gid_list.append(g)
    src = jnp.array(src_list, dtype=jnp.int32)
    dst = jnp.array(dst_list, dtype=jnp.int32)
    e_gid = jnp.array(e_gid_list, dtype=jnp.int32)
    n_gid = jnp.array(n_gid_list, dtype=jnp.int32)
    E = src.shape[0]                    # 24
    N = B * nodes_per_graph             # 8

    dim_in_edge = De + 2 * Dn + Du      # cat[edge, src, dst, u]
    dim_in_node = Dn + O + Du           # cat[node, h, u]
    dim_in_u = O + O + Du               # cat[n_comb, e_comb, g]

    key = jax.random.PRNGKey(0)
    ks = jax.random.split(key, 16)

    def init_w(k, shape, scale=0.1):
        return (scale * jax.random.normal(k, shape)).astype(jnp.float32)

    params = {
        "We1": init_w(ks[0], (dim_in_edge, H)), "be1": init_w(ks[1], (1, H)),
        "We2": init_w(ks[2], (H, O)),           "be2": init_w(ks[3], (1, O)),
        "Wn1": init_w(ks[4], (dim_in_node, H)), "bn1": init_w(ks[5], (1, H)),
        "Wn2": init_w(ks[6], (H, O)),           "bn2": init_w(ks[7], (1, O)),
        "Wu1": init_w(ks[8], (dim_in_u, H)),    "bu1": init_w(ks[9], (1, H)),
        "Wu2": init_w(ks[10], (H, O)),          "bu2": init_w(ks[11], (1, O)),
    }

    edge_feat = init_w(ks[12], (E, De), scale=1.0)
    node_feat = init_w(ks[13], (N, Dn), scale=1.0)
    g_repr = init_w(ks[14], (B, Du), scale=1.0)

    e_out, n_out, u_out = rfm_block_forward(
        edge_feat, node_feat, g_repr, src, dst, e_gid, n_gid, params)
    jax.block_until_ready((e_out, n_out, u_out))

    e_ref, n_ref, u_ref = rfm_block_reference(
        edge_feat, node_feat, g_repr, src, dst, e_gid, n_gid, params)

    # bf16 MXU operands (f32 accumulation) + bf16 e_out writeback -> bf16-level tol
    assert jnp.allclose(e_out.astype(jnp.float32), e_ref, atol=2e-2, rtol=2e-2)
    assert jnp.allclose(n_out, n_ref, atol=2e-2, rtol=2e-2)
    assert jnp.allclose(u_out, u_ref, atol=2e-2, rtol=2e-2)

    print("KERNEL_OK")
</pallas_src>

<mosaic_0001>
module attributes {stable_mosaic.version = 11 : i64} {
  func.func @rfm_edge_kernel(%arg0: i32, %arg1: i32, %arg2: memref<1024x5xbf16, #tpu.memory_space<vmem>>, %arg3: memref<8x1024xi32, #tpu.memory_space<vmem>>, %arg4: memref<8x6xbf16, #tpu.memory_space<vmem>>, %arg5: memref<2x7xbf16, #tpu.memory_space<vmem>>, %arg6: memref<5x32xbf16, #tpu.memory_space<vmem>>, %arg7: memref<6x32xbf16, #tpu.memory_space<vmem>>, %arg8: memref<6x32xbf16, #tpu.memory_space<vmem>>, %arg9: memref<7x32xbf16, #tpu.memory_space<vmem>>, %arg10: memref<1x32xf32, #tpu.memory_space<vmem>>, %arg11: memref<32x16xbf16, #tpu.memory_space<vmem>>, %arg12: memref<1x16xf32, #tpu.memory_space<vmem>>, %arg13: memref<1024x16xbf16, #tpu.memory_space<vmem>>, %arg14: memref<1x8x16xf32, #tpu.memory_space<vmem>>, %arg15: memref<1x2x16xf32, #tpu.memory_space<vmem>>, %arg16: memref<8x32xbf16, #tpu.memory_space<vmem>>, %arg17: memref<8x32xbf16, #tpu.memory_space<vmem>>, %arg18: memref<2x32xbf16, #tpu.memory_space<vmem>>) attributes {dimension_semantics = [#tpu.dimension_semantics<parallel>, #tpu.dimension_semantics<arbitrary>], iteration_bounds = array<i64: 1, 1>, scalar_prefetch = 0 : i64, scratch_operands = 3 : i64, tpu.core_type = #tpu.core_type<tc>, window_params = [{transform_indices = @transform_0, window_bounds = array<i64: 1024, 5>}, {transform_indices = @transform_1, window_bounds = array<i64: 8, 1024>}, {pipeline_mode = #tpu.pipeline_mode<synchronous>, transform_indices = @transform_2, window_bounds = array<i64: 8, 6>}, {pipeline_mode = #tpu.pipeline_mode<synchronous>, transform_indices = @transform_3, window_bounds = array<i64: 2, 7>}, {pipeline_mode = #tpu.pipeline_mode<synchronous>, transform_indices = @transform_4, window_bounds = array<i64: 5, 32>}, {pipeline_mode = #tpu.pipeline_mode<synchronous>, transform_indices = @transform_5, window_bounds = array<i64: 6, 32>}, {pipeline_mode = #tpu.pipeline_mode<synchronous>, transform_indices = @transform_6, window_bounds = array<i64: 6, 32>}, {pipeline_mode = #tpu.pipeline_mode<synchronous>, transform_indices = @transform_7, window_bounds = array<i64: 7, 32>}, {pipeline_mode = #tpu.pipeline_mode<synchronous>, transform_indices = @transform_8, window_bounds = array<i64: 1, 32>}, {pipeline_mode = #tpu.pipeline_mode<synchronous>, transform_indices = @transform_9, window_bounds = array<i64: 32, 16>}, {pipeline_mode = #tpu.pipeline_mode<synchronous>, transform_indices = @transform_10, window_bounds = array<i64: 1, 16>}, {transform_indices = @transform_11, window_bounds = array<i64: 1024, 16>}, {transform_indices = @transform_12, window_bounds = array<i64: 1, 8, 16>}, {transform_indices = @transform_13, window_bounds = array<i64: 1, 2, 16>}]} {
    %c0_i32 = arith.constant 0 : i32
    %0 = arith.cmpi eq, %arg1, %c0_i32 : i32
    %1 = arith.extui %0 : i1 to i32
    %c0_i32_0 = arith.constant 0 : i32
    %2 = arith.cmpi ne, %1, %c0_i32_0 : i32
    scf.if %2 {
      %c0_39 = arith.constant 0 : index
      %c0_40 = arith.constant 0 : index
      %65 = vector.load %arg4[%c0_39, %c0_40] : memref<8x6xbf16, #tpu.memory_space<vmem>>, vector<8x6xbf16>
      %c0_41 = arith.constant 0 : index
      %c0_42 = arith.constant 0 : index
      %66 = vector.load %arg7[%c0_41, %c0_42] : memref<6x32xbf16, #tpu.memory_space<vmem>>, vector<6x32xbf16>
      %cst_43 = arith.constant dense<0.000000e+00> : vector<8x32xf32>
      %67 = tpu.matmul %65, %66, %cst_43 {dimension_numbers = #tpu.dot_dimension_numbers<[1], [0], [0], [1], [0, 0, 1, 1], [], []>} : vector<8x6xbf16>, vector<6x32xbf16>, vector<8x32xf32> -> vector<8x32xf32>
      %68 = arith.truncf %67 : vector<8x32xf32> to vector<8x32xbf16>
      %c0_44 = arith.constant 0 : index
      %c0_45 = arith.constant 0 : index
      %69 = vector.load %arg16[%c0_44, %c0_45] : memref<8x32xbf16, #tpu.memory_space<vmem>>, vector<8x32xbf16>
      tpu.vector_store %arg16[%c0_44, %c0_45], %68 {strides = array<i32>} : memref<8x32xbf16, #tpu.memory_space<vmem>>, vector<8x32xbf16>,
      %c0_46 = arith.constant 0 : index
      %c0_47 = arith.constant 0 : index
      %70 = vector.load %arg8[%c0_46, %c0_47] : memref<6x32xbf16, #tpu.memory_space<vmem>>, vector<6x32xbf16>
      %cst_48 = arith.constant dense<0.000000e+00> : vector<8x32xf32>
      %71 = tpu.matmul %65, %70, %cst_48 {dimension_numbers = #tpu.dot_dimension_numbers<[1], [0], [0], [1], [0, 0, 1, 1], [], []>} : vector<8x6xbf16>, vector<6x32xbf16>, vector<8x32xf32> -> vector<8x32xf32>
      %72 = arith.truncf %71 : vector<8x32xf32> to vector<8x32xbf16>
      %c0_49 = arith.constant 0 : index
      %c0_50 = arith.constant 0 : index
      %73 = vector.load %arg17[%c0_49, %c0_50] : memref<8x32xbf16, #tpu.memory_space<vmem>>, vector<8x32xbf16>
      tpu.vector_store %arg17[%c0_49, %c0_50], %72 {strides = array<i32>} : memref<8x32xbf16, #tpu.memory_space<vmem>>, vector<8x32xbf16>,
      %c0_51 = arith.constant 0 : index
      %c0_52 = arith.constant 0 : index
      %74 = vector.load %arg5[%c0_51, %c0_52] : memref<2x7xbf16, #tpu.memory_space<vmem>>, vector<2x7xbf16>
      %c0_53 = arith.constant 0 : index
      %c0_54 = arith.constant 0 : index
      %75 = vector.load %arg9[%c0_53, %c0_54] : memref<7x32xbf16, #tpu.memory_space<vmem>>, vector<7x32xbf16>
      %cst_55 = arith.constant dense<0.000000e+00> : vector<2x32xf32>
      %76 = tpu.matmul %74, %75, %cst_55 {dimension_numbers = #tpu.dot_dimension_numbers<[1], [0], [0], [1], [0, 0, 1, 1], [], []>} : vector<2x7xbf16>, vector<7x32xbf16>, vector<2x32xf32> -> vector<2x32xf32>
      %77 = arith.truncf %76 : vector<2x32xf32> to vector<2x32xbf16>
      %c0_56 = arith.constant 0 : index
      %c0_57 = arith.constant 0 : index
      %78 = vector.load %arg18[%c0_56, %c0_57] : memref<2x32xbf16, #tpu.memory_space<vmem>>, vector<2x32xbf16>
      tpu.vector_store %arg18[%c0_56, %c0_57], %77 {strides = array<i32>} : memref<2x32xbf16, #tpu.memory_space<vmem>>, vector<2x32xbf16>,
      %cst_58 = arith.constant 0.000000e+00 : f32
      %79 = vector.broadcast %cst_58 : f32 to vector<1x8x16xf32>
      %c0_59 = arith.constant 0 : index
      %c0_60 = arith.constant 0 : index
      %c0_61 = arith.constant 0 : index
      %80 = vector.load %arg14[%c0_59, %c0_60, %c0_61] : memref<1x8x16xf32, #tpu.memory_space<vmem>>, vector<1x8x16xf32>
      tpu.vector_store %arg14[%c0_59, %c0_60, %c0_61], %79 {strides = array<i32>} : memref<1x8x16xf32, #tpu.memory_space<vmem>>, vector<1x8x16xf32>,
      %cst_62 = arith.constant 0.000000e+00 : f32
      %81 = vector.broadcast %cst_62 : f32 to vector<1x2x16xf32>
      %c0_63 = arith.constant 0 : index
      %c0_64 = arith.constant 0 : index
      %c0_65 = arith.constant 0 : index
      %82 = vector.load %arg15[%c0_63, %c0_64, %c0_65] : memref<1x2x16xf32, #tpu.memory_space<vmem>>, vector<1x2x16xf32>
      tpu.vector_store %arg15[%c0_63, %c0_64, %c0_65], %81 {strides = array<i32>} : memref<1x2x16xf32, #tpu.memory_space<vmem>>, vector<1x2x16xf32>,
    } else {
    }
    %c0 = arith.constant 0 : index
    %c0_1 = arith.constant 0 : index
    %3 = vector.load %arg3[%c0, %c0_1] : memref<8x1024xi32, #tpu.memory_space<vmem>>, vector<8x1024xi32>
    %4 = vector.extract_strided_slice %3 {offsets = [0, 0], sizes = [1, 1024], strides = [1, 1]} : vector<8x1024xi32> to vector<1x1024xi32>
    %5 = vector.extract_strided_slice %3 {offsets = [1, 0], sizes = [1, 1024], strides = [1, 1]} : vector<8x1024xi32> to vector<1x1024xi32>
    %6 = vector.extract_strided_slice %3 {offsets = [2, 0], sizes = [1, 1024], strides = [1, 1]} : vector<8x1024xi32> to vector<1x1024xi32>
    %7 = tpu.iota {dimensions = array<i32: 0>} : vector<8x1024xi32>
    %8 = vector.broadcast %4 : vector<1x1024xi32> to vector<8x1024xi32>
    %9 = arith.cmpi eq, %8, %7 : vector<8x1024xi32>
    %10 = arith.extui %9 : vector<8x1024xi1> to vector<8x1024xi32>
    %11 = arith.sitofp %10 : vector<8x1024xi32> to vector<8x1024xf32>
    %12 = arith.truncf %11 : vector<8x1024xf32> to vector<8x1024xbf16>
    %13 = tpu.iota {dimensions = array<i32: 0>} : vector<8x1024xi32>
    %14 = vector.broadcast %5 : vector<1x1024xi32> to vector<8x1024xi32>
    %15 = arith.cmpi eq, %14, %13 : vector<8x1024xi32>
    %16 = arith.extui %15 : vector<8x1024xi1> to vector<8x1024xi32>
    %17 = arith.sitofp %16 : vector<8x1024xi32> to vector<8x1024xf32>
    %18 = arith.truncf %17 : vector<8x1024xf32> to vector<8x1024xbf16>
    %19 = tpu.iota {dimensions = array<i32: 0>} : vector<2x1024xi32>
    %20 = vector.broadcast %6 : vector<1x1024xi32> to vector<2x1024xi32>
    %21 = arith.cmpi eq, %20, %19 : vector<2x1024xi32>
    %22 = arith.extui %21 : vector<2x1024xi1> to vector<2x1024xi32>
    %23 = arith.sitofp %22 : vector<2x1024xi32> to vector<2x1024xf32>
    %24 = arith.truncf %23 : vector<2x1024xf32> to vector<2x1024xbf16>
    %c0_2 = arith.constant 0 : index
    %c0_3 = arith.constant 0 : index
    %25 = vector.load %arg2[%c0_2, %c0_3] : memref<1024x5xbf16, #tpu.memory_space<vmem>>, vector<1024x5xbf16>
    %c0_4 = arith.constant 0 : index
    %c0_5 = arith.constant 0 : index
    %26 = vector.load %arg6[%c0_4, %c0_5] : memref<5x32xbf16, #tpu.memory_space<vmem>>, vector<5x32xbf16>
    %cst = arith.constant dense<0.000000e+00> : vector<1024x32xf32>
    %27 = tpu.matmul %25, %26, %cst {dimension_numbers = #tpu.dot_dimension_numbers<[1], [0], [0], [1], [0, 0, 1, 1], [], []>} : vector<1024x5xbf16>, vector<5x32xbf16>, vector<1024x32xf32> -> vector<1024x32xf32>
    %c0_6 = arith.constant 0 : index
    %c0_7 = arith.constant 0 : index
    %28 = vector.load %arg16[%c0_6, %c0_7] : memref<8x32xbf16, #tpu.memory_space<vmem>>, vector<8x32xbf16>
    %cst_8 = arith.constant dense<0.000000e+00> : vector<1024x32xf32>
    %29 = tpu.matmul %12, %28, %cst_8 {dimension_numbers = #tpu.dot_dimension_numbers<[0], [0], [1], [1], [0, 1, 1, 1], [], []>} : vector<8x1024xbf16>, vector<8x32xbf16>, vector<1024x32xf32> -> vector<1024x32xf32>
    %30 = arith.addf %27, %29 : vector<1024x32xf32>
    %c0_9 = arith.constant 0 : index
    %c0_10 = arith.constant 0 : index
    %31 = vector.load %arg17[%c0_9, %c0_10] : memref<8x32xbf16, #tpu.memory_space<vmem>>, vector<8x32xbf16>
    %cst_11 = arith.constant dense<0.000000e+00> : vector<1024x32xf32>
    %32 = tpu.matmul %18, %31, %cst_11 {dimension_numbers = #tpu.dot_dimension_numbers<[0], [0], [1], [1], [0, 1, 1, 1], [], []>} : vector<8x1024xbf16>, vector<8x32xbf16>, vector<1024x32xf32> -> vector<1024x32xf32>
    %33 = arith.addf %30, %32 : vector<1024x32xf32>
    %c0_12 = arith.constant 0 : index
    %c0_13 = arith.constant 0 : index
    %34 = vector.load %arg18[%c0_12, %c0_13] : memref<2x32xbf16, #tpu.memory_space<vmem>>, vector<2x32xbf16>
    %cst_14 = arith.constant dense<0.000000e+00> : vector<1024x32xf32>
    %35 = tpu.matmul %24, %34, %cst_14 {dimension_numbers = #tpu.dot_dimension_numbers<[0], [0], [1], [1], [0, 1, 1, 1], [], []>} : vector<2x1024xbf16>, vector<2x32xbf16>, vector<1024x32xf32> -> vector<1024x32xf32>
    %36 = arith.addf %33, %35 : vector<1024x32xf32>
    %c0_15 = arith.constant 0 : index
    %c0_16 = arith.constant 0 : index
    %37 = vector.load %arg10[%c0_15, %c0_16] : memref<1x32xf32, #tpu.memory_space<vmem>>, vector<1x32xf32>
    %38 = vector.broadcast %37 : vector<1x32xf32> to vector<1024x32xf32>
    %39 = arith.addf %36, %38 : vector<1024x32xf32>
    %cst_17 = arith.constant 0.000000e+00 : f32
    %40 = vector.broadcast %cst_17 : f32 to vector<1024x32xf32>
    %41 = arith.maximumf %39, %40 : vector<1024x32xf32>
    %42 = arith.truncf %41 : vector<1024x32xf32> to vector<1024x32xbf16>
    %c0_18 = arith.constant 0 : index
    %c0_19 = arith.constant 0 : index
    %43 = vector.load %arg11[%c0_18, %c0_19] : memref<32x16xbf16, #tpu.memory_space<vmem>>, vector<32x16xbf16>
    %cst_20 = arith.constant dense<0.000000e+00> : vector<1024x16xf32>
    %44 = tpu.matmul %42, %43, %cst_20 {dimension_numbers = #tpu.dot_dimension_numbers<[1], [0], [0], [1], [0, 0, 1, 1], [], []>} : vector<1024x32xbf16>, vector<32x16xbf16>, vector<1024x16xf32> -> vector<1024x16xf32>
    %c0_21 = arith.constant 0 : index
    %c0_22 = arith.constant 0 : index
    %45 = vector.load %arg12[%c0_21, %c0_22] : memref<1x16xf32, #tpu.memory_space<vmem>>, vector<1x16xf32>
    %46 = vector.broadcast %45 : vector<1x16xf32> to vector<1024x16xf32>
    %47 = arith.addf %44, %46 : vector<1024x16xf32>
    %48 = arith.truncf %47 : vector<1024x16xf32> to vector<1024x16xbf16>
    %c0_23 = arith.constant 0 : index
    %c0_24 = arith.constant 0 : index
    %49 = vector.load %arg13[%c0_23, %c0_24] : memref<1024x16xbf16, #tpu.memory_space<vmem>>, vector<1024x16xbf16>
    tpu.vector_store %arg13[%c0_23, %c0_24], %48 {strides = array<i32>} : memref<1024x16xbf16, #tpu.memory_space<vmem>>, vector<1024x16xbf16>,
    %50 = arith.truncf %47 : vector<1024x16xf32> to vector<1024x16xbf16>
    %c0_25 = arith.constant 0 : index
    %c0_26 = arith.constant 0 : index
    %c0_27 = arith.constant 0 : index
    %51 = vector.load %arg14[%c0_25, %c0_26, %c0_27] : memref<1x8x16xf32, #tpu.memory_space<vmem>>, vector<1x8x16xf32>
    %52 = vector.shape_cast %51 : vector<1x8x16xf32> to vector<8x16xf32>
    %cst_28 = arith.constant dense<0.000000e+00> : vector<8x16xf32>
    %53 = tpu.matmul %18, %50, %cst_28 {dimension_numbers = #tpu.dot_dimension_numbers<[1], [0], [0], [1], [0, 0, 1, 1], [], []>} : vector<8x1024xbf16>, vector<1024x16xbf16>, vector<8x16xf32> -> vector<8x16xf32>
    %54 = arith.addf %52, %53 : vector<8x16xf32>
    %c0_29 = arith.constant 0 : index
    %c0_30 = arith.constant 0 : index
    %c0_31 = arith.constant 0 : index
    %55 = vector.load %arg14[%c0_29, %c0_30, %c0_31] : memref<1x8x16xf32, #tpu.memory_space<vmem>>, vector<1x8x16xf32>
    %56 = vector.shape_cast %55 : vector<1x8x16xf32> to vector<8x16xf32>
    %57 = vector.shape_cast %54 : vector<8x16xf32> to vector<1x8x16xf32>
    tpu.vector_store %arg14[%c0_29, %c0_30, %c0_31], %57 {strides = array<i32>} : memref<1x8x16xf32, #tpu.memory_space<vmem>>, vector<1x8x16xf32>,
    %c0_32 = arith.constant 0 : index
    %c0_33 = arith.constant 0 : index
    %c0_34 = arith.constant 0 : index
    %58 = vector.load %arg15[%c0_32, %c0_33, %c0_34] : memref<1x2x16xf32, #tpu.memory_space<vmem>>, vector<1x2x16xf32>
    %59 = vector.shape_cast %58 : vector<1x2x16xf32> to vector<2x16xf32>
    %cst_35 = arith.constant dense<0.000000e+00> : vector<2x16xf32>
    %60 = tpu.matmul %24, %50, %cst_35 {dimension_numbers = #tpu.dot_dimension_numbers<[1], [0], [0], [1], [0, 0, 1, 1], [], []>} : vector<2x1024xbf16>, vector<1024x16xbf16>, vector<2x16xf32> -> vector<2x16xf32>
    %61 = arith.addf %59, %60 : vector<2x16xf32>
    %c0_36 = arith.constant 0 : index
    %c0_37 = arith.constant 0 : index
    %c0_38 = arith.constant 0 : index
    %62 = vector.load %arg15[%c0_36, %c0_37, %c0_38] : memref<1x2x16xf32, #tpu.memory_space<vmem>>, vector<1x2x16xf32>
    %63 = vector.shape_cast %62 : vector<1x2x16xf32> to vector<2x16xf32>
    %64 = vector.shape_cast %61 : vector<2x16xf32> to vector<1x2x16xf32>
    tpu.vector_store %arg15[%c0_36, %c0_37, %c0_38], %64 {strides = array<i32>} : memref<1x2x16xf32, #tpu.memory_space<vmem>>, vector<1x2x16xf32>,
    return
  }
  func.func @transform_0(%arg0: i32, %arg1: i32) -> (i32, i32) {
    %c1_i32 = arith.constant 1 : i32
    %0 = arith.muli %arg0, %c1_i32 : i32
    %1 = arith.addi %0, %arg1 : i32
    %c0_i32 = arith.constant 0 : i32
    %c0_i32_0 = arith.constant 0 : i32
    return %1, %c0_i32 : i32, i32
  }
  func.func @transform_1(%arg0: i32, %arg1: i32) -> (i32, i32) {
    %c1_i32 = arith.constant 1 : i32
    %0 = arith.muli %arg0, %c1_i32 : i32
    %1 = arith.addi %0, %arg1 : i32
    %c0_i32 = arith.constant 0 : i32
    %c0_i32_0 = arith.constant 0 : i32
    return %c0_i32, %1 : i32, i32
  }
  func.func @transform_2(%arg0: i32, %arg1: i32) -> (i32, i32) {
    %c0_i32 = arith.constant 0 : i32
    %c0_i32_0 = arith.constant 0 : i32
    %c0_i32_1 = arith.constant 0 : i32
    return %c0_i32, %c0_i32_0 : i32, i32
  }
  func.func @transform_3(%arg0: i32, %arg1: i32) -> (i32, i32) {
    %c0_i32 = arith.constant 0 : i32
    %c0_i32_0 = arith.constant 0 : i32
    %c0_i32_1 = arith.constant 0 : i32
    return %c0_i32, %c0_i32_0 : i32, i32
  }
  func.func @transform_4(%arg0: i32, %arg1: i32) -> (i32, i32) {
    %c0_i32 = arith.constant 0 : i32
    %c0_i32_0 = arith.constant 0 : i32
    %c0_i32_1 = arith.constant 0 : i32
    return %c0_i32, %c0_i32_0 : i32, i32
  }
  func.func @transform_5(%arg0: i32, %arg1: i32) -> (i32, i32) {
    %c0_i32 = arith.constant 0 : i32
    %c0_i32_0 = arith.constant 0 : i32
    %c0_i32_1 = arith.constant 0 : i32
    return %c0_i32, %c0_i32_0 : i32, i32
  }
  func.func @transform_6(%arg0: i32, %arg1: i32) -> (i32, i32) {
    %c0_i32 = arith.constant 0 : i32
    %c0_i32_0 = arith.constant 0 : i32
    %c0_i32_1 = arith.constant 0 : i32
    return %c0_i32, %c0_i32_0 : i32, i32
  }
  func.func @transform_7(%arg0: i32, %arg1: i32) -> (i32, i32) {
    %c0_i32 = arith.constant 0 : i32
    %c0_i32_0 = arith.constant 0 : i32
    %c0_i32_1 = arith.constant 0 : i32
    return %c0_i32, %c0_i32_0 : i32, i32
  }
  func.func @transform_8(%arg0: i32, %arg1: i32) -> (i32, i32) {
    %c0_i32 = arith.constant 0 : i32
    %c0_i32_0 = arith.constant 0 : i32
    %c0_i32_1 = arith.constant 0 : i32
    return %c0_i32, %c0_i32_0 : i32, i32
  }
  func.func @transform_9(%arg0: i32, %arg1: i32) -> (i32, i32) {
    %c0_i32 = arith.constant 0 : i32
    %c0_i32_0 = arith.constant 0 : i32
    %c0_i32_1 = arith.constant 0 : i32
    return %c0_i32, %c0_i32_0 : i32, i32
  }
  func.func @transform_10(%arg0: i32, %arg1: i32) -> (i32, i32) {
    %c0_i32 = arith.constant 0 : i32
    %c0_i32_0 = arith.constant 0 : i32
    %c0_i32_1 = arith.constant 0 : i32
    return %c0_i32, %c0_i32_0 : i32, i32
  }
  func.func @transform_11(%arg0: i32, %arg1: i32) -> (i32, i32) {
    %c1_i32 = arith.constant 1 : i32
    %0 = arith.muli %arg0, %c1_i32 : i32
    %1 = arith.addi %0, %arg1 : i32
    %c0_i32 = arith.constant 0 : i32
    %c0_i32_0 = arith.constant 0 : i32
    return %1, %c0_i32 : i32, i32
  }
  func.func @transform_12(%arg0: i32, %arg1: i32) -> (i32, i32, i32) {
    %c0_i32 = arith.constant 0 : i32
    %c0_i32_0 = arith.constant 0 : i32
    %c0_i32_1 = arith.constant 0 : i32
    return %arg0, %c0_i32, %c0_i32_0 : i32, i32, i32
  }
  func.func @transform_13(%arg0: i32, %arg1: i32) -> (i32, i32, i32) {
    %c0_i32 = arith.constant 0 : i32
    %c0_i32_0 = arith.constant 0 : i32
    %c0_i32_1 = arith.constant 0 : i32
    return %arg0, %c0_i32, %c0_i32_0 : i32, i32, i32
  }
}

</mosaic_0001>

<llo_original>
// kernel: tpu_custom_call.1
$region0: #{tpu_custom_call.1}
  #allocation0 [shape = 'u32[]', space=smem, size = 0x4, offset = 0x4, fixed_abs, tag = 'smem constant byte address 0x4 - core index']
  #allocation1 [shape = 'u32[72,128]{1,0:T(1,128)}', space=vmem, size = 0x9000, scoped, tag = 'internal scratch']
  #allocation2 [shape = 'bf16[8,32]{1,0:T(8,128)(2,1)}', space=vmem, size = 0x800, scoped, tag = 'scratch operand']
  #allocation3 [shape = 'bf16[8,32]{1,0:T(8,128)(2,1)}', space=vmem, size = 0x800, scoped, tag = 'scratch operand']
  #allocation4 [shape = 'bf16[2,32]{1,0:T(2,128)(2,1)}', space=vmem, size = 0x200, scoped, tag = 'scratch operand']
  %s0 = inlined_call_operand.vmem [shape: bf16[1024,5], index: 0, kind: input, shape index: {}]
  %s1 = inlined_call_operand.vmem [shape: s32[8,1024], index: 1, kind: input, shape index: {}]
  %s2 = inlined_call_operand.vmem [shape: bf16[8,6], index: 2, kind: input, shape index: {}]
  %s3 = inlined_call_operand.vmem [shape: bf16[2,7], index: 3, kind: input, shape index: {}]
  %s4 = inlined_call_operand.vmem [shape: bf16[5,32], index: 4, kind: input, shape index: {}]
  %s5 = inlined_call_operand.vmem [shape: bf16[6,32], index: 5, kind: input, shape index: {}]
  %s6 = inlined_call_operand.vmem [shape: bf16[6,32], index: 6, kind: input, shape index: {}]
  %s7 = inlined_call_operand.vmem [shape: bf16[7,32], index: 7, kind: input, shape index: {}]
  %s8 = inlined_call_operand.vmem [shape: f32[1,32], index: 8, kind: input, shape index: {}]
  %s9 = inlined_call_operand.vmem [shape: bf16[32,16], index: 9, kind: input, shape index: {}]
  %s10 = inlined_call_operand.vmem [shape: f32[1,16], index: 10, kind: input, shape index: {}]
  %s11 = inlined_call_operand.vmem [shape: bf16[1024,16], index: 11, kind: output, shape index: {0}]
  %s12 = inlined_call_operand.hbm [shape: f32[1,8,16], index: 12, kind: output, shape index: {1}]
  %s13 = inlined_call_operand.hbm [shape: f32[1,2,16], index: 13, kind: output, shape index: {2}]
  %14 = xla_tuple %s11, %s12, %s13
  %s15 = sld [smem:[#allocation0]]
  $region74: #{tpu_custom_call.1} parent=0
    _
  %s17 = ssub.s32 1, %s15
  %s18 = scalar_select 0, %s17, %s15
  $region1: #{tpu_custom_call.1} parent=0
    #allocation5 [shape = 'u8[4096]{0}', space=vmem, size = 0x1000, scoped, tag = 'output window, operand 1, single buffered']
    #allocation6 [shape = 's32[1]{0}', space=sflag, size = 0x4, scoped, tag = 'scoped memory for tpu_custom_call.1']
    #allocation7 [shape = 'u8[1024]{0}', space=vmem, size = 0x400, scoped, tag = 'output window, operand 2, single buffered']
    #allocation8 [shape = 's32[1]{0}', space=sflag, size = 0x4, scoped, tag = 'scoped memory for tpu_custom_call.1']
    %19 = vsyncpa [#allocation6], 0
    %20 = vsyncpa [#allocation8], 0
    // Predicated region
    $region2: #{tpu_custom_call.1} parent=1 // pred_check
      _
    $region3: #{tpu_custom_call.1} parent=1 // pred_check_branch
      %22 = sbr.rel (0) target = $region5
    $region4: #{tpu_custom_call.1} parent=1 // pred_region
      %s23 = sadd.s32 0, 0
      %s24 = smul.u32 128, %s23
      %p25 = scmp.lt.s32.totalorder %s24, 127
      %s26 = scalar_select %p25, %s24, 127
      %s27 = smul.addr %s26, 4
      %s28 = scalar_lea.vmem %s0, %s27
      %s29 = sadd.s32 0, 0
      %s30 = smul.u32 128, %s29
    $region5: #{tpu_custom_call.1} parent=1 // pred_fallthru
      _
    // Predicated region
    $region6: #{tpu_custom_call.1} parent=1 // pred_check
      _
    $region7: #{tpu_custom_call.1} parent=1 // pred_check_branch
      %32 = sbr.rel (0) target = $region9
    $region8: #{tpu_custom_call.1} parent=1 // pred_region
      %s33 = sadd.s32 0, 0
      %s34 = smul.u32 8, %s33
      %p35 = scmp.lt.s32.totalorder %s34, 7
      %s36 = scalar_select %p35, %s34, 7
      %s37 = smul.addr %s36, 8
      %s38 = scalar_lea.vmem %s1, %s37
      %s39 = sadd.s32 0, 0
      %s40 = smul.u32 8, %s39
    $region9: #{tpu_custom_call.1} parent=1 // pred_fallthru
      _
    // Predicated region
    $region10: #{tpu_custom_call.1} parent=1 // pred_check
      _
    $region11: #{tpu_custom_call.1} parent=1 // pred_check_branch
      %42 = sbr.rel (0) target = $region13
    $region12: #{tpu_custom_call.1} parent=1 // pred_region
      _
    $region13: #{tpu_custom_call.1} parent=1 // pred_fallthru
      _
    // Predicated region
    $region14: #{tpu_custom_call.1} parent=1 // pred_check
      _
    $region15: #{tpu_custom_call.1} parent=1 // pred_check_branch
      %44 = sbr.rel (0) target = $region17
    $region16: #{tpu_custom_call.1} parent=1 // pred_region
      _
    $region17: #{tpu_custom_call.1} parent=1 // pred_fallthru
      _
    // Predicated region
    $region18: #{tpu_custom_call.1} parent=1 // pred_check
      _
    $region19: #{tpu_custom_call.1} parent=1 // pred_check_branch
      %46 = sbr.rel (0) target = $region21
    $region20: #{tpu_custom_call.1} parent=1 // pred_region
      _
    $region21: #{tpu_custom_call.1} parent=1 // pred_fallthru
      _
    // Predicated region
    $region22: #{tpu_custom_call.1} parent=1 // pred_check
      _
    $region23: #{tpu_custom_call.1} parent=1 // pred_check_branch
      %48 = sbr.rel (0) target = $region25
    $region24: #{tpu_custom_call.1} parent=1 // pred_region
      _
    $region25: #{tpu_custom_call.1} parent=1 // pred_fallthru
      _
    // Predicated region
    $region26: #{tpu_custom_call.1} parent=1 // pred_check
      _
    $region27: #{tpu_custom_call.1} parent=1 // pred_check_branch
      %50 = sbr.rel (0) target = $region29
    $region28: #{tpu_custom_call.1} parent=1 // pred_region
      _
    $region29: #{tpu_custom_call.1} parent=1 // pred_fallthru
      _
    // Predicated region
    $region30: #{tpu_custom_call.1} parent=1 // pred_check
      _
    $region31: #{tpu_custom_call.1} parent=1 // pred_check_branch
      %52 = sbr.rel (0) target = $region33
    $region32: #{tpu_custom_call.1} parent=1 // pred_region
      _
    $region33: #{tpu_custom_call.1} parent=1 // pred_fallthru
      _
    // Predicated region
    $region34: #{tpu_custom_call.1} parent=1 // pred_check
      _
    $region35: #{tpu_custom_call.1} parent=1 // pred_check_branch
      %54 = sbr.rel (0) target = $region37
    $region36: #{tpu_custom_call.1} parent=1 // pred_region
      _
    $region37: #{tpu_custom_call.1} parent=1 // pred_fallthru
      _
    // Predicated region
    $region38: #{tpu_custom_call.1} parent=1 // pred_check
      _
    $region39: #{tpu_custom_call.1} parent=1 // pred_check_branch
      %56 = sbr.rel (0) target = $region41
    $region40: #{tpu_custom_call.1} parent=1 // pred_region
      _
    $region41: #{tpu_custom_call.1} parent=1 // pred_fallthru
      _
    // Predicated region
    $region42: #{tpu_custom_call.1} parent=1 // pred_check
      _
    $region43: #{tpu_custom_call.1} parent=1 // pred_check_branch
      %58 = sbr.rel (0) target = $region45
    $region44: #{tpu_custom_call.1} parent=1 // pred_region
      _
    $region45: #{tpu_custom_call.1} parent=1 // pred_fallthru
      _
    %s59 = sadd.s32 0, 0
    %s60 = smul.u32 128, %s59
    %p61 = scmp.lt.s32.totalorder %s60, 127
    %s62 = scalar_select %p61, %s60, 127
    %s63 = smul.addr %s62, 4
    %s64 = scalar_lea.vmem %s0, %s63
    %s65 = sadd.s32 0, 0
    %s66 = smul.u32 8, %s65
    %p67 = scmp.lt.s32.totalorder %s66, 7
    %s68 = scalar_select %p67, %s66, 7
    %s69 = smul.addr %s68, 8
    %s70 = scalar_lea.vmem %s1, %s69
    %s71 = sadd.s32 0, 0
    %s72 = smul.u32 128, %s71
    %p73 = scmp.lt.s32.totalorder %s72, 127
    %s74 = scalar_select %p73, %s72, 127
    %s75 = smul.addr %s74, 4
    %s76 = scalar_lea.vmem %s11, %s75
    %s77 = sadd.s32 0, 0
    %s78 = smul.u32 128, %s77
    %p79 = scmp.lt.s32.totalorder %s78, 127
    %s80 = scalar_select %p79, %s78, 127
    %s81 = smul.addr %s80, 4
    %s82 = scalar_lea.vmem %s0, %s81
    %s83 = sadd.s32 0, 0
    %s84 = smul.u32 128, %s83
    %s85 = sadd.s32 0, 0
    %s86 = smul.u32 8, %s85
    %p87 = scmp.lt.s32.totalorder %s86, 7
    %s88 = scalar_select %p87, %s86, 7
    %s89 = smul.addr %s88, 8
    %s90 = scalar_lea.vmem %s1, %s89
    %s91 = sadd.s32 0, 0
    %s92 = smul.u32 8, %s91
    %s93 = sadd.s32 0, 0
    %s94 = smul.u32 128, %s93
    %p95 = scmp.lt.s32.totalorder %s94, 127
    %s96 = scalar_select %p95, %s94, 127
    %s97 = smul.addr %s96, 4
    %s98 = scalar_lea.vmem %s11, %s97
    %s99 = sadd.s32 0, 0
    %s100 = smul.u32 128, %s99
    %p102 = scmp.eq.s32.totalorder 0, 0
    // Predicated region
    $region46: #{tpu_custom_call.1} parent=1 // pred_check
      %p103 = pneg %p102
    $region47: #{tpu_custom_call.1} parent=1 // pred_check_branch
      %105 = sbr.rel (%p103) target = $region49
    $region48: #{tpu_custom_call.1} parent=1 // pred_region
      %v106 = vld [vmem:[%s2] sm:$0xf]
      %v107 = vld [vmem:[%s5] sm:$0x7]
      %vm108 = vcmask 48128
      %v110 = vsel %vm108, %v106, 0
      %vm112 = vcmask 1042432
      %v114 = vsel %vm112, %v107, 0
      %116 = vmatpush.bf16.msra.mxu0 0
      %117 = vmatpush.bf16.msra.mxu0 0
      %118 = vmatpush.bf16.msra.mxu0 0
      %119 = vmatpush.bf16.msra.mxu0 0
      %120 = vmatpush.bf16.msra.mxu0 0
      %121 = vmatpush.bf16.msra.mxu0 0
      %122 = vmatpush.bf16.msra.mxu0 0
      %123 = vmatpush.bf16.msra.mxu0 %v114
      %124 = vmatmul.bf16.gmra.mxu0 %v110
      %v125 = vpop.f32.mrf.mxu0
      %v126 = vadd.f32 0.0, %v125
      %v127 = vpop.f32.mrf.mxu0
      %128 = vdwg.mxu0
      %v129 = vpack.c.bf16 %v126, %v126
      %vm130 = vcmask 257024
      %131 = vst.msk [vmem:[#allocation2] sm:$0xf] %vm130, %v129
      %v132 = vld [vmem:[%s6] sm:$0x7]
      %v134 = vsel %vm112, %v132, 0
      %136 = vmatpush.bf16.msra.mxu0 0
      %137 = vmatpush.bf16.msra.mxu0 0
      %138 = vmatpush.bf16.msra.mxu0 0
      %139 = vmatpush.bf16.msra.mxu0 0
      %140 = vmatpush.bf16.msra.mxu0 0
      %141 = vmatpush.bf16.msra.mxu0 0
      %142 = vmatpush.bf16.msra.mxu0 0
      %143 = vmatpush.bf16.msra.mxu0 %v134
      %144 = vmatmul.bf16.gmra.mxu0 %v110
      %v145 = vpop.f32.mrf.mxu0
      %v146 = vadd.f32 0.0, %v145
      %v147 = vpop.f32.mrf.mxu0
      %148 = vdwg.mxu0
      %v149 = vpack.c.bf16 %v146, %v146
      %150 = vst.msk [vmem:[#allocation3] sm:$0xf] %vm130, %v149
      %v151 = vld [vmem:[%s3] sm:$0x1]
      %v152 = vld [vmem:[%s7] sm:$0xf]
      %vm153 = vcmask 56320
      %v155 = vsel %vm153, %v151, 0
      %vm157 = vcmask 1043456
      %v158 = vsel %vm112, 4294967295, 65535
      %v159 = vsel %vm157, %v158, 0
      %v161 = vand.u32 %v152, %v159
      %163 = vmatpush.bf16.msra.mxu0 0
      %164 = vmatpush.bf16.msra.mxu0 0
      %165 = vmatpush.bf16.msra.mxu0 0
      %166 = vmatpush.bf16.msra.mxu0 0
      %167 = vmatpush.bf16.msra.mxu0 0
      %168 = vmatpush.bf16.msra.mxu0 0
      %169 = vmatpush.bf16.msra.mxu0 0
      %170 = vmatpush.bf16.msra.mxu0 %v161
      %171 = vmatmul.bf16.gmra.mxu0 %v155
      %v172 = vpop.f32.mrf.mxu0
      %v173 = vadd.f32 0.0, %v172
      %v174 = vpop.f32.mrf.mxu0
      %175 = vdwg.mxu0
      %v176 = vpack.c.bf16 %v173, %v173
      %vm177 = vcmask 253952
      %178 = vst.msk [vmem:[#allocation4] sm:$0x1] %vm177, %v176
      %vm179 = vcmask 130048
      %180 = vst.msk [vmem:[#allocation5] sm:$0xff] %vm179, 0.0
      %vm181 = vcmask 123904
      %182 = vst.msk [vmem:[#allocation7] sm:$0x3] %vm181, 0.0
    $region49: #{tpu_custom_call.1} parent=1 // pred_fallthru
      _
    %v183 = vld [vmem:[%s90] sm:$0xff]
    %v184 = vld [vmem:[%s90 + $0x8] sm:$0xff]
    %v185 = vld [vmem:[%s90 + $0x10] sm:$0xff]
    %v186 = vld [vmem:[%s90 + $0x18] sm:$0xff]
    %v187 = vld [vmem:[%s90 + $0x20] sm:$0xff]
    %v188 = vld [vmem:[%s90 + $0x28] sm:$0xff]
    %v189 = vld [vmem:[%s90 + $0x30] sm:$0xff]
    %v190 = vld [vmem:[%s90 + $0x38] sm:$0xff]
    %v191 = vlaneseq
    %v192 = vshrl.u32 %v191, 7
    %v193 = vperm.slane %v183, 0
    %v194 = vperm.slane %v184, 0
    %v195 = vperm.slane %v185, 0
    %v196 = vperm.slane %v186, 0
    %v197 = vperm.slane %v187, 0
    %v198 = vperm.slane %v188, 0
    %v199 = vperm.slane %v189, 0
    %v200 = vperm.slane %v190, 0
    %vm201 = vcmp.eq.s32.totalorder %v193, %v192
    %vm202 = vcmp.eq.s32.totalorder %v194, %v192
    %vm203 = vcmp.eq.s32.totalorder %v195, %v192
    %vm204 = vcmp.eq.s32.totalorder %v196, %v192
    %vm205 = vcmp.eq.s32.totalorder %v197, %v192
    %vm206 = vcmp.eq.s32.totalorder %v198, %v192
    %vm207 = vcmp.eq.s32.totalorder %v199, %v192
    %vm208 = vcmp.eq.s32.totalorder %v200, %v192
    %v209 = vsel %vm201, 1, 0
    %v210 = vsel %vm202, 1, 0
    %v211 = vsel %vm203, 1, 0
    %v212 = vsel %vm204, 1, 0
    %v213 = vsel %vm205, 1, 0
    %v214 = vsel %vm206, 1, 0
    %v215 = vsel %vm207, 1, 0
    %v216 = vsel %vm208, 1, 0
    %v217 = vcvt.s32.f32 %v209
    %v218 = vcvt.s32.f32 %v210
    %v219 = vcvt.s32.f32 %v211
    %v220 = vcvt.s32.f32 %v212
    %v221 = vcvt.s32.f32 %v213
    %v222 = vcvt.s32.f32 %v214
    %v223 = vcvt.s32.f32 %v215
    %v224 = vcvt.s32.f32 %v216
    %v225 = vpack.c.bf16 %v217, %v217
    %v226 = vpack.c.bf16 %v218, %v218
    %v227 = vpack.c.bf16 %v219, %v219
    %v228 = vpack.c.bf16 %v220, %v220
    %v229 = vpack.c.bf16 %v221, %v221
    %v230 = vpack.c.bf16 %v222, %v222
    %v231 = vpack.c.bf16 %v223, %v223
    %v232 = vpack.c.bf16 %v224, %v224
    %v233 = vperm.slane %v183, 1
    %v234 = vperm.slane %v184, 1
    %v235 = vperm.slane %v185, 1
    %v236 = vperm.slane %v186, 1
    %v237 = vperm.slane %v187, 1
    %v238 = vperm.slane %v188, 1
    %v239 = vperm.slane %v189, 1
    %v240 = vperm.slane %v190, 1
    %vm241 = vcmp.eq.s32.totalorder %v233, %v192
    %vm242 = vcmp.eq.s32.totalorder %v234, %v192
    %vm243 = vcmp.eq.s32.totalorder %v235, %v192
    %vm244 = vcmp.eq.s32.totalorder %v236, %v192
    %vm245 = vcmp.eq.s32.totalorder %v237, %v192
    %vm246 = vcmp.eq.s32.totalorder %v238, %v192
    %vm247 = vcmp.eq.s32.totalorder %v239, %v192
    %vm248 = vcmp.eq.s32.totalorder %v240, %v192
    %v249 = vsel %vm241, 1, 0
    %v250 = vsel %vm242, 1, 0
    %v251 = vsel %vm243, 1, 0
    %v252 = vsel %vm244, 1, 0
    %v253 = vsel %vm245, 1, 0
    %v254 = vsel %vm246, 1, 0
    %v255 = vsel %vm247, 1, 0
    %v256 = vsel %vm248, 1, 0
    %v257 = vcvt.s32.f32 %v249
    %v258 = vcvt.s32.f32 %v250
    %v259 = vcvt.s32.f32 %v251
    %v260 = vcvt.s32.f32 %v252
    %v261 = vcvt.s32.f32 %v253
    %v262 = vcvt.s32.f32 %v254
    %v263 = vcvt.s32.f32 %v255
    %v264 = vcvt.s32.f32 %v256
    %v265 = vpack.c.bf16 %v257, %v257
    %v266 = vpack.c.bf16 %v258, %v258
    %v267 = vpack.c.bf16 %v259, %v259
    %v268 = vpack.c.bf16 %v260, %v260
    %v269 = vpack.c.bf16 %v261, %v261
    %v270 = vpack.c.bf16 %v262, %v262
    %v271 = vpack.c.bf16 %v263, %v263
    %v272 = vpack.c.bf16 %v264, %v264
    %v273 = vperm.slane %v183, 2
    %v274 = vperm.slane %v184, 2
    %v275 = vperm.slane %v185, 2
    %v276 = vperm.slane %v186, 2
    %v277 = vperm.slane %v187, 2
    %v278 = vperm.slane %v188, 2
    %v279 = vperm.slane %v189, 2
    %v280 = vperm.slane %v190, 2
    %vm281 = vcmp.eq.s32.totalorder %v273, %v192
    %vm282 = vcmp.eq.s32.totalorder %v274, %v192
    %vm283 = vcmp.eq.s32.totalorder %v275, %v192
    %vm284 = vcmp.eq.s32.totalorder %v276, %v192
    %vm285 = vcmp.eq.s32.totalorder %v277, %v192
    %vm286 = vcmp.eq.s32.totalorder %v278, %v192
    %vm287 = vcmp.eq.s32.totalorder %v279, %v192
    %vm288 = vcmp.eq.s32.totalorder %v280, %v192
    %v289 = vsel %vm281, 1, 0
    %v290 = vsel %vm282, 1, 0
    %v291 = vsel %vm283, 1, 0
    %v292 = vsel %vm284, 1, 0
    %v293 = vsel %vm285, 1, 0
    %v294 = vsel %vm286, 1, 0
    %v295 = vsel %vm287, 1, 0
    %v296 = vsel %vm288, 1, 0
    %v297 = vcvt.s32.f32 %v289
    %v298 = vcvt.s32.f32 %v290
    %v299 = vcvt.s32.f32 %v291
    %v300 = vcvt.s32.f32 %v292
    %v301 = vcvt.s32.f32 %v293
    %v302 = vcvt.s32.f32 %v294
    %v303 = vcvt.s32.f32 %v295
    %v304 = vcvt.s32.f32 %v296
    %v305 = vpack.c.bf16 %v297, %v297
    %v306 = vpack.c.bf16 %v298, %v298
    %v307 = vpack.c.bf16 %v299, %v299
    %v308 = vpack.c.bf16 %v300, %v300
    %v309 = vpack.c.bf16 %v301, %v301
    %v310 = vpack.c.bf16 %v302, %v302
    %v311 = vpack.c.bf16 %v303, %v303
    %v312 = vpack.c.bf16 %v304, %v304
    %v313 = vld [vmem:[%s82] sm:$0xf]
    %v314 = vld [vmem:[%s82 + $0x4] sm:$0xf]
    %v315 = vld [vmem:[%s82 + $0x8] sm:$0xf]
    %v316 = vld [vmem:[%s82 + $0xc] sm:$0xf]
    %v317 = vld [vmem:[%s82 + $0x10] sm:$0xf]
    %v318 = vld [vmem:[%s82 + $0x14] sm:$0xf]
    %v319 = vld [vmem:[%s82 + $0x18] sm:$0xf]
    %v320 = vld [vmem:[%s82 + $0x1c] sm:$0xf]
    %v321 = vld [vmem:[%s82 + $0x20] sm:$0xf]
    %v322 = vld [vmem:[%s82 + $0x24] sm:$0xf]
    %v323 = vld [vmem:[%s82 + $0x28] sm:$0xf]
    %v324 = vld [vmem:[%s82 + $0x2c] sm:$0xf]
    %v325 = vld [vmem:[%s82 + $0x30] sm:$0xf]
    %v326 = vld [vmem:[%s82 + $0x34] sm:$0xf]
    %v327 = vld [vmem:[%s82 + $0x38] sm:$0xf]
    %v328 = vld [vmem:[%s82 + $0x3c] sm:$0xf]
    %v329 = vld [vmem:[%s82 + $0x40] sm:$0xf]
    %v330 = vld [vmem:[%s82 + $0x44] sm:$0xf]
    %v331 = vld [vmem:[%s82 + $0x48] sm:$0xf]
    %v332 = vld [vmem:[%s82 + $0x4c] sm:$0xf]
    %v333 = vld [vmem:[%s82 + $0x50] sm:$0xf]
    %v334 = vld [vmem:[%s82 + $0x54] sm:$0xf]
    %v335 = vld [vmem:[%s82 + $0x58] sm:$0xf]
    %v336 = vld [vmem:[%s82 + $0x5c] sm:$0xf]
    %v337 = vld [vmem:[%s82 + $0x60] sm:$0xf]
    %v338 = vld [vmem:[%s82 + $0x64] sm:$0xf]
    %v339 = vld [vmem:[%s82 + $0x68] sm:$0xf]
    %v340 = vld [vmem:[%s82 + $0x6c] sm:$0xf]
    %v341 = vld [vmem:[%s82 + $0x70] sm:$0xf]
    %v342 = vld [vmem:[%s82 + $0x74] sm:$0xf]
    %v343 = vld [vmem:[%s82 + $0x78] sm:$0xf]
    %v344 = vld [vmem:[%s82 + $0x7c] sm:$0xf]
    %v345 = vld [vmem:[%s82 + $0x80] sm:$0xf]
    %v346 = vld [vmem:[%s82 + $0x84] sm:$0xf]
    %v347 = vld [vmem:[%s82 + $0x88] sm:$0xf]
    %v348 = vld [vmem:[%s82 + $0x8c] sm:$0xf]
    %v349 = vld [vmem:[%s82 + $0x90] sm:$0xf]
    %v350 = vld [vmem:[%s82 + $0x94] sm:$0xf]
    %v351 = vld [vmem:[%s82 + $0x98] sm:$0xf]
    %v352 = vld [vmem:[%s82 + $0x9c] sm:$0xf]
    %v353 = vld [vmem:[%s82 + $0xa0] sm:$0xf]
    %v354 = vld [vmem:[%s82 + $0xa4] sm:$0xf]
    %v355 = vld [vmem:[%s82 + $0xa8] sm:$0xf]
    %v356 = vld [vmem:[%s82 + $0xac] sm:$0xf]
    %v357 = vld [vmem:[%s82 + $0xb0] sm:$0xf]
    %v358 = vld [vmem:[%s82 + $0xb4] sm:$0xf]
    %v359 = vld [vmem:[%s82 + $0xb8] sm:$0xf]
    %v360 = vld [vmem:[%s82 + $0xbc] sm:$0xf]
    %v361 = vld [vmem:[%s82 + $0xc0] sm:$0xf]
    %v362 = vld [vmem:[%s82 + $0xc4] sm:$0xf]
    %v363 = vld [vmem:[%s82 + $0xc8] sm:$0xf]
    %v364 = vld [vmem:[%s82 + $0xcc] sm:$0xf]
    %v365 = vld [vmem:[%s82 + $0xd0] sm:$0xf]
    %v366 = vld [vmem:[%s82 + $0xd4] sm:$0xf]
    %v367 = vld [vmem:[%s82 + $0xd8] sm:$0xf]
    %v368 = vld [vmem:[%s82 + $0xdc] sm:$0xf]
    %v369 = vld [vmem:[%s82 + $0xe0] sm:$0xf]
    %v370 = vld [vmem:[%s82 + $0xe4] sm:$0xf]
    %v371 = vld [vmem:[%s82 + $0xe8] sm:$0xf]
    %v372 = vld [vmem:[%s82 + $0xec] sm:$0xf]
    %v373 = vld [vmem:[%s82 + $0xf0] sm:$0xf]
    %v374 = vld [vmem:[%s82 + $0xf4] sm:$0xf]
    %v375 = vld [vmem:[%s82 + $0xf8] sm:$0xf]
    %v376 = vld [vmem:[%s82 + $0xfc] sm:$0xf]
    %v377 = vld [vmem:[%s82 + $0x100] sm:$0xf]
    %v378 = vld [vmem:[%s82 + $0x104] sm:$0xf]
    %v379 = vld [vmem:[%s82 + $0x108] sm:$0xf]
    %v380 = vld [vmem:[%s82 + $0x10c] sm:$0xf]
    %v381 = vld [vmem:[%s82 + $0x110] sm:$0xf]
    %v382 = vld [vmem:[%s82 + $0x114] sm:$0xf]
    %v383 = vld [vmem:[%s82 + $0x118] sm:$0xf]
    %v384 = vld [vmem:[%s82 + $0x11c] sm:$0xf]
    %v385 = vld [vmem:[%s82 + $0x120] sm:$0xf]
    %v386 = vld [vmem:[%s82 + $0x124] sm:$0xf]
    %v387 = vld [vmem:[%s82 + $0x128] sm:$0xf]
    %v388 = vld [vmem:[%s82 + $0x12c] sm:$0xf]
    %v389 = vld [vmem:[%s82 + $0x130] sm:$0xf]
    %v390 = vld [vmem:[%s82 + $0x134] sm:$0xf]
    %v391 = vld [vmem:[%s82 + $0x138] sm:$0xf]
    %v392 = vld [vmem:[%s82 + $0x13c] sm:$0xf]
    %v393 = vld [vmem:[%s82 + $0x140] sm:$0xf]
    %v394 = vld [vmem:[%s82 + $0x144] sm:$0xf]
    %v395 = vld [vmem:[%s82 + $0x148] sm:$0xf]
    %v396 = vld [vmem:[%s82 + $0x14c] sm:$0xf]
    %v397 = vld [vmem:[%s82 + $0x150] sm:$0xf]
    %v398 = vld [vmem:[%s82 + $0x154] sm:$0xf]
    %v399 = vld [vmem:[%s82 + $0x158] sm:$0xf]
    %v400 = vld [vmem:[%s82 + $0x15c] sm:$0xf]
    %v401 = vld [vmem:[%s82 + $0x160] sm:$0xf]
    %v402 = vld [vmem:[%s82 + $0x164] sm:$0xf]
    %v403 = vld [vmem:[%s82 + $0x168] sm:$0xf]
    %v404 = vld [vmem:[%s82 + $0x16c] sm:$0xf]
    %v405 = vld [vmem:[%s82 + $0x170] sm:$0xf]
    %v406 = vld [vmem:[%s82 + $0x174] sm:$0xf]
    %v407 = vld [vmem:[%s82 + $0x178] sm:$0xf]
    %v408 = vld [vmem:[%s82 + $0x17c] sm:$0xf]
    %v409 = vld [vmem:[%s82 + $0x180] sm:$0xf]
    %v410 = vld [vmem:[%s82 + $0x184] sm:$0xf]
    %v411 = vld [vmem:[%s82 + $0x188] sm:$0xf]
    %v412 = vld [vmem:[%s82 + $0x18c] sm:$0xf]
    %v413 = vld [vmem:[%s82 + $0x190] sm:$0xf]
    %v414 = vld [vmem:[%s82 + $0x194] sm:$0xf]
    %v415 = vld [vmem:[%s82 + $0x198] sm:$0xf]
    %v416 = vld [vmem:[%s82 + $0x19c] sm:$0xf]
    %v417 = vld [vmem:[%s82 + $0x1a0] sm:$0xf]
    %v418 = vld [vmem:[%s82 + $0x1a4] sm:$0xf]
    %v419 = vld [vmem:[%s82 + $0x1a8] sm:$0xf]
    %v420 = vld [vmem:[%s82 + $0x1ac] sm:$0xf]
    %v421 = vld [vmem:[%s82 + $0x1b0] sm:$0xf]
    %v422 = vld [vmem:[%s82 + $0x1b4] sm:$0xf]
    %v423 = vld [vmem:[%s82 + $0x1b8] sm:$0xf]
    %v424 = vld [vmem:[%s82 + $0x1bc] sm:$0xf]
    %v425 = vld [vmem:[%s82 + $0x1c0] sm:$0xf]
    %v426 = vld [vmem:[%s82 + $0x1c4] sm:$0xf]
    %v427 = vld [vmem:[%s82 + $0x1c8] sm:$0xf]
    %v428 = vld [vmem:[%s82 + $0x1cc] sm:$0xf]
    %v429 = vld [vmem:[%s82 + $0x1d0] sm:$0xf]
    %v430 = vld [vmem:[%s82 + $0x1d4] sm:$0xf]
    %v431 = vld [vmem:[%s82 + $0x1d8] sm:$0xf]
    %v432 = vld [vmem:[%s82 + $0x1dc] sm:$0xf]
    %v433 = vld [vmem:[%s82 + $0x1e0] sm:$0xf]
    %v434 = vld [vmem:[%s82 + $0x1e4] sm:$0xf]
    %v435 = vld [vmem:[%s82 + $0x1e8] sm:$0xf]
    %v436 = vld [vmem:[%s82 + $0x1ec] sm:$0xf]
    %v437 = vld [vmem:[%s82 + $0x1f0] sm:$0xf]
    %v438 = vld [vmem:[%s82 + $0x1f4] sm:$0xf]
    %v439 = vld [vmem:[%s82 + $0x1f8] sm:$0xf]
    %v440 = vld [vmem:[%s82 + $0x1fc] sm:$0xf]
    %v441 = vld [vmem:[%s4] sm:$0x7]
    %v442 = vld [vmem:[#allocation2] sm:$0xf]
    %443 = vxpose.binary.xlu0.c.b16.start [1/16] %v226, %v225, 128
    %444 = vxpose.binary.xlu0.c.b16.cont [2/16] 0, 0, 128
    %445 = vxpose.binary.xlu0.c.b16.cont [3/16] 0, 0, 128
    %446 = vxpose.binary.xlu0.c.b16.cont [4/16] 0, 0, 128
    %447 = vxpose.binary.xlu0.c.b16.cont [5/16] 0, 0, 128
    %448 = vxpose.binary.xlu0.c.b16.cont [6/16] 0, 0, 128
    %449 = vxpose.binary.xlu0.c.b16.cont [7/16] 0, 0, 128
    %450 = vxpose.binary.xlu0.c.b16.end [8/16] 0, 0, 128
    %v451 = vpop.trf.xlu0
    %v452 = vpop.trf.xlu0
    %v453 = vpop.trf.xlu0
    %v454 = vpop.trf.xlu0
    %v455 = vpop.trf.xlu0
    %v456 = vpop.trf.xlu0
    %v457 = vpop.trf.xlu0
    %v458 = vpop.trf.xlu0
    %v459 = vpop.trf.xlu0
    %v460 = vpop.trf.xlu0
    %v461 = vpop.trf.xlu0
    %v462 = vpop.trf.xlu0
    %v463 = vpop.trf.xlu0
    %v464 = vpop.trf.xlu0
    %v465 = vpop.trf.xlu0
    %v466 = vpop.trf.xlu0
    %467 = vxpose.binary.xlu0.c.b16.start [1/16] %v228, %v227, 128
    %468 = vxpose.binary.xlu0.c.b16.cont [2/16] 0, 0, 128
    %469 = vxpose.binary.xlu0.c.b16.cont [3/16] 0, 0, 128
    %470 = vxpose.binary.xlu0.c.b16.cont [4/16] 0, 0, 128
    %471 = vxpose.binary.xlu0.c.b16.cont [5/16] 0, 0, 128
    %472 = vxpose.binary.xlu0.c.b16.cont [6/16] 0, 0, 128
    %473 = vxpose.binary.xlu0.c.b16.cont [7/16] 0, 0, 128
    %474 = vxpose.binary.xlu0.c.b16.end [8/16] 0, 0, 128
    %v475 = vpop.trf.xlu0
    %v476 = vpop.trf.xlu0
    %v477 = vpop.trf.xlu0
    %v478 = vpop.trf.xlu0
    %v479 = vpop.trf.xlu0
    %v480 = vpop.trf.xlu0
    %v481 = vpop.trf.xlu0
    %v482 = vpop.trf.xlu0
    %v483 = vpop.trf.xlu0
    %v484 = vpop.trf.xlu0
    %v485 = vpop.trf.xlu0
    %v486 = vpop.trf.xlu0
    %v487 = vpop.trf.xlu0
    %v488 = vpop.trf.xlu0
    %v489 = vpop.trf.xlu0
    %v490 = vpop.trf.xlu0
    %491 = vxpose.binary.xlu0.c.b16.start [1/16] %v230, %v229, 128
    %492 = vxpose.binary.xlu0.c.b16.cont [2/16] 0, 0, 128
    %493 = vxpose.binary.xlu0.c.b16.cont [3/16] 0, 0, 128
    %494 = vxpose.binary.xlu0.c.b16.cont [4/16] 0, 0, 128
    %495 = vxpose.binary.xlu0.c.b16.cont [5/16] 0, 0, 128
    %496 = vxpose.binary.xlu0.c.b16.cont [6/16] 0, 0, 128
    %497 = vxpose.binary.xlu0.c.b16.cont [7/16] 0, 0, 128
    %498 = vxpose.binary.xlu0.c.b16.end [8/16] 0, 0, 128
    %v499 = vpop.trf.xlu0
    %v500 = vpop.trf.xlu0
    %v501 = vpop.trf.xlu0
    %v502 = vpop.trf.xlu0
    %v503 = vpop.trf.xlu0
    %v504 = vpop.trf.xlu0
    %v505 = vpop.trf.xlu0
    %v506 = vpop.trf.xlu0
    %v507 = vpop.trf.xlu0
    %v508 = vpop.trf.xlu0
    %v509 = vpop.trf.xlu0
    %v510 = vpop.trf.xlu0
    %v511 = vpop.trf.xlu0
    %v512 = vpop.trf.xlu0
    %v513 = vpop.trf.xlu0
    %v514 = vpop.trf.xlu0
    %515 = vxpose.binary.xlu0.c.b16.start [1/16] %v232, %v231, 128
    %516 = vxpose.binary.xlu0.c.b16.cont [2/16] 0, 0, 128
    %517 = vxpose.binary.xlu0.c.b16.cont [3/16] 0, 0, 128
    %518 = vxpose.binary.xlu0.c.b16.cont [4/16] 0, 0, 128
    %519 = vxpose.binary.xlu0.c.b16.cont [5/16] 0, 0, 128
    %520 = vxpose.binary.xlu0.c.b16.cont [6/16] 0, 0, 128
    %521 = vxpose.binary.xlu0.c.b16.cont [7/16] 0, 0, 128
    %522 = vxpose.binary.xlu0.c.b16.end [8/16] 0, 0, 128
    %v523 = vpop.trf.xlu0
    %v524 = vpop.trf.xlu0
    %v525 = vpop.trf.xlu0
    %v526 = vpop.trf.xlu0
    %v527 = vpop.trf.xlu0
    %v528 = vpop.trf.xlu0
    %v529 = vpop.trf.xlu0
    %v530 = vpop.trf.xlu0
    %v531 = vpop.trf.xlu0
    %v532 = vpop.trf.xlu0
    %v533 = vpop.trf.xlu0
    %v534 = vpop.trf.xlu0
    %v535 = vpop.trf.xlu0
    %v536 = vpop.trf.xlu0
    %v537 = vpop.trf.xlu0
    %v538 = vpop.trf.xlu0
    %vm539 = vcmask 64512
    %v541 = vsel %vm539, %v451, 0
    %v544 = vsel %vm539, %v453, 0
    %v547 = vsel %vm539, %v455, 0
    %v550 = vsel %vm539, %v457, 0
    %v553 = vsel %vm539, %v459, 0
    %v556 = vsel %vm539, %v461, 0
    %v559 = vsel %vm539, %v463, 0
    %v562 = vsel %vm539, %v465, 0
    %v565 = vsel %vm539, %v452, 0
    %v568 = vsel %vm539, %v454, 0
    %v571 = vsel %vm539, %v456, 0
    %v574 = vsel %vm539, %v458, 0
    %v577 = vsel %vm539, %v460, 0
    %v580 = vsel %vm539, %v462, 0
    %v583 = vsel %vm539, %v464, 0
    %v586 = vsel %vm539, %v466, 0
    %v589 = vsel %vm539, %v475, 0
    %v592 = vsel %vm539, %v477, 0
    %v595 = vsel %vm539, %v479, 0
    %v598 = vsel %vm539, %v481, 0
    %v601 = vsel %vm539, %v483, 0
    %v604 = vsel %vm539, %v485, 0
    %v607 = vsel %vm539, %v487, 0
    %v610 = vsel %vm539, %v489, 0
    %v613 = vsel %vm539, %v476, 0
    %v616 = vsel %vm539, %v478, 0
    %v619 = vsel %vm539, %v480, 0
    %v622 = vsel %vm539, %v482, 0
    %v625 = vsel %vm539, %v484, 0
    %v628 = vsel %vm539, %v486, 0
    %v631 = vsel %vm539, %v488, 0
    %v634 = vsel %vm539, %v490, 0
    %v637 = vsel %vm539, %v499, 0
    %v640 = vsel %vm539, %v501, 0
    %v643 = vsel %vm539, %v503, 0
    %v646 = vsel %vm539, %v505, 0
    %v649 = vsel %vm539, %v507, 0
    %v652 = vsel %vm539, %v509, 0
    %v655 = vsel %vm539, %v511, 0
    %v658 = vsel %vm539, %v513, 0
    %v661 = vsel %vm539, %v500, 0
    %v664 = vsel %vm539, %v502, 0
    %v667 = vsel %vm539, %v504, 0
    %v670 = vsel %vm539, %v506, 0
    %v673 = vsel %vm539, %v508, 0
    %v676 = vsel %vm539, %v510, 0
    %v679 = vsel %vm539, %v512, 0
    %v682 = vsel %vm539, %v514, 0
    %v685 = vsel %vm539, %v523, 0
    %v688 = vsel %vm539, %v525, 0
    %v691 = vsel %vm539, %v527, 0
    %v694 = vsel %vm539, %v529, 0
    %v697 = vsel %vm539, %v531, 0
    %v700 = vsel %vm539, %v533, 0
    %v703 = vsel %vm539, %v535, 0
    %v706 = vsel %vm539, %v537, 0
    %v709 = vsel %vm539, %v524, 0
    %v712 = vsel %vm539, %v526, 0
    %v715 = vsel %vm539, %v528, 0
    %v718 = vsel %vm539, %v530, 0
    %v721 = vsel %vm539, %v532, 0
    %v724 = vsel %vm539, %v534, 0
    %v727 = vsel %vm539, %v536, 0
    %v730 = vsel %vm539, %v538, 0
    %vm732 = vcmask 1043456
    %v734 = vsel %vm732, %v442, 0
    %736 = vmatpush.bf16.msra.mxu0 0
    %737 = vmatpush.bf16.msra.mxu0 0
    %738 = vmatpush.bf16.msra.mxu0 0
    %739 = vmatpush.bf16.msra.mxu0 0
    %740 = vmatpush.bf16.msra.mxu0 0
    %741 = vmatpush.bf16.msra.mxu0 0
    %742 = vmatpush.bf16.msra.mxu0 0
    %743 = vmatpush.bf16.msra.mxu0 %v734
    %744 = vmatmul.bf16.gmra.mxu0 %v541
    %v745 = vpop.f32.mrf.mxu0
    %v746 = vadd.f32 0.0, %v745
    %v747 = vpop.f32.mrf.mxu0
    %v748 = vadd.f32 0.0, %v747
    %749 = vmatmul.bf16.gmra.mxu0 %v544
    %v750 = vpop.f32.mrf.mxu0
    %v751 = vadd.f32 0.0, %v750
    %v752 = vpop.f32.mrf.mxu0
    %v753 = vadd.f32 0.0, %v752
    %754 = vmatmul.bf16.gmra.mxu0 %v547
    %v755 = vpop.f32.mrf.mxu0
    %v756 = vadd.f32 0.0, %v755
    %v757 = vpop.f32.mrf.mxu0
    %v758 = vadd.f32 0.0, %v757
    %759 = vmatmul.bf16.gmra.mxu0 %v550
    %v760 = vpop.f32.mrf.mxu0
    %v761 = vadd.f32 0.0, %v760
    %v762 = vpop.f32.mrf.mxu0
    %v763 = vadd.f32 0.0, %v762
    %764 = vmatmul.bf16.gmra.mxu0 %v553
    %v765 = vpop.f32.mrf.mxu0
    %v766 = vadd.f32 0.0, %v765
    %v767 = vpop.f32.mrf.mxu0
    %v768 = vadd.f32 0.0, %v767
    %769 = vmatmul.bf16.gmra.mxu0 %v556
    %v770 = vpop.f32.mrf.mxu0
    %v771 = vadd.f32 0.0, %v770
    %v772 = vpop.f32.mrf.mxu0
    %v773 = vadd.f32 0.0, %v772
    %774 = vmatmul.bf16.gmra.mxu0 %v559
    %v775 = vpop.f32.mrf.mxu0
    %v776 = vadd.f32 0.0, %v775
    %v777 = vpop.f32.mrf.mxu0
    %v778 = vadd.f32 0.0, %v777
    %779 = vmatmul.bf16.gmra.mxu0 %v562
    %v780 = vpop.f32.mrf.mxu0
    %v781 = vadd.f32 0.0, %v780
    %v782 = vpop.f32.mrf.mxu0
    %v783 = vadd.f32 0.0, %v782
    %784 = vmatmul.bf16.gmra.mxu0 %v565
    %v785 = vpop.f32.mrf.mxu0
    %v786 = vadd.f32 0.0, %v785
    %v787 = vpop.f32.mrf.mxu0
    %v788 = vadd.f32 0.0, %v787
    %789 = vmatmul.bf16.gmra.mxu0 %v568
    %v790 = vpop.f32.mrf.mxu0
    %v791 = vadd.f32 0.0, %v790
    %v792 = vpop.f32.mrf.mxu0
    %v793 = vadd.f32 0.0, %v792
    %794 = vmatmul.bf16.gmra.mxu0 %v571
    %v795 = vpop.f32.mrf.mxu0
    %v796 = vadd.f32 0.0, %v795
    %v797 = vpop.f32.mrf.mxu0
    %v798 = vadd.f32 0.0, %v797
    %799 = vmatmul.bf16.gmra.mxu0 %v574
    %v800 = vpop.f32.mrf.mxu0
    %v801 = vadd.f32 0.0, %v800
    %v802 = vpop.f32.mrf.mxu0
    %v803 = vadd.f32 0.0, %v802
    %804 = vmatmul.bf16.gmra.mxu0 %v577
    %v805 = vpop.f32.mrf.mxu0
    %v806 = vadd.f32 0.0, %v805
    %v807 = vpop.f32.mrf.mxu0
    %v808 = vadd.f32 0.0, %v807
    %809 = vmatmul.bf16.gmra.mxu0 %v580
    %v810 = vpop.f32.mrf.mxu0
    %v811 = vadd.f32 0.0, %v810
    %v812 = vpop.f32.mrf.mxu0
    %v813 = vadd.f32 0.0, %v812
    %814 = vmatmul.bf16.gmra.mxu0 %v583
    %v815 = vpop.f32.mrf.mxu0
    %v816 = vadd.f32 0.0, %v815
    %v817 = vpop.f32.mrf.mxu0
    %v818 = vadd.f32 0.0, %v817
    %819 = vmatmul.bf16.gmra.mxu0 %v586
    %v820 = vpop.f32.mrf.mxu0
    %v821 = vadd.f32 0.0, %v820
    %v822 = vpop.f32.mrf.mxu0
    %v823 = vadd.f32 0.0, %v822
    %824 = vmatmul.bf16.gmra.mxu0 %v589
    %v825 = vpop.f32.mrf.mxu0
    %v826 = vadd.f32 0.0, %v825
    %v827 = vpop.f32.mrf.mxu0
    %v828 = vadd.f32 0.0, %v827
    %829 = vmatmul.bf16.gmra.mxu0 %v592
    %v830 = vpop.f32.mrf.mxu0
    %v831 = vadd.f32 0.0, %v830
    %v832 = vpop.f32.mrf.mxu0
    %v833 = vadd.f32 0.0, %v832
    %834 = vmatmul.bf16.gmra.mxu0 %v595
    %v835 = vpop.f32.mrf.mxu0
    %v836 = vadd.f32 0.0, %v835
    %v837 = vpop.f32.mrf.mxu0
    %v838 = vadd.f32 0.0, %v837
    %839 = vmatmul.bf16.gmra.mxu0 %v598
    %v840 = vpop.f32.mrf.mxu0
    %v841 = vadd.f32 0.0, %v840
    %v842 = vpop.f32.mrf.mxu0
    %v843 = vadd.f32 0.0, %v842
    %844 = vmatmul.bf16.gmra.mxu0 %v601
    %v845 = vpop.f32.mrf.mxu0
    %v846 = vadd.f32 0.0, %v845
    %v847 = vpop.f32.mrf.mxu0
    %v848 = vadd.f32 0.0, %v847
    %849 = vmatmul.bf16.gmra.mxu0 %v604
    %v850 = vpop.f32.mrf.mxu0
    %v851 = vadd.f32 0.0, %v850
    %v852 = vpop.f32.mrf.mxu0
    %v853 = vadd.f32 0.0, %v852
    %854 = vmatmul.bf16.gmra.mxu0 %v607
    %v855 = vpop.f32.mrf.mxu0
    %v856 = vadd.f32 0.0, %v855
    %v857 = vpop.f32.mrf.mxu0
    %v858 = vadd.f32 0.0, %v857
    %859 = vmatmul.bf16.gmra.mxu0 %v610
    %v860 = vpop.f32.mrf.mxu0
    %v861 = vadd.f32 0.0, %v860
    %v862 = vpop.f32.mrf.mxu0
    %v863 = vadd.f32 0.0, %v862
    %864 = vmatmul.bf16.gmra.mxu0 %v613
    %v865 = vpop.f32.mrf.mxu0
    %v866 = vadd.f32 0.0, %v865
    %v867 = vpop.f32.mrf.mxu0
    %v868 = vadd.f32 0.0, %v867
    %869 = vmatmul.bf16.gmra.mxu0 %v616
    %v870 = vpop.f32.mrf.mxu0
    %v871 = vadd.f32 0.0, %v870
    %v872 = vpop.f32.mrf.mxu0
    %v873 = vadd.f32 0.0, %v872
    %874 = vmatmul.bf16.gmra.mxu0 %v619
    %v875 = vpop.f32.mrf.mxu0
    %v876 = vadd.f32 0.0, %v875
    %v877 = vpop.f32.mrf.mxu0
    %v878 = vadd.f32 0.0, %v877
    %879 = vmatmul.bf16.gmra.mxu0 %v622
    %v880 = vpop.f32.mrf.mxu0
    %v881 = vadd.f32 0.0, %v880
    %v882 = vpop.f32.mrf.mxu0
    %v883 = vadd.f32 0.0, %v882
    %884 = vmatmul.bf16.gmra.mxu0 %v625
    %v885 = vpop.f32.mrf.mxu0
    %v886 = vadd.f32 0.0, %v885
    %v887 = vpop.f32.mrf.mxu0
    %v888 = vadd.f32 0.0, %v887
    %889 = vmatmul.bf16.gmra.mxu0 %v628
    %v890 = vpop.f32.mrf.mxu0
    %v891 = vadd.f32 0.0, %v890
    %v892 = vpop.f32.mrf.mxu0
    %v893 = vadd.f32 0.0, %v892
    %894 = vmatmul.bf16.gmra.mxu0 %v631
    %v895 = vpop.f32.mrf.mxu0
    %v896 = vadd.f32 0.0, %v895
    %v897 = vpop.f32.mrf.mxu0
    %v898 = vadd.f32 0.0, %v897
    %899 = vmatmul.bf16.gmra.mxu0 %v634
    %v900 = vpop.f32.mrf.mxu0
    %v901 = vadd.f32 0.0, %v900
    %v902 = vpop.f32.mrf.mxu0
    %v903 = vadd.f32 0.0, %v902
    %904 = vmatmul.bf16.gmra.mxu0 %v637
    %v905 = vpop.f32.mrf.mxu0
    %v906 = vadd.f32 0.0, %v905
    %v907 = vpop.f32.mrf.mxu0
    %v908 = vadd.f32 0.0, %v907
    %909 = vmatmul.bf16.gmra.mxu0 %v640
    %v910 = vpop.f32.mrf.mxu0
    %v911 = vadd.f32 0.0, %v910
    %v912 = vpop.f32.mrf.mxu0
    %v913 = vadd.f32 0.0, %v912
    %914 = vmatmul.bf16.gmra.mxu0 %v643
    %v915 = vpop.f32.mrf.mxu0
    %v916 = vadd.f32 0.0, %v915
    %v917 = vpop.f32.mrf.mxu0
    %v918 = vadd.f32 0.0, %v917
    %919 = vmatmul.bf16.gmra.mxu0 %v646
    %v920 = vpop.f32.mrf.mxu0
    %v921 = vadd.f32 0.0, %v920
    %v922 = vpop.f32.mrf.mxu0
    %v923 = vadd.f32 0.0, %v922
    %924 = vmatmul.bf16.gmra.mxu0 %v649
    %v925 = vpop.f32.mrf.mxu0
    %v926 = vadd.f32 0.0, %v925
    %v927 = vpop.f32.mrf.mxu0
    %v928 = vadd.f32 0.0, %v927
    %929 = vmatmul.bf16.gmra.mxu0 %v652
    %v930 = vpop.f32.mrf.mxu0
    %v931 = vadd.f32 0.0, %v930
    %v932 = vpop.f32.mrf.mxu0
    %v933 = vadd.f32 0.0, %v932
    %934 = vmatmul.bf16.gmra.mxu0 %v655
    %v935 = vpop.f32.mrf.mxu0
    %v936 = vadd.f32 0.0, %v935
    %v937 = vpop.f32.mrf.mxu0
    %v938 = vadd.f32 0.0, %v937
    %939 = vmatmul.bf16.gmra.mxu0 %v658
    %v940 = vpop.f32.mrf.mxu0
    %v941 = vadd.f32 0.0, %v940
    %v942 = vpop.f32.mrf.mxu0
    %v943 = vadd.f32 0.0, %v942
    %944 = vmatmul.bf16.gmra.mxu0 %v661
    %v945 = vpop.f32.mrf.mxu0
    %v946 = vadd.f32 0.0, %v945
    %v947 = vpop.f32.mrf.mxu0
    %v948 = vadd.f32 0.0, %v947
    %949 = vmatmul.bf16.gmra.mxu0 %v664
    %v950 = vpop.f32.mrf.mxu0
    %v951 = vadd.f32 0.0, %v950
    %v952 = vpop.f32.mrf.mxu0
    %v953 = vadd.f32 0.0, %v952
    %954 = vmatmul.bf16.gmra.mxu0 %v667
    %v955 = vpop.f32.mrf.mxu0
    %v956 = vadd.f32 0.0, %v955
    %v957 = vpop.f32.mrf.mxu0
    %v958 = vadd.f32 0.0, %v957
    %959 = vmatmul.bf16.gmra.mxu0 %v670
    %v960 = vpop.f32.mrf.mxu0
    %v961 = vadd.f32 0.0, %v960
    %v962 = vpop.f32.mrf.mxu0
    %v963 = vadd.f32 0.0, %v962
    %964 = vmatmul.bf16.gmra.mxu0 %v673
    %v965 = vpop.f32.mrf.mxu0
    %v966 = vadd.f32 0.0, %v965
    %v967 = vpop.f32.mrf.mxu0
    %v968 = vadd.f32 0.0, %v967
    %969 = vmatmul.bf16.gmra.mxu0 %v676
    %v970 = vpop.f32.mrf.mxu0
    %v971 = vadd.f32 0.0, %v970
    %v972 = vpop.f32.mrf.mxu0
    %v973 = vadd.f32 0.0, %v972
    %974 = vmatmul.bf16.gmra.mxu0 %v679
    %v975 = vpop.f32.mrf.mxu0
    %v976 = vadd.f32 0.0, %v975
    %v977 = vpop.f32.mrf.mxu0
    %v978 = vadd.f32 0.0, %v977
    %979 = vmatmul.bf16.gmra.mxu0 %v682
    %v980 = vpop.f32.mrf.mxu0
    %v981 = vadd.f32 0.0, %v980
    %v982 = vpop.f32.mrf.mxu0
    %v983 = vadd.f32 0.0, %v982
    %984 = vmatmul.bf16.gmra.mxu0 %v685
    %v985 = vpop.f32.mrf.mxu0
    %v986 = vadd.f32 0.0, %v985
    %v987 = vpop.f32.mrf.mxu0
    %v988 = vadd.f32 0.0, %v987
    %989 = vmatmul.bf16.gmra.mxu0 %v688
    %v990 = vpop.f32.mrf.mxu0
    %v991 = vadd.f32 0.0, %v990
    %v992 = vpop.f32.mrf.mxu0
    %v993 = vadd.f32 0.0, %v992
    %994 = vmatmul.bf16.gmra.mxu0 %v691
    %v995 = vpop.f32.mrf.mxu0
    %v996 = vadd.f32 0.0, %v995
    %v997 = vpop.f32.mrf.mxu0
    %v998 = vadd.f32 0.0, %v997
    %999 = vmatmul.bf16.gmra.mxu0 %v694
    %v1000 = vpop.f32.mrf.mxu0
    %v1001 = vadd.f32 0.0, %v1000
    %v1002 = vpop.f32.mrf.mxu0
    %v1003 = vadd.f32 0.0, %v1002
    %1004 = vmatmul.bf16.gmra.mxu0 %v697
    %v1005 = vpop.f32.mrf.mxu0
    %v1006 = vadd.f32 0.0, %v1005
    %v1007 = vpop.f32.mrf.mxu0
    %v1008 = vadd.f32 0.0, %v1007
    %1009 = vmatmul.bf16.gmra.mxu0 %v700
    %v1010 = vpop.f32.mrf.mxu0
    %v1011 = vadd.f32 0.0, %v1010
    %v1012 = vpop.f32.mrf.mxu0
    %v1013 = vadd.f32 0.0, %v1012
    %1014 = vmatmul.bf16.gmra.mxu0 %v703
    %v1015 = vpop.f32.mrf.mxu0
    %v1016 = vadd.f32 0.0, %v1015
    %v1017 = vpop.f32.mrf.mxu0
    %v1018 = vadd.f32 0.0, %v1017
    %1019 = vmatmul.bf16.gmra.mxu0 %v706
    %v1020 = vpop.f32.mrf.mxu0
    %v1021 = vadd.f32 0.0, %v1020
    %v1022 = vpop.f32.mrf.mxu0
    %v1023 = vadd.f32 0.0, %v1022
    %1024 = vmatmul.bf16.gmra.mxu0 %v709
    %v1025 = vpop.f32.mrf.mxu0
    %v1026 = vadd.f32 0.0, %v1025
    %v1027 = vpop.f32.mrf.mxu0
    %v1028 = vadd.f32 0.0, %v1027
    %1029 = vmatmul.bf16.gmra.mxu0 %v712
    %v1030 = vpop.f32.mrf.mxu0
    %v1031 = vadd.f32 0.0, %v1030
    %v1032 = vpop.f32.mrf.mxu0
    %v1033 = vadd.f32 0.0, %v1032
    %1034 = vmatmul.bf16.gmra.mxu0 %v715
    %v1035 = vpop.f32.mrf.mxu0
    %v1036 = vadd.f32 0.0, %v1035
    %v1037 = vpop.f32.mrf.mxu0
    %v1038 = vadd.f32 0.0, %v1037
    %1039 = vmatmul.bf16.gmra.mxu0 %v718
    %v1040 = vpop.f32.mrf.mxu0
    %v1041 = vadd.f32 0.0, %v1040
    %v1042 = vpop.f32.mrf.mxu0
    %v1043 = vadd.f32 0.0, %v1042
    %1044 = vmatmul.bf16.gmra.mxu0 %v721
    %v1045 = vpop.f32.mrf.mxu0
    %v1046 = vadd.f32 0.0, %v1045
    %v1047 = vpop.f32.mrf.mxu0
    %v1048 = vadd.f32 0.0, %v1047
    %1049 = vmatmul.bf16.gmra.mxu0 %v724
    %v1050 = vpop.f32.mrf.mxu0
    %v1051 = vadd.f32 0.0, %v1050
    %v1052 = vpop.f32.mrf.mxu0
    %v1053 = vadd.f32 0.0, %v1052
    %1054 = vmatmul.bf16.gmra.mxu0 %v727
    %v1055 = vpop.f32.mrf.mxu0
    %v1056 = vadd.f32 0.0, %v1055
    %v1057 = vpop.f32.mrf.mxu0
    %v1058 = vadd.f32 0.0, %v1057
    %1059 = vmatmul.bf16.gmra.mxu0 %v730
    %v1060 = vpop.f32.mrf.mxu0
    %v1061 = vadd.f32 0.0, %v1060
    %v1062 = vpop.f32.mrf.mxu0
    %v1063 = vadd.f32 0.0, %v1062
    %1064 = vdwg.mxu0
    %v1193 = vunpack.c.l.b16 %v313
    %v1194 = vunpack.c.l.b16 %v314
    %v1195 = vunpack.c.l.b16 %v315
    %v1196 = vunpack.c.l.b16 %v316
    %v1197 = vunpack.c.l.b16 %v317
    %v1198 = vunpack.c.l.b16 %v318
    %v1199 = vunpack.c.l.b16 %v319
    %v1200 = vunpack.c.l.b16 %v320
    %v1201 = vunpack.c.l.b16 %v321
    %v1202 = vunpack.c.l.b16 %v322
    %v1203 = vunpack.c.l.b16 %v323
    %v1204 = vunpack.c.l.b16 %v324
    %v1205 = vunpack.c.l.b16 %v325
    %v1206 = vunpack.c.l.b16 %v326
    %v1207 = vunpack.c.l.b16 %v327
    %v1208 = vunpack.c.l.b16 %v328
    %v1209 = vunpack.c.l.b16 %v329
    %v1210 = vunpack.c.l.b16 %v330
    %v1211 = vunpack.c.l.b16 %v331
    %v1212 = vunpack.c.l.b16 %v332
    %v1213 = vunpack.c.l.b16 %v333
    %v1214 = vunpack.c.l.b16 %v334
    %v1215 = vunpack.c.l.b16 %v335
    %v1216 = vunpack.c.l.b16 %v336
    %v1217 = vunpack.c.l.b16 %v337
    %v1218 = vunpack.c.l.b16 %v338
    %v1219 = vunpack.c.l.b16 %v339
    %v1220 = vunpack.c.l.b16 %v340
    %v1221 = vunpack.c.l.b16 %v341
    %v1222 = vunpack.c.l.b16 %v342
    %v1223 = vunpack.c.l.b16 %v343
    %v1224 = vunpack.c.l.b16 %v344
    %v1225 = vunpack.c.l.b16 %v345
    %v1226 = vunpack.c.l.b16 %v346
    %v1227 = vunpack.c.l.b16 %v347
    %v1228 = vunpack.c.l.b16 %v348
    %v1229 = vunpack.c.l.b16 %v349
    %v1230 = vunpack.c.l.b16 %v350
    %v1231 = vunpack.c.l.b16 %v351
    %v1232 = vunpack.c.l.b16 %v352
    %v1233 = vunpack.c.l.b16 %v353
    %v1234 = vunpack.c.l.b16 %v354
    %v1235 = vunpack.c.l.b16 %v355
    %v1236 = vunpack.c.l.b16 %v356
    %v1237 = vunpack.c.l.b16 %v357
    %v1238 = vunpack.c.l.b16 %v358
    %v1239 = vunpack.c.l.b16 %v359
    %v1240 = vunpack.c.l.b16 %v360
    %v1241 = vunpack.c.l.b16 %v361
    %v1242 = vunpack.c.l.b16 %v362
    %v1243 = vunpack.c.l.b16 %v363
    %v1244 = vunpack.c.l.b16 %v364
    %v1245 = vunpack.c.l.b16 %v365
    %v1246 = vunpack.c.l.b16 %v366
    %v1247 = vunpack.c.l.b16 %v367
    %v1248 = vunpack.c.l.b16 %v368
    %v1249 = vunpack.c.l.b16 %v369
    %v1250 = vunpack.c.l.b16 %v370
    %v1251 = vunpack.c.l.b16 %v371
    %v1252 = vunpack.c.l.b16 %v372
    %v1253 = vunpack.c.l.b16 %v373
    %v1254 = vunpack.c.l.b16 %v374
    %v1255 = vunpack.c.l.b16 %v375
    %v1256 = vunpack.c.l.b16 %v376
    %v1257 = vunpack.c.l.b16 %v377
    %v1258 = vunpack.c.l.b16 %v378
    %v1259 = vunpack.c.l.b16 %v379
    %v1260 = vunpack.c.l.b16 %v380
    %v1261 = vunpack.c.l.b16 %v381
    %v1262 = vunpack.c.l.b16 %v382
    %v1263 = vunpack.c.l.b16 %v383
    %v1264 = vunpack.c.l.b16 %v384
    %v1265 = vunpack.c.l.b16 %v385
    %v1266 = vunpack.c.l.b16 %v386
    %v1267 = vunpack.c.l.b16 %v387
    %v1268 = vunpack.c.l.b16 %v388
    %v1269 = vunpack.c.l.b16 %v389
    %v1270 = vunpack.c.l.b16 %v390
    %v1271 = vunpack.c.l.b16 %v391
    %v1272 = vunpack.c.l.b16 %v392
    %v1273 = vunpack.c.l.b16 %v393
    %v1274 = vunpack.c.l.b16 %v394
    %v1275 = vunpack.c.l.b16 %v395
    %v1276 = vunpack.c.l.b16 %v396
    %v1277 = vunpack.c.l.b16 %v397
    %v1278 = vunpack.c.l.b16 %v398
    %v1279 = vunpack.c.l.b16 %v399
    %v1280 = vunpack.c.l.b16 %v400
    %v1281 = vunpack.c.l.b16 %v401
    %v1282 = vunpack.c.l.b16 %v402
    %v1283 = vunpack.c.l.b16 %v403
    %v1284 = vunpack.c.l.b16 %v404
    %v1285 = vunpack.c.l.b16 %v405
    %v1286 = vunpack.c.l.b16 %v406
    %v1287 = vunpack.c.l.b16 %v407
    %v1288 = vunpack.c.l.b16 %v408
    %v1289 = vunpack.c.l.b16 %v409
    %v1290 = vunpack.c.l.b16 %v410
    %v1291 = vunpack.c.l.b16 %v411
    %v1292 = vunpack.c.l.b16 %v412
    %v1293 = vunpack.c.l.b16 %v413
    %v1294 = vunpack.c.l.b16 %v414
    %v1295 = vunpack.c.l.b16 %v415
    %v1296 = vunpack.c.l.b16 %v416
    %v1297 = vunpack.c.l.b16 %v417
    %v1298 = vunpack.c.l.b16 %v418
    %v1299 = vunpack.c.l.b16 %v419
    %v1300 = vunpack.c.l.b16 %v420
    %v1301 = vunpack.c.l.b16 %v421
    %v1302 = vunpack.c.l.b16 %v422
    %v1303 = vunpack.c.l.b16 %v423
    %v1304 = vunpack.c.l.b16 %v424
    %v1305 = vunpack.c.l.b16 %v425
    %v1306 = vunpack.c.l.b16 %v426
    %v1307 = vunpack.c.l.b16 %v427
    %v1308 = vunpack.c.l.b16 %v428
    %v1309 = vunpack.c.l.b16 %v429
    %v1310 = vunpack.c.l.b16 %v430
    %v1311 = vunpack.c.l.b16 %v431
    %v1312 = vunpack.c.l.b16 %v432
    %v1313 = vunpack.c.l.b16 %v433
    %v1314 = vunpack.c.l.b16 %v434
    %v1315 = vunpack.c.l.b16 %v435
    %v1316 = vunpack.c.l.b16 %v436
    %v1317 = vunpack.c.l.b16 %v437
    %v1318 = vunpack.c.l.b16 %v438
    %v1319 = vunpack.c.l.b16 %v439
    %v1320 = vunpack.c.l.b16 %v440
    %v1321 = vpack.c.b16 %v1194, %v1193
    %v1322 = vpack.c.b16 %v1196, %v1195
    %v1323 = vpack.c.b16 %v1198, %v1197
    %v1324 = vpack.c.b16 %v1200, %v1199
    %v1325 = vpack.c.b16 %v1202, %v1201
    %v1326 = vpack.c.b16 %v1204, %v1203
    %v1327 = vpack.c.b16 %v1206, %v1205
    %v1328 = vpack.c.b16 %v1208, %v1207
    %v1329 = vpack.c.b16 %v1210, %v1209
    %v1330 = vpack.c.b16 %v1212, %v1211
    %v1331 = vpack.c.b16 %v1214, %v1213
    %v1332 = vpack.c.b16 %v1216, %v1215
    %v1333 = vpack.c.b16 %v1218, %v1217
    %v1334 = vpack.c.b16 %v1220, %v1219
    %v1335 = vpack.c.b16 %v1222, %v1221
    %v1336 = vpack.c.b16 %v1224, %v1223
    %v1337 = vpack.c.b16 %v1226, %v1225
    %v1338 = vpack.c.b16 %v1228, %v1227
    %v1339 = vpack.c.b16 %v1230, %v1229
    %v1340 = vpack.c.b16 %v1232, %v1231
    %v1341 = vpack.c.b16 %v1234, %v1233
    %v1342 = vpack.c.b16 %v1236, %v1235
    %v1343 = vpack.c.b16 %v1238, %v1237
    %v1344 = vpack.c.b16 %v1240, %v1239
    %v1345 = vpack.c.b16 %v1242, %v1241
    %v1346 = vpack.c.b16 %v1244, %v1243
    %v1347 = vpack.c.b16 %v1246, %v1245
    %v1348 = vpack.c.b16 %v1248, %v1247
    %v1349 = vpack.c.b16 %v1250, %v1249
    %v1350 = vpack.c.b16 %v1252, %v1251
    %v1351 = vpack.c.b16 %v1254, %v1253
    %v1352 = vpack.c.b16 %v1256, %v1255
    %v1353 = vpack.c.b16 %v1258, %v1257
    %v1354 = vpack.c.b16 %v1260, %v1259
    %v1355 = vpack.c.b16 %v1262, %v1261
    %v1356 = vpack.c.b16 %v1264, %v1263
    %v1357 = vpack.c.b16 %v1266, %v1265
    %v1358 = vpack.c.b16 %v1268, %v1267
    %v1359 = vpack.c.b16 %v1270, %v1269
    %v1360 = vpack.c.b16 %v1272, %v1271
    %v1361 = vpack.c.b16 %v1274, %v1273
    %v1362 = vpack.c.b16 %v1276, %v1275
    %v1363 = vpack.c.b16 %v1278, %v1277
    %v1364 = vpack.c.b16 %v1280, %v1279
    %v1365 = vpack.c.b16 %v1282, %v1281
    %v1366 = vpack.c.b16 %v1284, %v1283
    %v1367 = vpack.c.b16 %v1286, %v1285
    %v1368 = vpack.c.b16 %v1288, %v1287
    %v1369 = vpack.c.b16 %v1290, %v1289
    %v1370 = vpack.c.b16 %v1292, %v1291
    %v1371 = vpack.c.b16 %v1294, %v1293
    %v1372 = vpack.c.b16 %v1296, %v1295
    %v1373 = vpack.c.b16 %v1298, %v1297
    %v1374 = vpack.c.b16 %v1300, %v1299
    %v1375 = vpack.c.b16 %v1302, %v1301
    %v1376 = vpack.c.b16 %v1304, %v1303
    %v1377 = vpack.c.b16 %v1306, %v1305
    %v1378 = vpack.c.b16 %v1308, %v1307
    %v1379 = vpack.c.b16 %v1310, %v1309
    %v1380 = vpack.c.b16 %v1312, %v1311
    %v1381 = vpack.c.b16 %v1314, %v1313
    %v1382 = vpack.c.b16 %v1316, %v1315
    %v1383 = vpack.c.b16 %v1318, %v1317
    %v1384 = vpack.c.b16 %v1320, %v1319
    %vm1385 = vcmask 39936
    %v1387 = vsel %vm1385, %v1321, 0
    %v1390 = vsel %vm1385, %v1322, 0
    %v1393 = vsel %vm1385, %v1323, 0
    %v1396 = vsel %vm1385, %v1324, 0
    %v1399 = vsel %vm1385, %v1325, 0
    %v1402 = vsel %vm1385, %v1326, 0
    %v1405 = vsel %vm1385, %v1327, 0
    %v1408 = vsel %vm1385, %v1328, 0
    %v1411 = vsel %vm1385, %v1329, 0
    %v1414 = vsel %vm1385, %v1330, 0
    %v1417 = vsel %vm1385, %v1331, 0
    %v1420 = vsel %vm1385, %v1332, 0
    %v1423 = vsel %vm1385, %v1333, 0
    %v1426 = vsel %vm1385, %v1334, 0
    %v1429 = vsel %vm1385, %v1335, 0
    %v1432 = vsel %vm1385, %v1336, 0
    %v1435 = vsel %vm1385, %v1337, 0
    %v1438 = vsel %vm1385, %v1338, 0
    %v1441 = vsel %vm1385, %v1339, 0
    %v1444 = vsel %vm1385, %v1340, 0
    %v1447 = vsel %vm1385, %v1341, 0
    %v1450 = vsel %vm1385, %v1342, 0
    %v1453 = vsel %vm1385, %v1343, 0
    %v1456 = vsel %vm1385, %v1344, 0
    %v1459 = vsel %vm1385, %v1345, 0
    %v1462 = vsel %vm1385, %v1346, 0
    %v1465 = vsel %vm1385, %v1347, 0
    %v1468 = vsel %vm1385, %v1348, 0
    %v1471 = vsel %vm1385, %v1349, 0
    %v1474 = vsel %vm1385, %v1350, 0
    %v1477 = vsel %vm1385, %v1351, 0
    %v1480 = vsel %vm1385, %v1352, 0
    %v1483 = vsel %vm1385, %v1353, 0
    %v1486 = vsel %vm1385, %v1354, 0
    %v1489 = vsel %vm1385, %v1355, 0
    %v1492 = vsel %vm1385, %v1356, 0
    %v1495 = vsel %vm1385, %v1357, 0
    %v1498 = vsel %vm1385, %v1358, 0
    %v1501 = vsel %vm1385, %v1359, 0
    %v1504 = vsel %vm1385, %v1360, 0
    %v1507 = vsel %vm1385, %v1361, 0
    %v1510 = vsel %vm1385, %v1362, 0
    %v1513 = vsel %vm1385, %v1363, 0
    %v1516 = vsel %vm1385, %v1364, 0
    %v1519 = vsel %vm1385, %v1365, 0
    %v1522 = vsel %vm1385, %v1366, 0
    %v1525 = vsel %vm1385, %v1367, 0
    %v1528 = vsel %vm1385, %v1368, 0
    %v1531 = vsel %vm1385, %v1369, 0
    %v1534 = vsel %vm1385, %v1370, 0
    %v1537 = vsel %vm1385, %v1371, 0
    %v1540 = vsel %vm1385, %v1372, 0
    %v1543 = vsel %vm1385, %v1373, 0
    %v1546 = vsel %vm1385, %v1374, 0
    %v1549 = vsel %vm1385, %v1375, 0
    %v1552 = vsel %vm1385, %v1376, 0
    %v1555 = vsel %vm1385, %v1377, 0
    %v1558 = vsel %vm1385, %v1378, 0
    %v1561 = vsel %vm1385, %v1379, 0
    %v1564 = vsel %vm1385, %v1380, 0
    %v1567 = vsel %vm1385, %v1381, 0
    %v1570 = vsel %vm1385, %v1382, 0
    %v1573 = vsel %vm1385, %v1383, 0
    %v1576 = vsel %vm1385, %v1384, 0
    %vm1578 = vcmask 1041408
    %vm1579 = vcmask 1042432
    %v1580 = vsel %vm1578, 4294967295, 65535
    %v1581 = vsel %vm1579, %v1580, 0
    %v1583 = vand.u32 %v441, %v1581
    %1585 = vmatpush.bf16.msra.mxu0 0
    %1586 = vmatpush.bf16.msra.mxu0 0
    %1587 = vmatpush.bf16.msra.mxu0 0
    %1588 = vmatpush.bf16.msra.mxu0 0
    %1589 = vmatpush.bf16.msra.mxu0 0
    %1590 = vmatpush.bf16.msra.mxu0 0
    %1591 = vmatpush.bf16.msra.mxu0 0
    %1592 = vmatpush.bf16.msra.mxu0 %v1583
    %1593 = vmatmul.bf16.gmra.mxu0 %v1387
    %v1594 = vpop.f32.mrf.mxu0
    %v1595 = vadd.f32 %v746, %v1594
    %v1596 = vpop.f32.mrf.mxu0
    %v1597 = vadd.f32 %v748, %v1596
    %1598 = vmatmul.bf16.gmra.mxu0 %v1390
    %v1599 = vpop.f32.mrf.mxu0
    %v1600 = vadd.f32 %v751, %v1599
    %v1601 = vpop.f32.mrf.mxu0
    %v1602 = vadd.f32 %v753, %v1601
    %1603 = vmatmul.bf16.gmra.mxu0 %v1393
    %v1604 = vpop.f32.mrf.mxu0
    %v1605 = vadd.f32 %v756, %v1604
    %v1606 = vpop.f32.mrf.mxu0
    %v1607 = vadd.f32 %v758, %v1606
    %1608 = vmatmul.bf16.gmra.mxu0 %v1396
    %v1609 = vpop.f32.mrf.mxu0
    %v1610 = vadd.f32 %v761, %v1609
    %v1611 = vpop.f32.mrf.mxu0
    %v1612 = vadd.f32 %v763, %v1611
    %1613 = vmatmul.bf16.gmra.mxu0 %v1399
    %v1614 = vpop.f32.mrf.mxu0
    %v1615 = vadd.f32 %v766, %v1614
    %v1616 = vpop.f32.mrf.mxu0
    %v1617 = vadd.f32 %v768, %v1616
    %1618 = vmatmul.bf16.gmra.mxu0 %v1402
    %v1619 = vpop.f32.mrf.mxu0
    %v1620 = vadd.f32 %v771, %v1619
    %v1621 = vpop.f32.mrf.mxu0
    %v1622 = vadd.f32 %v773, %v1621
    %1623 = vmatmul.bf16.gmra.mxu0 %v1405
    %v1624 = vpop.f32.mrf.mxu0
    %v1625 = vadd.f32 %v776, %v1624
    %v1626 = vpop.f32.mrf.mxu0
    %v1627 = vadd.f32 %v778, %v1626
    %1628 = vmatmul.bf16.gmra.mxu0 %v1408
    %v1629 = vpop.f32.mrf.mxu0
    %v1630 = vadd.f32 %v781, %v1629
    %v1631 = vpop.f32.mrf.mxu0
    %v1632 = vadd.f32 %v783, %v1631
    %1633 = vmatmul.bf16.gmra.mxu0 %v1411
    %v1634 = vpop.f32.mrf.mxu0
    %v1635 = vadd.f32 %v786, %v1634
    %v1636 = vpop.f32.mrf.mxu0
    %v1637 = vadd.f32 %v788, %v1636
    %1638 = vmatmul.bf16.gmra.mxu0 %v1414
    %v1639 = vpop.f32.mrf.mxu0
    %v1640 = vadd.f32 %v791, %v1639
    %v1641 = vpop.f32.mrf.mxu0
    %v1642 = vadd.f32 %v793, %v1641
    %1643 = vmatmul.bf16.gmra.mxu0 %v1417
    %v1644 = vpop.f32.mrf.mxu0
    %v1645 = vadd.f32 %v796, %v1644
    %v1646 = vpop.f32.mrf.mxu0
    %v1647 = vadd.f32 %v798, %v1646
    %1648 = vmatmul.bf16.gmra.mxu0 %v1420
    %v1649 = vpop.f32.mrf.mxu0
    %v1650 = vadd.f32 %v801, %v1649
    %v1651 = vpop.f32.mrf.mxu0
    %v1652 = vadd.f32 %v803, %v1651
    %1653 = vmatmul.bf16.gmra.mxu0 %v1423
    %v1654 = vpop.f32.mrf.mxu0
    %v1655 = vadd.f32 %v806, %v1654
    %v1656 = vpop.f32.mrf.mxu0
    %v1657 = vadd.f32 %v808, %v1656
    %1658 = vmatmul.bf16.gmra.mxu0 %v1426
    %v1659 = vpop.f32.mrf.mxu0
    %v1660 = vadd.f32 %v811, %v1659
    %v1661 = vpop.f32.mrf.mxu0
    %v1662 = vadd.f32 %v813, %v1661
    %1663 = vmatmul.bf16.gmra.mxu0 %v1429
    %v1664 = vpop.f32.mrf.mxu0
    %v1665 = vadd.f32 %v816, %v1664
    %v1666 = vpop.f32.mrf.mxu0
    %v1667 = vadd.f32 %v818, %v1666
    %1668 = vmatmul.bf16.gmra.mxu0 %v1432
    %v1669 = vpop.f32.mrf.mxu0
    %v1670 = vadd.f32 %v821, %v1669
    %v1671 = vpop.f32.mrf.mxu0
    %v1672 = vadd.f32 %v823, %v1671
    %1673 = vmatmul.bf16.gmra.mxu0 %v1435
    %v1674 = vpop.f32.mrf.mxu0
    %v1675 = vadd.f32 %v826, %v1674
    %v1676 = vpop.f32.mrf.mxu0
    %v1677 = vadd.f32 %v828, %v1676
    %1678 = vmatmul.bf16.gmra.mxu0 %v1438
    %v1679 = vpop.f32.mrf.mxu0
    %v1680 = vadd.f32 %v831, %v1679
    %v1681 = vpop.f32.mrf.mxu0
    %v1682 = vadd.f32 %v833, %v1681
    %1683 = vmatmul.bf16.gmra.mxu0 %v1441
    %v1684 = vpop.f32.mrf.mxu0
    %v1685 = vadd.f32 %v836, %v1684
    %v1686 = vpop.f32.mrf.mxu0
    %v1687 = vadd.f32 %v838, %v1686
    %1688 = vmatmul.bf16.gmra.mxu0 %v1444
    %v1689 = vpop.f32.mrf.mxu0
    %v1690 = vadd.f32 %v841, %v1689
    %v1691 = vpop.f32.mrf.mxu0
    %v1692 = vadd.f32 %v843, %v1691
    %1693 = vmatmul.bf16.gmra.mxu0 %v1447
    %v1694 = vpop.f32.mrf.mxu0
    %v1695 = vadd.f32 %v846, %v1694
    %v1696 = vpop.f32.mrf.mxu0
    %v1697 = vadd.f32 %v848, %v1696
    %1698 = vmatmul.bf16.gmra.mxu0 %v1450
    %v1699 = vpop.f32.mrf.mxu0
    %v1700 = vadd.f32 %v851, %v1699
    %v1701 = vpop.f32.mrf.mxu0
    %v1702 = vadd.f32 %v853, %v1701
    %1703 = vmatmul.bf16.gmra.mxu0 %v1453
    %v1704 = vpop.f32.mrf.mxu0
    %v1705 = vadd.f32 %v856, %v1704
    %v1706 = vpop.f32.mrf.mxu0
    %v1707 = vadd.f32 %v858, %v1706
    %1708 = vmatmul.bf16.gmra.mxu0 %v1456
    %v1709 = vpop.f32.mrf.mxu0
    %v1710 = vadd.f32 %v861, %v1709
    %v1711 = vpop.f32.mrf.mxu0
    %v1712 = vadd.f32 %v863, %v1711
    %1713 = vmatmul.bf16.gmra.mxu0 %v1459
    %v1714 = vpop.f32.mrf.mxu0
    %v1715 = vadd.f32 %v866, %v1714
    %v1716 = vpop.f32.mrf.mxu0
    %v1717 = vadd.f32 %v868, %v1716
    %1718 = vmatmul.bf16.gmra.mxu0 %v1462
    %v1719 = vpop.f32.mrf.mxu0
    %v1720 = vadd.f32 %v871, %v1719
    %v1721 = vpop.f32.mrf.mxu0
    %v1722 = vadd.f32 %v873, %v1721
    %1723 = vmatmul.bf16.gmra.mxu0 %v1465
    %v1724 = vpop.f32.mrf.mxu0
    %v1725 = vadd.f32 %v876, %v1724
    %v1726 = vpop.f32.mrf.mxu0
    %v1727 = vadd.f32 %v878, %v1726
    %1728 = vmatmul.bf16.gmra.mxu0 %v1468
    %v1729 = vpop.f32.mrf.mxu0
    %v1730 = vadd.f32 %v881, %v1729
    %v1731 = vpop.f32.mrf.mxu0
    %v1732 = vadd.f32 %v883, %v1731
    %1733 = vmatmul.bf16.gmra.mxu0 %v1471
    %v1734 = vpop.f32.mrf.mxu0
    %v1735 = vadd.f32 %v886, %v1734
    %v1736 = vpop.f32.mrf.mxu0
    %v1737 = vadd.f32 %v888, %v1736
    %1738 = vmatmul.bf16.gmra.mxu0 %v1474
    %v1739 = vpop.f32.mrf.mxu0
    %v1740 = vadd.f32 %v891, %v1739
    %v1741 = vpop.f32.mrf.mxu0
    %v1742 = vadd.f32 %v893, %v1741
    %1743 = vmatmul.bf16.gmra.mxu0 %v1477
    %v1744 = vpop.f32.mrf.mxu0
    %v1745 = vadd.f32 %v896, %v1744
    %v1746 = vpop.f32.mrf.mxu0
    %v1747 = vadd.f32 %v898, %v1746
    %1748 = vmatmul.bf16.gmra.mxu0 %v1480
    %v1749 = vpop.f32.mrf.mxu0
    %v1750 = vadd.f32 %v901, %v1749
    %v1751 = vpop.f32.mrf.mxu0
    %v1752 = vadd.f32 %v903, %v1751
    %1753 = vmatmul.bf16.gmra.mxu0 %v1483
    %v1754 = vpop.f32.mrf.mxu0
    %v1755 = vadd.f32 %v906, %v1754
    %v1756 = vpop.f32.mrf.mxu0
    %v1757 = vadd.f32 %v908, %v1756
    %1758 = vmatmul.bf16.gmra.mxu0 %v1486
    %v1759 = vpop.f32.mrf.mxu0
    %v1760 = vadd.f32 %v911, %v1759
    %v1761 = vpop.f32.mrf.mxu0
    %v1762 = vadd.f32 %v913, %v1761
    %1763 = vmatmul.bf16.gmra.mxu0 %v1489
    %v1764 = vpop.f32.mrf.mxu0
    %v1765 = vadd.f32 %v916, %v1764
    %v1766 = vpop.f32.mrf.mxu0
    %v1767 = vadd.f32 %v918, %v1766
    %1768 = vmatmul.bf16.gmra.mxu0 %v1492
    %v1769 = vpop.f32.mrf.mxu0
    %v1770 = vadd.f32 %v921, %v1769
    %v1771 = vpop.f32.mrf.mxu0
    %v1772 = vadd.f32 %v923, %v1771
    %1773 = vmatmul.bf16.gmra.mxu0 %v1495
    %v1774 = vpop.f32.mrf.mxu0
    %v1775 = vadd.f32 %v926, %v1774
    %v1776 = vpop.f32.mrf.mxu0
    %v1777 = vadd.f32 %v928, %v1776
    %1778 = vmatmul.bf16.gmra.mxu0 %v1498
    %v1779 = vpop.f32.mrf.mxu0
    %v1780 = vadd.f32 %v931, %v1779
    %v1781 = vpop.f32.mrf.mxu0
    %v1782 = vadd.f32 %v933, %v1781
    %1783 = vmatmul.bf16.gmra.mxu0 %v1501
    %v1784 = vpop.f32.mrf.mxu0
    %v1785 = vadd.f32 %v936, %v1784
    %v1786 = vpop.f32.mrf.mxu0
    %v1787 = vadd.f32 %v938, %v1786
    %1788 = vmatmul.bf16.gmra.mxu0 %v1504
    %v1789 = vpop.f32.mrf.mxu0
    %v1790 = vadd.f32 %v941, %v1789
    %v1791 = vpop.f32.mrf.mxu0
    %v1792 = vadd.f32 %v943, %v1791
    %1793 = vmatmul.bf16.gmra.mxu0 %v1507
    %v1794 = vpop.f32.mrf.mxu0
    %v1795 = vadd.f32 %v946, %v1794
    %v1796 = vpop.f32.mrf.mxu0
    %v1797 = vadd.f32 %v948, %v1796
    %1798 = vmatmul.bf16.gmra.mxu0 %v1510
    %v1799 = vpop.f32.mrf.mxu0
    %v1800 = vadd.f32 %v951, %v1799
    %v1801 = vpop.f32.mrf.mxu0
    %v1802 = vadd.f32 %v953, %v1801
    %1803 = vmatmul.bf16.gmra.mxu0 %v1513
    %v1804 = vpop.f32.mrf.mxu0
    %v1805 = vadd.f32 %v956, %v1804
    %v1806 = vpop.f32.mrf.mxu0
    %v1807 = vadd.f32 %v958, %v1806
    %1808 = vmatmul.bf16.gmra.mxu0 %v1516
    %v1809 = vpop.f32.mrf.mxu0
    %v1810 = vadd.f32 %v961, %v1809
    %v1811 = vpop.f32.mrf.mxu0
    %v1812 = vadd.f32 %v963, %v1811
    %1813 = vmatmul.bf16.gmra.mxu0 %v1519
    %v1814 = vpop.f32.mrf.mxu0
    %v1815 = vadd.f32 %v966, %v1814
    %v1816 = vpop.f32.mrf.mxu0
    %v1817 = vadd.f32 %v968, %v1816
    %1818 = vmatmul.bf16.gmra.mxu0 %v1522
    %v1819 = vpop.f32.mrf.mxu0
    %v1820 = vadd.f32 %v971, %v1819
    %v1821 = vpop.f32.mrf.mxu0
    %v1822 = vadd.f32 %v973, %v1821
    %1823 = vmatmul.bf16.gmra.mxu0 %v1525
    %v1824 = vpop.f32.mrf.mxu0
    %v1825 = vadd.f32 %v976, %v1824
    %v1826 = vpop.f32.mrf.mxu0
    %v1827 = vadd.f32 %v978, %v1826
    %1828 = vmatmul.bf16.gmra.mxu0 %v1528
    %v1829 = vpop.f32.mrf.mxu0
    %v1830 = vadd.f32 %v981, %v1829
    %v1831 = vpop.f32.mrf.mxu0
    %v1832 = vadd.f32 %v983, %v1831
    %1833 = vmatmul.bf16.gmra.mxu0 %v1531
    %v1834 = vpop.f32.mrf.mxu0
    %v1835 = vadd.f32 %v986, %v1834
    %v1836 = vpop.f32.mrf.mxu0
    %v1837 = vadd.f32 %v988, %v1836
    %1838 = vmatmul.bf16.gmra.mxu0 %v1534
    %v1839 = vpop.f32.mrf.mxu0
    %v1840 = vadd.f32 %v991, %v1839
    %v1841 = vpop.f32.mrf.mxu0
    %v1842 = vadd.f32 %v993, %v1841
    %1843 = vmatmul.bf16.gmra.mxu0 %v1537
    %v1844 = vpop.f32.mrf.mxu0
    %v1845 = vadd.f32 %v996, %v1844
    %v1846 = vpop.f32.mrf.mxu0
    %v1847 = vadd.f32 %v998, %v1846
    %1848 = vmatmul.bf16.gmra.mxu0 %v1540
    %v1849 = vpop.f32.mrf.mxu0
    %v1850 = vadd.f32 %v1001, %v1849
    %v1851 = vpop.f32.mrf.mxu0
    %v1852 = vadd.f32 %v1003, %v1851
    %1853 = vmatmul.bf16.gmra.mxu0 %v1543
    %v1854 = vpop.f32.mrf.mxu0
    %v1855 = vadd.f32 %v1006, %v1854
    %v1856 = vpop.f32.mrf.mxu0
    %v1857 = vadd.f32 %v1008, %v1856
    %1858 = vmatmul.bf16.gmra.mxu0 %v1546
    %v1859 = vpop.f32.mrf.mxu0
    %v1860 = vadd.f32 %v1011, %v1859
    %v1861 = vpop.f32.mrf.mxu0
    %v1862 = vadd.f32 %v1013, %v1861
    %1863 = vmatmul.bf16.gmra.mxu0 %v1549
    %v1864 = vpop.f32.mrf.mxu0
    %v1865 = vadd.f32 %v1016, %v1864
    %v1866 = vpop.f32.mrf.mxu0
    %v1867 = vadd.f32 %v1018, %v1866
    %1868 = vmatmul.bf16.gmra.mxu0 %v1552
    %v1869 = vpop.f32.mrf.mxu0
    %v1870 = vadd.f32 %v1021, %v1869
    %v1871 = vpop.f32.mrf.mxu0
    %v1872 = vadd.f32 %v1023, %v1871
    %1873 = vmatmul.bf16.gmra.mxu0 %v1555
    %v1874 = vpop.f32.mrf.mxu0
    %v1875 = vadd.f32 %v1026, %v1874
    %v1876 = vpop.f32.mrf.mxu0
    %v1877 = vadd.f32 %v1028, %v1876
    %1878 = vmatmul.bf16.gmra.mxu0 %v1558
    %v1879 = vpop.f32.mrf.mxu0
    %v1880 = vadd.f32 %v1031, %v1879
    %v1881 = vpop.f32.mrf.mxu0
    %v1882 = vadd.f32 %v1033, %v1881
    %1883 = vmatmul.bf16.gmra.mxu0 %v1561
    %v1884 = vpop.f32.mrf.mxu0
    %v1885 = vadd.f32 %v1036, %v1884
    %v1886 = vpop.f32.mrf.mxu0
    %v1887 = vadd.f32 %v1038, %v1886
    %1888 = vmatmul.bf16.gmra.mxu0 %v1564
    %v1889 = vpop.f32.mrf.mxu0
    %v1890 = vadd.f32 %v1041, %v1889
    %v1891 = vpop.f32.mrf.mxu0
    %v1892 = vadd.f32 %v1043, %v1891
    %1893 = vmatmul.bf16.gmra.mxu0 %v1567
    %v1894 = vpop.f32.mrf.mxu0
    %v1895 = vadd.f32 %v1046, %v1894
    %v1896 = vpop.f32.mrf.mxu0
    %v1897 = vadd.f32 %v1048, %v1896
    %1898 = vmatmul.bf16.gmra.mxu0 %v1570
    %v1899 = vpop.f32.mrf.mxu0
    %v1900 = vadd.f32 %v1051, %v1899
    %v1901 = vpop.f32.mrf.mxu0
    %v1902 = vadd.f32 %v1053, %v1901
    %1903 = vmatmul.bf16.gmra.mxu0 %v1573
    %v1904 = vpop.f32.mrf.mxu0
    %v1905 = vadd.f32 %v1056, %v1904
    %v1906 = vpop.f32.mrf.mxu0
    %v1907 = vadd.f32 %v1058, %v1906
    %1908 = vmatmul.bf16.gmra.mxu0 %v1576
    %v1909 = vpop.f32.mrf.mxu0
    %v1910 = vadd.f32 %v1061, %v1909
    %v1911 = vpop.f32.mrf.mxu0
    %v1912 = vadd.f32 %v1063, %v1911
    %1913 = vdwg.mxu0
    %v1914 = vld [vmem:[#allocation3] sm:$0xf]
    %1915 = vxpose.binary.xlu0.c.b16.start [1/16] %v266, %v265, 128
    %1916 = vxpose.binary.xlu0.c.b16.cont [2/16] 0, 0, 128
    %1917 = vxpose.binary.xlu0.c.b16.cont [3/16] 0, 0, 128
    %1918 = vxpose.binary.xlu0.c.b16.cont [4/16] 0, 0, 128
    %1919 = vxpose.binary.xlu0.c.b16.cont [5/16] 0, 0, 128
    %1920 = vxpose.binary.xlu0.c.b16.cont [6/16] 0, 0, 128
    %1921 = vxpose.binary.xlu0.c.b16.cont [7/16] 0, 0, 128
    %1922 = vxpose.binary.xlu0.c.b16.end [8/16] 0, 0, 128
    %v1923 = vpop.trf.xlu0
    %v1924 = vpop.trf.xlu0
    %v1925 = vpop.trf.xlu0
    %v1926 = vpop.trf.xlu0
    %v1927 = vpop.trf.xlu0
    %v1928 = vpop.trf.xlu0
    %v1929 = vpop.trf.xlu0
    %v1930 = vpop.trf.xlu0
    %v1931 = vpop.trf.xlu0
    %v1932 = vpop.trf.xlu0
    %v1933 = vpop.trf.xlu0
    %v1934 = vpop.trf.xlu0
    %v1935 = vpop.trf.xlu0
    %v1936 = vpop.trf.xlu0
    %v1937 = vpop.trf.xlu0
    %v1938 = vpop.trf.xlu0
    %1939 = vxpose.binary.xlu0.c.b16.start [1/16] %v268, %v267, 128
    %1940 = vxpose.binary.xlu0.c.b16.cont [2/16] 0, 0, 128
    %1941 = vxpose.binary.xlu0.c.b16.cont [3/16] 0, 0, 128
    %1942 = vxpose.binary.xlu0.c.b16.cont [4/16] 0, 0, 128
    %1943 = vxpose.binary.xlu0.c.b16.cont [5/16] 0, 0, 128
    %1944 = vxpose.binary.xlu0.c.b16.cont [6/16] 0, 0, 128
    %1945 = vxpose.binary.xlu0.c.b16.cont [7/16] 0, 0, 128
    %1946 = vxpose.binary.xlu0.c.b16.end [8/16] 0, 0, 128
    %v1947 = vpop.trf.xlu0
    %v1948 = vpop.trf.xlu0
    %v1949 = vpop.trf.xlu0
    %v1950 = vpop.trf.xlu0
    %v1951 = vpop.trf.xlu0
    %v1952 = vpop.trf.xlu0
    %v1953 = vpop.trf.xlu0
    %v1954 = vpop.trf.xlu0
    %v1955 = vpop.trf.xlu0
    %v1956 = vpop.trf.xlu0
    %v1957 = vpop.trf.xlu0
    %v1958 = vpop.trf.xlu0
    %v1959 = vpop.trf.xlu0
    %v1960 = vpop.trf.xlu0
    %v1961 = vpop.trf.xlu0
    %v1962 = vpop.trf.xlu0
    %1963 = vxpose.binary.xlu0.c.b16.start [1/16] %v270, %v269, 128
    %1964 = vxpose.binary.xlu0.c.b16.cont [2/16] 0, 0, 128
    %1965 = vxpose.binary.xlu0.c.b16.cont [3/16] 0, 0, 128
    %1966 = vxpose.binary.xlu0.c.b16.cont [4/16] 0, 0, 128
    %1967 = vxpose.binary.xlu0.c.b16.cont [5/16] 0, 0, 128
    %1968 = vxpose.binary.xlu0.c.b16.cont [6/16] 0, 0, 128
    %1969 = vxpose.binary.xlu0.c.b16.cont [7/16] 0, 0, 128
    %1970 = vxpose.binary.xlu0.c.b16.end [8/16] 0, 0, 128
    %v1971 = vpop.trf.xlu0
    %v1972 = vpop.trf.xlu0
    %v1973 = vpop.trf.xlu0
    %v1974 = vpop.trf.xlu0
    %v1975 = vpop.trf.xlu0
    %v1976 = vpop.trf.xlu0
    %v1977 = vpop.trf.xlu0
    %v1978 = vpop.trf.xlu0
    %v1979 = vpop.trf.xlu0
    %v1980 = vpop.trf.xlu0
    %v1981 = vpop.trf.xlu0
    %v1982 = vpop.trf.xlu0
    %v1983 = vpop.trf.xlu0
    %v1984 = vpop.trf.xlu0
    %v1985 = vpop.trf.xlu0
    %v1986 = vpop.trf.xlu0
    %1987 = vxpose.binary.xlu0.c.b16.start [1/16] %v272, %v271, 128
    %1988 = vxpose.binary.xlu0.c.b16.cont [2/16] 0, 0, 128
    %1989 = vxpose.binary.xlu0.c.b16.cont [3/16] 0, 0, 128
    %1990 = vxpose.binary.xlu0.c.b16.cont [4/16] 0, 0, 128
    %1991 = vxpose.binary.xlu0.c.b16.cont [5/16] 0, 0, 128
    %1992 = vxpose.binary.xlu0.c.b16.cont [6/16] 0, 0, 128
    %1993 = vxpose.binary.xlu0.c.b16.cont [7/16] 0, 0, 128
    %1994 = vxpose.binary.xlu0.c.b16.end [8/16] 0, 0, 128
    %v1995 = vpop.trf.xlu0
    %v1996 = vpop.trf.xlu0
    %v1997 = vpop.trf.xlu0
    %v1998 = vpop.trf.xlu0
    %v1999 = vpop.trf.xlu0
    %v2000 = vpop.trf.xlu0
    %v2001 = vpop.trf.xlu0
    %v2002 = vpop.trf.xlu0
    %v2003 = vpop.trf.xlu0
    %v2004 = vpop.trf.xlu0
    %v2005 = vpop.trf.xlu0
    %v2006 = vpop.trf.xlu0
    %v2007 = vpop.trf.xlu0
    %v2008 = vpop.trf.xlu0
    %v2009 = vpop.trf.xlu0
    %v2010 = vpop.trf.xlu0
    %v2012 = vsel %vm539, %v1923, 0
    %v2015 = vsel %vm539, %v1925, 0
    %v2018 = vsel %vm539, %v1927, 0
    %v2021 = vsel %vm539, %v1929, 0
    %v2024 = vsel %vm539, %v1931, 0
    %v2027 = vsel %vm539, %v1933, 0
    %v2030 = vsel %vm539, %v1935, 0
    %v2033 = vsel %vm539, %v1937, 0
    %v2036 = vsel %vm539, %v1924, 0
    %v2039 = vsel %vm539, %v1926, 0
    %v2042 = vsel %vm539, %v1928, 0
    %v2045 = vsel %vm539, %v1930, 0
    %v2048 = vsel %vm539, %v1932, 0
    %v2051 = vsel %vm539, %v1934, 0
    %v2054 = vsel %vm539, %v1936, 0
    %v2057 = vsel %vm539, %v1938, 0
    %v2060 = vsel %vm539, %v1947, 0
    %v2063 = vsel %vm539, %v1949, 0
    %v2066 = vsel %vm539, %v1951, 0
    %v2069 = vsel %vm539, %v1953, 0
    %v2072 = vsel %vm539, %v1955, 0
    %v2075 = vsel %vm539, %v1957, 0
    %v2078 = vsel %vm539, %v1959, 0
    %v2081 = vsel %vm539, %v1961, 0
    %v2084 = vsel %vm539, %v1948, 0
    %v2087 = vsel %vm539, %v1950, 0
    %v2090 = vsel %vm539, %v1952, 0
    %v2093 = vsel %vm539, %v1954, 0
    %v2096 = vsel %vm539, %v1956, 0
    %v2099 = vsel %vm539, %v1958, 0
    %v2102 = vsel %vm539, %v1960, 0
    %v2105 = vsel %vm539, %v1962, 0
    %v2108 = vsel %vm539, %v1971, 0
    %v2111 = vsel %vm539, %v1973, 0
    %v2114 = vsel %vm539, %v1975, 0
    %v2117 = vsel %vm539, %v1977, 0
    %v2120 = vsel %vm539, %v1979, 0
    %v2123 = vsel %vm539, %v1981, 0
    %v2126 = vsel %vm539, %v1983, 0
    %v2129 = vsel %vm539, %v1985, 0
    %v2132 = vsel %vm539, %v1972, 0
    %v2135 = vsel %vm539, %v1974, 0
    %v2138 = vsel %vm539, %v1976, 0
    %v2141 = vsel %vm539, %v1978, 0
    %v2144 = vsel %vm539, %v1980, 0
    %v2147 = vsel %vm539, %v1982, 0
    %v2150 = vsel %vm539, %v1984, 0
    %v2153 = vsel %vm539, %v1986, 0
    %v2156 = vsel %vm539, %v1995, 0
    %v2159 = vsel %vm539, %v1997, 0
    %v2162 = vsel %vm539, %v1999, 0
    %v2165 = vsel %vm539, %v2001, 0
    %v2168 = vsel %vm539, %v2003, 0
    %v2171 = vsel %vm539, %v2005, 0
    %v2174 = vsel %vm539, %v2007, 0
    %v2177 = vsel %vm539, %v2009, 0
    %v2180 = vsel %vm539, %v1996, 0
    %v2183 = vsel %vm539, %v1998, 0
    %v2186 = vsel %vm539, %v2000, 0
    %v2189 = vsel %vm539, %v2002, 0
    %v2192 = vsel %vm539, %v2004, 0
    %v2195 = vsel %vm539, %v2006, 0
    %v2198 = vsel %vm539, %v2008, 0
    %v2201 = vsel %vm539, %v2010, 0
    %v2204 = vsel %vm732, %v1914, 0
    %2206 = vmatpush.bf16.msra.mxu0 0
    %2207 = vmatpush.bf16.msra.mxu0 0
    %2208 = vmatpush.bf16.msra.mxu0 0
    %2209 = vmatpush.bf16.msra.mxu0 0
    %2210 = vmatpush.bf16.msra.mxu0 0
    %2211 = vmatpush.bf16.msra.mxu0 0
    %2212 = vmatpush.bf16.msra.mxu0 0
    %2213 = vmatpush.bf16.msra.mxu0 %v2204
    %2214 = vmatmul.bf16.gmra.mxu0 %v2012
    %v2215 = vpop.f32.mrf.mxu0
    %v2216 = vadd.f32 0.0, %v2215
    %v2217 = vpop.f32.mrf.mxu0
    %v2218 = vadd.f32 0.0, %v2217
    %2219 = vmatmul.bf16.gmra.mxu0 %v2015
    %v2220 = vpop.f32.mrf.mxu0
    %v2221 = vadd.f32 0.0, %v2220
    %v2222 = vpop.f32.mrf.mxu0
    %v2223 = vadd.f32 0.0, %v2222
    %2224 = vmatmul.bf16.gmra.mxu0 %v2018
    %v2225 = vpop.f32.mrf.mxu0
    %v2226 = vadd.f32 0.0, %v2225
    %v2227 = vpop.f32.mrf.mxu0
    %v2228 = vadd.f32 0.0, %v2227
    %2229 = vmatmul.bf16.gmra.mxu0 %v2021
    %v2230 = vpop.f32.mrf.mxu0
    %v2231 = vadd.f32 0.0, %v2230
    %v2232 = vpop.f32.mrf.mxu0
    %v2233 = vadd.f32 0.0, %v2232
    %2234 = vmatmul.bf16.gmra.mxu0 %v2024
    %v2235 = vpop.f32.mrf.mxu0
    %v2236 = vadd.f32 0.0, %v2235
    %v2237 = vpop.f32.mrf.mxu0
    %v2238 = vadd.f32 0.0, %v2237
    %2239 = vmatmul.bf16.gmra.mxu0 %v2027
    %v2240 = vpop.f32.mrf.mxu0
    %v2241 = vadd.f32 0.0, %v2240
    %v2242 = vpop.f32.mrf.mxu0
    %v2243 = vadd.f32 0.0, %v2242
    %2244 = vmatmul.bf16.gmra.mxu0 %v2030
    %v2245 = vpop.f32.mrf.mxu0
    %v2246 = vadd.f32 0.0, %v2245
    %v2247 = vpop.f32.mrf.mxu0
    %v2248 = vadd.f32 0.0, %v2247
    %2249 = vmatmul.bf16.gmra.mxu0 %v2033
    %v2250 = vpop.f32.mrf.mxu0
    %v2251 = vadd.f32 0.0, %v2250
    %v2252 = vpop.f32.mrf.mxu0
    %v2253 = vadd.f32 0.0, %v2252
    %2254 = vmatmul.bf16.gmra.mxu0 %v2036
    %v2255 = vpop.f32.mrf.mxu0
    %v2256 = vadd.f32 0.0, %v2255
    %v2257 = vpop.f32.mrf.mxu0
    %v2258 = vadd.f32 0.0, %v2257
    %2259 = vmatmul.bf16.gmra.mxu0 %v2039
    %v2260 = vpop.f32.mrf.mxu0
    %v2261 = vadd.f32 0.0, %v2260
    %v2262 = vpop.f32.mrf.mxu0
    %v2263 = vadd.f32 0.0, %v2262
    %2264 = vmatmul.bf16.gmra.mxu0 %v2042
    %v2265 = vpop.f32.mrf.mxu0
    %v2266 = vadd.f32 0.0, %v2265
    %v2267 = vpop.f32.mrf.mxu0
    %v2268 = vadd.f32 0.0, %v2267
    %2269 = vmatmul.bf16.gmra.mxu0 %v2045
    %v2270 = vpop.f32.mrf.mxu0
    %v2271 = vadd.f32 0.0, %v2270
    %v2272 = vpop.f32.mrf.mxu0
    %v2273 = vadd.f32 0.0, %v2272
    %2274 = vmatmul.bf16.gmra.mxu0 %v2048
    %v2275 = vpop.f32.mrf.mxu0
    %v2276 = vadd.f32 0.0, %v2275
    %v2277 = vpop.f32.mrf.mxu0
    %v2278 = vadd.f32 0.0, %v2277
    %2279 = vmatmul.bf16.gmra.mxu0 %v2051
    %v2280 = vpop.f32.mrf.mxu0
    %v2281 = vadd.f32 0.0, %v2280
    %v2282 = vpop.f32.mrf.mxu0
    %v2283 = vadd.f32 0.0, %v2282
    %2284 = vmatmul.bf16.gmra.mxu0 %v2054
    %v2285 = vpop.f32.mrf.mxu0
    %v2286 = vadd.f32 0.0, %v2285
    %v2287 = vpop.f32.mrf.mxu0
    %v2288 = vadd.f32 0.0, %v2287
    %2289 = vmatmul.bf16.gmra.mxu0 %v2057
    %v2290 = vpop.f32.mrf.mxu0
    %v2291 = vadd.f32 0.0, %v2290
    %v2292 = vpop.f32.mrf.mxu0
    %v2293 = vadd.f32 0.0, %v2292
    %2294 = vmatmul.bf16.gmra.mxu0 %v2060
    %v2295 = vpop.f32.mrf.mxu0
    %v2296 = vadd.f32 0.0, %v2295
    %v2297 = vpop.f32.mrf.mxu0
    %v2298 = vadd.f32 0.0, %v2297
    %2299 = vmatmul.bf16.gmra.mxu0 %v2063
    %v2300 = vpop.f32.mrf.mxu0
    %v2301 = vadd.f32 0.0, %v2300
    %v2302 = vpop.f32.mrf.mxu0
    %v2303 = vadd.f32 0.0, %v2302
    %2304 = vmatmul.bf16.gmra.mxu0 %v2066
    %v2305 = vpop.f32.mrf.mxu0
    %v2306 = vadd.f32 0.0, %v2305
    %v2307 = vpop.f32.mrf.mxu0
    %v2308 = vadd.f32 0.0, %v2307
    %2309 = vmatmul.bf16.gmra.mxu0 %v2069
    %v2310 = vpop.f32.mrf.mxu0
    %v2311 = vadd.f32 0.0, %v2310
    %v2312 = vpop.f32.mrf.mxu0
    %v2313 = vadd.f32 0.0, %v2312
    %2314 = vmatmul.bf16.gmra.mxu0 %v2072
    %v2315 = vpop.f32.mrf.mxu0
    %v2316 = vadd.f32 0.0, %v2315
    %v2317 = vpop.f32.mrf.mxu0
    %v2318 = vadd.f32 0.0, %v2317
    %2319 = vmatmul.bf16.gmra.mxu0 %v2075
    %v2320 = vpop.f32.mrf.mxu0
    %v2321 = vadd.f32 0.0, %v2320
    %v2322 = vpop.f32.mrf.mxu0
    %v2323 = vadd.f32 0.0, %v2322
    %2324 = vmatmul.bf16.gmra.mxu0 %v2078
    %v2325 = vpop.f32.mrf.mxu0
    %v2326 = vadd.f32 0.0, %v2325
    %v2327 = vpop.f32.mrf.mxu0
    %v2328 = vadd.f32 0.0, %v2327
    %2329 = vmatmul.bf16.gmra.mxu0 %v2081
    %v2330 = vpop.f32.mrf.mxu0
    %v2331 = vadd.f32 0.0, %v2330
    %v2332 = vpop.f32.mrf.mxu0
    %v2333 = vadd.f32 0.0, %v2332
    %2334 = vmatmul.bf16.gmra.mxu0 %v2084
    %v2335 = vpop.f32.mrf.mxu0
    %v2336 = vadd.f32 0.0, %v2335
    %v2337 = vpop.f32.mrf.mxu0
    %v2338 = vadd.f32 0.0, %v2337
    %2339 = vmatmul.bf16.gmra.mxu0 %v2087
    %v2340 = vpop.f32.mrf.mxu0
    %v2341 = vadd.f32 0.0, %v2340
    %v2342 = vpop.f32.mrf.mxu0
    %v2343 = vadd.f32 0.0, %v2342
    %2344 = vmatmul.bf16.gmra.mxu0 %v2090
    %v2345 = vpop.f32.mrf.mxu0
    %v2346 = vadd.f32 0.0, %v2345
    %v2347 = vpop.f32.mrf.mxu0
    %v2348 = vadd.f32 0.0, %v2347
    %2349 = vmatmul.bf16.gmra.mxu0 %v2093
    %v2350 = vpop.f32.mrf.mxu0
    %v2351 = vadd.f32 0.0, %v2350
    %v2352 = vpop.f32.mrf.mxu0
    %v2353 = vadd.f32 0.0, %v2352
    %2354 = vmatmul.bf16.gmra.mxu0 %v2096
    %v2355 = vpop.f32.mrf.mxu0
    %v2356 = vadd.f32 0.0, %v2355
    %v2357 = vpop.f32.mrf.mxu0
    %v2358 = vadd.f32 0.0, %v2357
    %2359 = vmatmul.bf16.gmra.mxu0 %v2099
    %v2360 = vpop.f32.mrf.mxu0
    %v2361 = vadd.f32 0.0, %v2360
    %v2362 = vpop.f32.mrf.mxu0
    %v2363 = vadd.f32 0.0, %v2362
    %2364 = vmatmul.bf16.gmra.mxu0 %v2102
    %v2365 = vpop.f32.mrf.mxu0
    %v2366 = vadd.f32 0.0, %v2365
    %v2367 = vpop.f32.mrf.mxu0
    %v2368 = vadd.f32 0.0, %v2367
    %2369 = vmatmul.bf16.gmra.mxu0 %v2105
    %v2370 = vpop.f32.mrf.mxu0
    %v2371 = vadd.f32 0.0, %v2370
    %v2372 = vpop.f32.mrf.mxu0
    %v2373 = vadd.f32 0.0, %v2372
    %2374 = vmatmul.bf16.gmra.mxu0 %v2108
    %v2375 = vpop.f32.mrf.mxu0
    %v2376 = vadd.f32 0.0, %v2375
    %v2377 = vpop.f32.mrf.mxu0
    %v2378 = vadd.f32 0.0, %v2377
    %2379 = vmatmul.bf16.gmra.mxu0 %v2111
    %v2380 = vpop.f32.mrf.mxu0
    %v2381 = vadd.f32 0.0, %v2380
    %v2382 = vpop.f32.mrf.mxu0
    %v2383 = vadd.f32 0.0, %v2382
    %2384 = vmatmul.bf16.gmra.mxu0 %v2114
    %v2385 = vpop.f32.mrf.mxu0
    %v2386 = vadd.f32 0.0, %v2385
    %v2387 = vpop.f32.mrf.mxu0
    %v2388 = vadd.f32 0.0, %v2387
    %2389 = vmatmul.bf16.gmra.mxu0 %v2117
    %v2390 = vpop.f32.mrf.mxu0
    %v2391 = vadd.f32 0.0, %v2390
    %v2392 = vpop.f32.mrf.mxu0
    %v2393 = vadd.f32 0.0, %v2392
    %2394 = vmatmul.bf16.gmra.mxu0 %v2120
    %v2395 = vpop.f32.mrf.mxu0
    %v2396 = vadd.f32 0.0, %v2395
    %v2397 = vpop.f32.mrf.mxu0
    %v2398 = vadd.f32 0.0, %v2397
    %2399 = vmatmul.bf16.gmra.mxu0 %v2123
    %v2400 = vpop.f32.mrf.mxu0
    %v2401 = vadd.f32 0.0, %v2400
    %v2402 = vpop.f32.mrf.mxu0
    %v2403 = vadd.f32 0.0, %v2402
    %2404 = vmatmul.bf16.gmra.mxu0 %v2126
    %v2405 = vpop.f32.mrf.mxu0
    %v2406 = vadd.f32 0.0, %v2405
    %v2407 = vpop.f32.mrf.mxu0
    %v2408 = vadd.f32 0.0, %v2407
    %2409 = vmatmul.bf16.gmra.mxu0 %v2129
    %v2410 = vpop.f32.mrf.mxu0
    %v2411 = vadd.f32 0.0, %v2410
    %v2412 = vpop.f32.mrf.mxu0
    %v2413 = vadd.f32 0.0, %v2412
    %2414 = vmatmul.bf16.gmra.mxu0 %v2132
    %v2415 = vpop.f32.mrf.mxu0
    %v2416 = vadd.f32 0.0, %v2415
    %v2417 = vpop.f32.mrf.mxu0
    %v2418 = vadd.f32 0.0, %v2417
    %2419 = vmatmul.bf16.gmra.mxu0 %v2135
    %v2420 = vpop.f32.mrf.mxu0
    %v2421 = vadd.f32 0.0, %v2420
    %v2422 = vpop.f32.mrf.mxu0
    %v2423 = vadd.f32 0.0, %v2422
    %2424 = vmatmul.bf16.gmra.mxu0 %v2138
    %v2425 = vpop.f32.mrf.mxu0
    %v2426 = vadd.f32 0.0, %v2425
    %v2427 = vpop.f32.mrf.mxu0
    %v2428 = vadd.f32 0.0, %v2427
    %2429 = vmatmul.bf16.gmra.mxu0 %v2141
    %v2430 = vpop.f32.mrf.mxu0
    %v2431 = vadd.f32 0.0, %v2430
    %v2432 = vpop.f32.mrf.mxu0
    %v2433 = vadd.f32 0.0, %v2432
    %2434 = vmatmul.bf16.gmra.mxu0 %v2144
    %v2435 = vpop.f32.mrf.mxu0
    %v2436 = vadd.f32 0.0, %v2435
    %v2437 = vpop.f32.mrf.mxu0
    %v2438 = vadd.f32 0.0, %v2437
    %2439 = vmatmul.bf16.gmra.mxu0 %v2147
    %v2440 = vpop.f32.mrf.mxu0
    %v2441 = vadd.f32 0.0, %v2440
    %v2442 = vpop.f32.mrf.mxu0
    %v2443 = vadd.f32 0.0, %v2442
    %2444 = vmatmul.bf16.gmra.mxu0 %v2150
    %v2445 = vpop.f32.mrf.mxu0
    %v2446 = vadd.f32 0.0, %v2445
    %v2447 = vpop.f32.mrf.mxu0
    %v2448 = vadd.f32 0.0, %v2447
    %2449 = vmatmul.bf16.gmra.mxu0 %v2153
    %v2450 = vpop.f32.mrf.mxu0
    %v2451 = vadd.f32 0.0, %v2450
    %v2452 = vpop.f32.mrf.mxu0
    %v2453 = vadd.f32 0.0, %v2452
    %2454 = vmatmul.bf16.gmra.mxu0 %v2156
    %v2455 = vpop.f32.mrf.mxu0
    %v2456 = vadd.f32 0.0, %v2455
    %v2457 = vpop.f32.mrf.mxu0
    %v2458 = vadd.f32 0.0, %v2457
    %2459 = vmatmul.bf16.gmra.mxu0 %v2159
    %v2460 = vpop.f32.mrf.mxu0
    %v2461 = vadd.f32 0.0, %v2460
    %v2462 = vpop.f32.mrf.mxu0
    %v2463 = vadd.f32 0.0, %v2462
    %2464 = vmatmul.bf16.gmra.mxu0 %v2162
    %v2465 = vpop.f32.mrf.mxu0
    %v2466 = vadd.f32 0.0, %v2465
    %v2467 = vpop.f32.mrf.mxu0
    %v2468 = vadd.f32 0.0, %v2467
    %2469 = vmatmul.bf16.gmra.mxu0 %v2165
    %v2470 = vpop.f32.mrf.mxu0
    %v2471 = vadd.f32 0.0, %v2470
    %v2472 = vpop.f32.mrf.mxu0
    %v2473 = vadd.f32 0.0, %v2472
    %2474 = vmatmul.bf16.gmra.mxu0 %v2168
    %v2475 = vpop.f32.mrf.mxu0
    %v2476 = vadd.f32 0.0, %v2475
    %v2477 = vpop.f32.mrf.mxu0
    %v2478 = vadd.f32 0.0, %v2477
    %2479 = vmatmul.bf16.gmra.mxu0 %v2171
    %v2480 = vpop.f32.mrf.mxu0
    %v2481 = vadd.f32 0.0, %v2480
    %v2482 = vpop.f32.mrf.mxu0
    %v2483 = vadd.f32 0.0, %v2482
    %2484 = vmatmul.bf16.gmra.mxu0 %v2174
    %v2485 = vpop.f32.mrf.mxu0
    %v2486 = vadd.f32 0.0, %v2485
    %v2487 = vpop.f32.mrf.mxu0
    %v2488 = vadd.f32 0.0, %v2487
    %2489 = vmatmul.bf16.gmra.mxu0 %v2177
    %v2490 = vpop.f32.mrf.mxu0
    %v2491 = vadd.f32 0.0, %v2490
    %v2492 = vpop.f32.mrf.mxu0
    %v2493 = vadd.f32 0.0, %v2492
    %2494 = vmatmul.bf16.gmra.mxu0 %v2180
    %v2495 = vpop.f32.mrf.mxu0
    %v2496 = vadd.f32 0.0, %v2495
    %v2497 = vpop.f32.mrf.mxu0
    %v2498 = vadd.f32 0.0, %v2497
    %2499 = vmatmul.bf16.gmra.mxu0 %v2183
    %v2500 = vpop.f32.mrf.mxu0
    %v2501 = vadd.f32 0.0, %v2500
    %v2502 = vpop.f32.mrf.mxu0
    %v2503 = vadd.f32 0.0, %v2502
    %2504 = vmatmul.bf16.gmra.mxu0 %v2186
    %v2505 = vpop.f32.mrf.mxu0
    %v2506 = vadd.f32 0.0, %v2505
    %v2507 = vpop.f32.mrf.mxu0
    %v2508 = vadd.f32 0.0, %v2507
    %2509 = vmatmul.bf16.gmra.mxu0 %v2189
    %v2510 = vpop.f32.mrf.mxu0
    %v2511 = vadd.f32 0.0, %v2510
    %v2512 = vpop.f32.mrf.mxu0
    %v2513 = vadd.f32 0.0, %v2512
    %2514 = vmatmul.bf16.gmra.mxu0 %v2192
    %v2515 = vpop.f32.mrf.mxu0
    %v2516 = vadd.f32 0.0, %v2515
    %v2517 = vpop.f32.mrf.mxu0
    %v2518 = vadd.f32 0.0, %v2517
    %2519 = vmatmul.bf16.gmra.mxu0 %v2195
    %v2520 = vpop.f32.mrf.mxu0
    %v2521 = vadd.f32 0.0, %v2520
    %v2522 = vpop.f32.mrf.mxu0
    %v2523 = vadd.f32 0.0, %v2522
    %2524 = vmatmul.bf16.gmra.mxu0 %v2198
    %v2525 = vpop.f32.mrf.mxu0
    %v2526 = vadd.f32 0.0, %v2525
    %v2527 = vpop.f32.mrf.mxu0
    %v2528 = vadd.f32 0.0, %v2527
    %2529 = vmatmul.bf16.gmra.mxu0 %v2201
    %v2530 = vpop.f32.mrf.mxu0
    %v2531 = vadd.f32 0.0, %v2530
    %v2532 = vpop.f32.mrf.mxu0
    %v2533 = vadd.f32 0.0, %v2532
    %2534 = vdwg.mxu0
    %v2535 = vadd.f32 %v1595, %v2216
    %v2536 = vadd.f32 %v1597, %v2218
    %v2537 = vadd.f32 %v1600, %v2221
    %v2538 = vadd.f32 %v1602, %v2223
    %v2539 = vadd.f32 %v1605, %v2226
    %v2540 = vadd.f32 %v1607, %v2228
    %v2541 = vadd.f32 %v1610, %v2231
    %v2542 = vadd.f32 %v1612, %v2233
    %v2543 = vadd.f32 %v1615, %v2236
    %v2544 = vadd.f32 %v1617, %v2238
    %v2545 = vadd.f32 %v1620, %v2241
    %v2546 = vadd.f32 %v1622, %v2243
    %v2547 = vadd.f32 %v1625, %v2246
    %v2548 = vadd.f32 %v1627, %v2248
    %v2549 = vadd.f32 %v1630, %v2251
    %v2550 = vadd.f32 %v1632, %v2253
    %v2551 = vadd.f32 %v1635, %v2256
    %v2552 = vadd.f32 %v1637, %v2258
    %v2553 = vadd.f32 %v1640, %v2261
    %v2554 = vadd.f32 %v1642, %v2263
    %v2555 = vadd.f32 %v1645, %v2266
    %v2556 = vadd.f32 %v1647, %v2268
    %v2557 = vadd.f32 %v1650, %v2271
    %v2558 = vadd.f32 %v1652, %v2273
    %v2559 = vadd.f32 %v1655, %v2276
    %v2560 = vadd.f32 %v1657, %v2278
    %v2561 = vadd.f32 %v1660, %v2281
    %v2562 = vadd.f32 %v1662, %v2283
    %v2563 = vadd.f32 %v1665, %v2286
    %v2564 = vadd.f32 %v1667, %v2288
    %v2565 = vadd.f32 %v1670, %v2291
    %v2566 = vadd.f32 %v1672, %v2293
    %v2567 = vadd.f32 %v1675, %v2296
    %v2568 = vadd.f32 %v1677, %v2298
    %v2569 = vadd.f32 %v1680, %v2301
    %v2570 = vadd.f32 %v1682, %v2303
    %v2571 = vadd.f32 %v1685, %v2306
    %v2572 = vadd.f32 %v1687, %v2308
    %v2573 = vadd.f32 %v1690, %v2311
    %v2574 = vadd.f32 %v1692, %v2313
    %v2575 = vadd.f32 %v1695, %v2316
    %v2576 = vadd.f32 %v1697, %v2318
    %v2577 = vadd.f32 %v1700, %v2321
    %v2578 = vadd.f32 %v1702, %v2323
    %v2579 = vadd.f32 %v1705, %v2326
    %v2580 = vadd.f32 %v1707, %v2328
    %v2581 = vadd.f32 %v1710, %v2331
    %v2582 = vadd.f32 %v1712, %v2333
    %v2583 = vadd.f32 %v1715, %v2336
    %v2584 = vadd.f32 %v1717, %v2338
    %v2585 = vadd.f32 %v1720, %v2341
    %v2586 = vadd.f32 %v1722, %v2343
    %v2587 = vadd.f32 %v1725, %v2346
    %v2588 = vadd.f32 %v1727, %v2348
    %v2589 = vadd.f32 %v1730, %v2351
    %v2590 = vadd.f32 %v1732, %v2353
    %v2591 = vadd.f32 %v1735, %v2356
    %v2592 = vadd.f32 %v1737, %v2358
    %v2593 = vadd.f32 %v1740, %v2361
    %v2594 = vadd.f32 %v1742, %v2363
    %v2595 = vadd.f32 %v1745, %v2366
    %v2596 = vadd.f32 %v1747, %v2368
    %v2597 = vadd.f32 %v1750, %v2371
    %v2598 = vadd.f32 %v1752, %v2373
    %v2599 = vadd.f32 %v1755, %v2376
    %v2600 = vadd.f32 %v1757, %v2378
    %v2601 = vadd.f32 %v1760, %v2381
    %v2602 = vadd.f32 %v1762, %v2383
    %v2603 = vadd.f32 %v1765, %v2386
    %v2604 = vadd.f32 %v1767, %v2388
    %v2605 = vadd.f32 %v1770, %v2391
    %v2606 = vadd.f32 %v1772, %v2393
    %v2607 = vadd.f32 %v1775, %v2396
    %v2608 = vadd.f32 %v1777, %v2398
    %v2609 = vadd.f32 %v1780, %v2401
    %v2610 = vadd.f32 %v1782, %v2403
    %v2611 = vadd.f32 %v1785, %v2406
    %v2612 = vadd.f32 %v1787, %v2408
    %v2613 = vadd.f32 %v1790, %v2411
    %v2614 = vadd.f32 %v1792, %v2413
    %v2615 = vadd.f32 %v1795, %v2416
    %v2616 = vadd.f32 %v1797, %v2418
    %v2617 = vadd.f32 %v1800, %v2421
    %v2618 = vadd.f32 %v1802, %v2423
    %v2619 = vadd.f32 %v1805, %v2426
    %v2620 = vadd.f32 %v1807, %v2428
    %v2621 = vadd.f32 %v1810, %v2431
    %v2622 = vadd.f32 %v1812, %v2433
    %v2623 = vadd.f32 %v1815, %v2436
    %v2624 = vadd.f32 %v1817, %v2438
    %v2625 = vadd.f32 %v1820, %v2441
    %v2626 = vadd.f32 %v1822, %v2443
    %v2627 = vadd.f32 %v1825, %v2446
    %v2628 = vadd.f32 %v1827, %v2448
    %v2629 = vadd.f32 %v1830, %v2451
    %v2630 = vadd.f32 %v1832, %v2453
    %v2631 = vadd.f32 %v1835, %v2456
    %v2632 = vadd.f32 %v1837, %v2458
    %v2633 = vadd.f32 %v1840, %v2461
    %v2634 = vadd.f32 %v1842, %v2463
    %v2635 = vadd.f32 %v1845, %v2466
    %v2636 = vadd.f32 %v1847, %v2468
    %v2637 = vadd.f32 %v1850, %v2471
    %v2638 = vadd.f32 %v1852, %v2473
    %v2639 = vadd.f32 %v1855, %v2476
    %v2640 = vadd.f32 %v1857, %v2478
    %v2641 = vadd.f32 %v1860, %v2481
    %v2642 = vadd.f32 %v1862, %v2483
    %v2643 = vadd.f32 %v1865, %v2486
    %v2644 = vadd.f32 %v1867, %v2488
    %v2645 = vadd.f32 %v1870, %v2491
    %v2646 = vadd.f32 %v1872, %v2493
    %v2647 = vadd.f32 %v1875, %v2496
    %v2648 = vadd.f32 %v1877, %v2498
    %v2649 = vadd.f32 %v1880, %v2501
    %v2650 = vadd.f32 %v1882, %v2503
    %v2651 = vadd.f32 %v1885, %v2506
    %v2652 = vadd.f32 %v1887, %v2508
    %v2653 = vadd.f32 %v1890, %v2511
    %v2654 = vadd.f32 %v1892, %v2513
    %v2655 = vadd.f32 %v1895, %v2516
    %v2656 = vadd.f32 %v1897, %v2518
    %v2657 = vadd.f32 %v1900, %v2521
    %v2658 = vadd.f32 %v1902, %v2523
    %v2659 = vadd.f32 %v1905, %v2526
    %v2660 = vadd.f32 %v1907, %v2528
    %v2661 = vadd.f32 %v1910, %v2531
    %v2662 = vadd.f32 %v1912, %v2533
    %v2663 = vld [vmem:[#allocation4] sm:$0x1]
    %2664 = vxpose.binary.xlu0.c.b16.start [1/16] %v306, %v305, 128
    %2665 = vxpose.binary.xlu0.c.b16.cont [2/16] 0, 0, 128
    %2666 = vxpose.binary.xlu0.c.b16.cont [3/16] 0, 0, 128
    %2667 = vxpose.binary.xlu0.c.b16.cont [4/16] 0, 0, 128
    %2668 = vxpose.binary.xlu0.c.b16.cont [5/16] 0, 0, 128
    %2669 = vxpose.binary.xlu0.c.b16.cont [6/16] 0, 0, 128
    %2670 = vxpose.binary.xlu0.c.b16.cont [7/16] 0, 0, 128
    %2671 = vxpose.binary.xlu0.c.b16.end [8/16] 0, 0, 128
    %v2672 = vpop.trf.xlu0
    %v2673 = vpop.trf.xlu0
    %v2674 = vpop.trf.xlu0
    %v2675 = vpop.trf.xlu0
    %v2676 = vpop.trf.xlu0
    %v2677 = vpop.trf.xlu0
    %v2678 = vpop.trf.xlu0
    %v2679 = vpop.trf.xlu0
    %v2680 = vpop.trf.xlu0
    %v2681 = vpop.trf.xlu0
    %v2682 = vpop.trf.xlu0
    %v2683 = vpop.trf.xlu0
    %v2684 = vpop.trf.xlu0
    %v2685 = vpop.trf.xlu0
    %v2686 = vpop.trf.xlu0
    %v2687 = vpop.trf.xlu0
    %2688 = vxpose.binary.xlu0.c.b16.start [1/16] %v308, %v307, 128
    %2689 = vxpose.binary.xlu0.c.b16.cont [2/16] 0, 0, 128
    %2690 = vxpose.binary.xlu0.c.b16.cont [3/16] 0, 0, 128
    %2691 = vxpose.binary.xlu0.c.b16.cont [4/16] 0, 0, 128
    %2692 = vxpose.binary.xlu0.c.b16.cont [5/16] 0, 0, 128
    %2693 = vxpose.binary.xlu0.c.b16.cont [6/16] 0, 0, 128
    %2694 = vxpose.binary.xlu0.c.b16.cont [7/16] 0, 0, 128
    %2695 = vxpose.binary.xlu0.c.b16.end [8/16] 0, 0, 128
    %v2696 = vpop.trf.xlu0
    %v2697 = vpop.trf.xlu0
    %v2698 = vpop.trf.xlu0
    %v2699 = vpop.trf.xlu0
    %v2700 = vpop.trf.xlu0
    %v2701 = vpop.trf.xlu0
    %v2702 = vpop.trf.xlu0
    %v2703 = vpop.trf.xlu0
    %v2704 = vpop.trf.xlu0
    %v2705 = vpop.trf.xlu0
    %v2706 = vpop.trf.xlu0
    %v2707 = vpop.trf.xlu0
    %v2708 = vpop.trf.xlu0
    %v2709 = vpop.trf.xlu0
    %v2710 = vpop.trf.xlu0
    %v2711 = vpop.trf.xlu0
    %2712 = vxpose.binary.xlu0.c.b16.start [1/16] %v310, %v309, 128
    %2713 = vxpose.binary.xlu0.c.b16.cont [2/16] 0, 0, 128
    %2714 = vxpose.binary.xlu0.c.b16.cont [3/16] 0, 0, 128
    %2715 = vxpose.binary.xlu0.c.b16.cont [4/16] 0, 0, 128
    %2716 = vxpose.binary.xlu0.c.b16.cont [5/16] 0, 0, 128
    %2717 = vxpose.binary.xlu0.c.b16.cont [6/16] 0, 0, 128
    %2718 = vxpose.binary.xlu0.c.b16.cont [7/16] 0, 0, 128
    %2719 = vxpose.binary.xlu0.c.b16.end [8/16] 0, 0, 128
    %v2720 = vpop.trf.xlu0
    %v2721 = vpop.trf.xlu0
    %v2722 = vpop.trf.xlu0
    %v2723 = vpop.trf.xlu0
    %v2724 = vpop.trf.xlu0
    %v2725 = vpop.trf.xlu0
    %v2726 = vpop.trf.xlu0
    %v2727 = vpop.trf.xlu0
    %v2728 = vpop.trf.xlu0
    %v2729 = vpop.trf.xlu0
    %v2730 = vpop.trf.xlu0
    %v2731 = vpop.trf.xlu0
    %v2732 = vpop.trf.xlu0
    %v2733 = vpop.trf.xlu0
    %v2734 = vpop.trf.xlu0
    %v2735 = vpop.trf.xlu0
    %2736 = vxpose.binary.xlu0.c.b16.start [1/16] %v312, %v311, 128
    %2737 = vxpose.binary.xlu0.c.b16.cont [2/16] 0, 0, 128
    %2738 = vxpose.binary.xlu0.c.b16.cont [3/16] 0, 0, 128
    %2739 = vxpose.binary.xlu0.c.b16.cont [4/16] 0, 0, 128
    %2740 = vxpose.binary.xlu0.c.b16.cont [5/16] 0, 0, 128
    %2741 = vxpose.binary.xlu0.c.b16.cont [6/16] 0, 0, 128
    %2742 = vxpose.binary.xlu0.c.b16.cont [7/16] 0, 0, 128
    %2743 = vxpose.binary.xlu0.c.b16.end [8/16] 0, 0, 128
    %v2744 = vpop.trf.xlu0
    %v2745 = vpop.trf.xlu0
    %v2746 = vpop.trf.xlu0
    %v2747 = vpop.trf.xlu0
    %v2748 = vpop.trf.xlu0
    %v2749 = vpop.trf.xlu0
    %v2750 = vpop.trf.xlu0
    %v2751 = vpop.trf.xlu0
    %v2752 = vpop.trf.xlu0
    %v2753 = vpop.trf.xlu0
    %v2754 = vpop.trf.xlu0
    %v2755 = vpop.trf.xlu0
    %v2756 = vpop.trf.xlu0
    %v2757 = vpop.trf.xlu0
    %v2758 = vpop.trf.xlu0
    %v2759 = vpop.trf.xlu0
    %vm2760 = vcmask 15360
    %v2762 = vsel %vm2760, %v2672, 0
    %v2765 = vsel %vm2760, %v2674, 0
    %v2768 = vsel %vm2760, %v2676, 0
    %v2771 = vsel %vm2760, %v2678, 0
    %v2774 = vsel %vm2760, %v2680, 0
    %v2777 = vsel %vm2760, %v2682, 0
    %v2780 = vsel %vm2760, %v2684, 0
    %v2783 = vsel %vm2760, %v2686, 0
    %v2786 = vsel %vm2760, %v2673, 0
    %v2789 = vsel %vm2760, %v2675, 0
    %v2792 = vsel %vm2760, %v2677, 0
    %v2795 = vsel %vm2760, %v2679, 0
    %v2798 = vsel %vm2760, %v2681, 0
    %v2801 = vsel %vm2760, %v2683, 0
    %v2804 = vsel %vm2760, %v2685, 0
    %v2807 = vsel %vm2760, %v2687, 0
    %v2810 = vsel %vm2760, %v2696, 0
    %v2813 = vsel %vm2760, %v2698, 0
    %v2816 = vsel %vm2760, %v2700, 0
    %v2819 = vsel %vm2760, %v2702, 0
    %v2822 = vsel %vm2760, %v2704, 0
    %v2825 = vsel %vm2760, %v2706, 0
    %v2828 = vsel %vm2760, %v2708, 0
    %v2831 = vsel %vm2760, %v2710, 0
    %v2834 = vsel %vm2760, %v2697, 0
    %v2837 = vsel %vm2760, %v2699, 0
    %v2840 = vsel %vm2760, %v2701, 0
    %v2843 = vsel %vm2760, %v2703, 0
    %v2846 = vsel %vm2760, %v2705, 0
    %v2849 = vsel %vm2760, %v2707, 0
    %v2852 = vsel %vm2760, %v2709, 0
    %v2855 = vsel %vm2760, %v2711, 0
    %v2858 = vsel %vm2760, %v2720, 0
    %v2861 = vsel %vm2760, %v2722, 0
    %v2864 = vsel %vm2760, %v2724, 0
    %v2867 = vsel %vm2760, %v2726, 0
    %v2870 = vsel %vm2760, %v2728, 0
    %v2873 = vsel %vm2760, %v2730, 0
    %v2876 = vsel %vm2760, %v2732, 0
    %v2879 = vsel %vm2760, %v2734, 0
    %v2882 = vsel %vm2760, %v2721, 0
    %v2885 = vsel %vm2760, %v2723, 0
    %v2888 = vsel %vm2760, %v2725, 0
    %v2891 = vsel %vm2760, %v2727, 0
    %v2894 = vsel %vm2760, %v2729, 0
    %v2897 = vsel %vm2760, %v2731, 0
    %v2900 = vsel %vm2760, %v2733, 0
    %v2903 = vsel %vm2760, %v2735, 0
    %v2906 = vsel %vm2760, %v2744, 0
    %v2909 = vsel %vm2760, %v2746, 0
    %v2912 = vsel %vm2760, %v2748, 0
    %v2915 = vsel %vm2760, %v2750, 0
    %v2918 = vsel %vm2760, %v2752, 0
    %v2921 = vsel %vm2760, %v2754, 0
    %v2924 = vsel %vm2760, %v2756, 0
    %v2927 = vsel %vm2760, %v2758, 0
    %v2930 = vsel %vm2760, %v2745, 0
    %v2933 = vsel %vm2760, %v2747, 0
    %v2936 = vsel %vm2760, %v2749, 0
    %v2939 = vsel %vm2760, %v2751, 0
    %v2942 = vsel %vm2760, %v2753, 0
    %v2945 = vsel %vm2760, %v2755, 0
    %v2948 = vsel %vm2760, %v2757, 0
    %v2951 = vsel %vm2760, %v2759, 0
    %vm2953 = vcmask 1040384
    %v2955 = vsel %vm2953, %v2663, 0
    %2957 = vmatpush.bf16.msra.mxu0 0
    %2958 = vmatpush.bf16.msra.mxu0 0
    %2959 = vmatpush.bf16.msra.mxu0 0
    %2960 = vmatpush.bf16.msra.mxu0 0
    %2961 = vmatpush.bf16.msra.mxu0 0
    %2962 = vmatpush.bf16.msra.mxu0 0
    %2963 = vmatpush.bf16.msra.mxu0 0
    %2964 = vmatpush.bf16.msra.mxu0 %v2955
    %2965 = vmatmul.bf16.gmra.mxu0 %v2762
    %v2966 = vpop.f32.mrf.mxu0
    %v2967 = vadd.f32 0.0, %v2966
    %v2968 = vpop.f32.mrf.mxu0
    %v2969 = vadd.f32 0.0, %v2968
    %2970 = vmatmul.bf16.gmra.mxu0 %v2765
    %v2971 = vpop.f32.mrf.mxu0
    %v2972 = vadd.f32 0.0, %v2971
    %v2973 = vpop.f32.mrf.mxu0
    %v2974 = vadd.f32 0.0, %v2973
    %2975 = vmatmul.bf16.gmra.mxu0 %v2768
    %v2976 = vpop.f32.mrf.mxu0
    %v2977 = vadd.f32 0.0, %v2976
    %v2978 = vpop.f32.mrf.mxu0
    %v2979 = vadd.f32 0.0, %v2978
    %2980 = vmatmul.bf16.gmra.mxu0 %v2771
    %v2981 = vpop.f32.mrf.mxu0
    %v2982 = vadd.f32 0.0, %v2981
    %v2983 = vpop.f32.mrf.mxu0
    %v2984 = vadd.f32 0.0, %v2983
    %2985 = vmatmul.bf16.gmra.mxu0 %v2774
    %v2986 = vpop.f32.mrf.mxu0
    %v2987 = vadd.f32 0.0, %v2986
    %v2988 = vpop.f32.mrf.mxu0
    %v2989 = vadd.f32 0.0, %v2988
    %2990 = vmatmul.bf16.gmra.mxu0 %v2777
    %v2991 = vpop.f32.mrf.mxu0
    %v2992 = vadd.f32 0.0, %v2991
    %v2993 = vpop.f32.mrf.mxu0
    %v2994 = vadd.f32 0.0, %v2993
    %2995 = vmatmul.bf16.gmra.mxu0 %v2780
    %v2996 = vpop.f32.mrf.mxu0
    %v2997 = vadd.f32 0.0, %v2996
    %v2998 = vpop.f32.mrf.mxu0
    %v2999 = vadd.f32 0.0, %v2998
    %3000 = vmatmul.bf16.gmra.mxu0 %v2783
    %v3001 = vpop.f32.mrf.mxu0
    %v3002 = vadd.f32 0.0, %v3001
    %v3003 = vpop.f32.mrf.mxu0
    %v3004 = vadd.f32 0.0, %v3003
    %3005 = vmatmul.bf16.gmra.mxu0 %v2786
    %v3006 = vpop.f32.mrf.mxu0
    %v3007 = vadd.f32 0.0, %v3006
    %v3008 = vpop.f32.mrf.mxu0
    %v3009 = vadd.f32 0.0, %v3008
    %3010 = vmatmul.bf16.gmra.mxu0 %v2789
    %v3011 = vpop.f32.mrf.mxu0
    %v3012 = vadd.f32 0.0, %v3011
    %v3013 = vpop.f32.mrf.mxu0
    %v3014 = vadd.f32 0.0, %v3013
    %3015 = vmatmul.bf16.gmra.mxu0 %v2792
    %v3016 = vpop.f32.mrf.mxu0
    %v3017 = vadd.f32 0.0, %v3016
    %v3018 = vpop.f32.mrf.mxu0
    %v3019 = vadd.f32 0.0, %v3018
    %3020 = vmatmul.bf16.gmra.mxu0 %v2795
    %v3021 = vpop.f32.mrf.mxu0
    %v3022 = vadd.f32 0.0, %v3021
    %v3023 = vpop.f32.mrf.mxu0
    %v3024 = vadd.f32 0.0, %v3023
    %3025 = vmatmul.bf16.gmra.mxu0 %v2798
    %v3026 = vpop.f32.mrf.mxu0
    %v3027 = vadd.f32 0.0, %v3026
    %v3028 = vpop.f32.mrf.mxu0
    %v3029 = vadd.f32 0.0, %v3028
    %3030 = vmatmul.bf16.gmra.mxu0 %v2801
    %v3031 = vpop.f32.mrf.mxu0
    %v3032 = vadd.f32 0.0, %v3031
    %v3033 = vpop.f32.mrf.mxu0
    %v3034 = vadd.f32 0.0, %v3033
    %3035 = vmatmul.bf16.gmra.mxu0 %v2804
    %v3036 = vpop.f32.mrf.mxu0
    %v3037 = vadd.f32 0.0, %v3036
    %v3038 = vpop.f32.mrf.mxu0
    %v3039 = vadd.f32 0.0, %v3038
    %3040 = vmatmul.bf16.gmra.mxu0 %v2807
    %v3041 = vpop.f32.mrf.mxu0
    %v3042 = vadd.f32 0.0, %v3041
    %v3043 = vpop.f32.mrf.mxu0
    %v3044 = vadd.f32 0.0, %v3043
    %3045 = vmatmul.bf16.gmra.mxu0 %v2810
    %v3046 = vpop.f32.mrf.mxu0
    %v3047 = vadd.f32 0.0, %v3046
    %v3048 = vpop.f32.mrf.mxu0
    %v3049 = vadd.f32 0.0, %v3048
    %3050 = vmatmul.bf16.gmra.mxu0 %v2813
    %v3051 = vpop.f32.mrf.mxu0
    %v3052 = vadd.f32 0.0, %v3051
    %v3053 = vpop.f32.mrf.mxu0
    %v3054 = vadd.f32 0.0, %v3053
    %3055 = vmatmul.bf16.gmra.mxu0 %v2816
    %v3056 = vpop.f32.mrf.mxu0
    %v3057 = vadd.f32 0.0, %v3056
    %v3058 = vpop.f32.mrf.mxu0
    %v3059 = vadd.f32 0.0, %v3058
    %3060 = vmatmul.bf16.gmra.mxu0 %v2819
    %v3061 = vpop.f32.mrf.mxu0
    %v3062 = vadd.f32 0.0, %v3061
    %v3063 = vpop.f32.mrf.mxu0
    %v3064 = vadd.f32 0.0, %v3063
    %3065 = vmatmul.bf16.gmra.mxu0 %v2822
    %v3066 = vpop.f32.mrf.mxu0
    %v3067 = vadd.f32 0.0, %v3066
    %v3068 = vpop.f32.mrf.mxu0
    %v3069 = vadd.f32 0.0, %v3068
    %3070 = vmatmul.bf16.gmra.mxu0 %v2825
    %v3071 = vpop.f32.mrf.mxu0
    %v3072 = vadd.f32 0.0, %v3071
    %v3073 = vpop.f32.mrf.mxu0
    %v3074 = vadd.f32 0.0, %v3073
    %3075 = vmatmul.bf16.gmra.mxu0 %v2828
    %v3076 = vpop.f32.mrf.mxu0
    %v3077 = vadd.f32 0.0, %v3076
    %v3078 = vpop.f32.mrf.mxu0
    %v3079 = vadd.f32 0.0, %v3078
    %3080 = vmatmul.bf16.gmra.mxu0 %v2831
    %v3081 = vpop.f32.mrf.mxu0
    %v3082 = vadd.f32 0.0, %v3081
    %v3083 = vpop.f32.mrf.mxu0
    %v3084 = vadd.f32 0.0, %v3083
    %3085 = vmatmul.bf16.gmra.mxu0 %v2834
    %v3086 = vpop.f32.mrf.mxu0
    %v3087 = vadd.f32 0.0, %v3086
    %v3088 = vpop.f32.mrf.mxu0
    %v3089 = vadd.f32 0.0, %v3088
    %3090 = vmatmul.bf16.gmra.mxu0 %v2837
    %v3091 = vpop.f32.mrf.mxu0
    %v3092 = vadd.f32 0.0, %v3091
    %v3093 = vpop.f32.mrf.mxu0
    %v3094 = vadd.f32 0.0, %v3093
    %3095 = vmatmul.bf16.gmra.mxu0 %v2840
    %v3096 = vpop.f32.mrf.mxu0
    %v3097 = vadd.f32 0.0, %v3096
    %v3098 = vpop.f32.mrf.mxu0
    %v3099 = vadd.f32 0.0, %v3098
    %3100 = vmatmul.bf16.gmra.mxu0 %v2843
    %v3101 = vpop.f32.mrf.mxu0
    %v3102 = vadd.f32 0.0, %v3101
    %v3103 = vpop.f32.mrf.mxu0
    %v3104 = vadd.f32 0.0, %v3103
    %3105 = vmatmul.bf16.gmra.mxu0 %v2846
    %v3106 = vpop.f32.mrf.mxu0
    %v3107 = vadd.f32 0.0, %v3106
    %v3108 = vpop.f32.mrf.mxu0
    %v3109 = vadd.f32 0.0, %v3108
    %3110 = vmatmul.bf16.gmra.mxu0 %v2849
    %v3111 = vpop.f32.mrf.mxu0
    %v3112 = vadd.f32 0.0, %v3111
    %v3113 = vpop.f32.mrf.mxu0
    %v3114 = vadd.f32 0.0, %v3113
    %3115 = vmatmul.bf16.gmra.mxu0 %v2852
    %v3116 = vpop.f32.mrf.mxu0
    %v3117 = vadd.f32 0.0, %v3116
    %v3118 = vpop.f32.mrf.mxu0
    %v3119 = vadd.f32 0.0, %v3118
    %3120 = vmatmul.bf16.gmra.mxu0 %v2855
    %v3121 = vpop.f32.mrf.mxu0
    %v3122 = vadd.f32 0.0, %v3121
    %v3123 = vpop.f32.mrf.mxu0
    %v3124 = vadd.f32 0.0, %v3123
    %3125 = vmatmul.bf16.gmra.mxu0 %v2858
    %v3126 = vpop.f32.mrf.mxu0
    %v3127 = vadd.f32 0.0, %v3126
    %v3128 = vpop.f32.mrf.mxu0
    %v3129 = vadd.f32 0.0, %v3128
    %3130 = vmatmul.bf16.gmra.mxu0 %v2861
    %v3131 = vpop.f32.mrf.mxu0
    %v3132 = vadd.f32 0.0, %v3131
    %v3133 = vpop.f32.mrf.mxu0
    %v3134 = vadd.f32 0.0, %v3133
    %3135 = vmatmul.bf16.gmra.mxu0 %v2864
    %v3136 = vpop.f32.mrf.mxu0
    %v3137 = vadd.f32 0.0, %v3136
    %v3138 = vpop.f32.mrf.mxu0
    %v3139 = vadd.f32 0.0, %v3138
    %3140 = vmatmul.bf16.gmra.mxu0 %v2867
    %v3141 = vpop.f32.mrf.mxu0
    %v3142 = vadd.f32 0.0, %v3141
    %v3143 = vpop.f32.mrf.mxu0
    %v3144 = vadd.f32 0.0, %v3143
    %3145 = vmatmul.bf16.gmra.mxu0 %v2870
    %v3146 = vpop.f32.mrf.mxu0
    %v3147 = vadd.f32 0.0, %v3146
    %v3148 = vpop.f32.mrf.mxu0
    %v3149 = vadd.f32 0.0, %v3148
    %3150 = vmatmul.bf16.gmra.mxu0 %v2873
    %v3151 = vpop.f32.mrf.mxu0
    %v3152 = vadd.f32 0.0, %v3151
    %v3153 = vpop.f32.mrf.mxu0
    %v3154 = vadd.f32 0.0, %v3153
    %3155 = vmatmul.bf16.gmra.mxu0 %v2876
    %v3156 = vpop.f32.mrf.mxu0
    %v3157 = vadd.f32 0.0, %v3156
    %v3158 = vpop.f32.mrf.mxu0
    %v3159 = vadd.f32 0.0, %v3158
    %3160 = vmatmul.bf16.gmra.mxu0 %v2879
    %v3161 = vpop.f32.mrf.mxu0
    %v3162 = vadd.f32 0.0, %v3161
    %v3163 = vpop.f32.mrf.mxu0
    %v3164 = vadd.f32 0.0, %v3163
    %3165 = vmatmul.bf16.gmra.mxu0 %v2882
    %v3166 = vpop.f32.mrf.mxu0
    %v3167 = vadd.f32 0.0, %v3166
    %v3168 = vpop.f32.mrf.mxu0
    %v3169 = vadd.f32 0.0, %v3168
    %3170 = vmatmul.bf16.gmra.mxu0 %v2885
    %v3171 = vpop.f32.mrf.mxu0
    %v3172 = vadd.f32 0.0, %v3171
    %v3173 = vpop.f32.mrf.mxu0
    %v3174 = vadd.f32 0.0, %v3173
    %3175 = vmatmul.bf16.gmra.mxu0 %v2888
    %v3176 = vpop.f32.mrf.mxu0
    %v3177 = vadd.f32 0.0, %v3176
    %v3178 = vpop.f32.mrf.mxu0
    %v3179 = vadd.f32 0.0, %v3178
    %3180 = vmatmul.bf16.gmra.mxu0 %v2891
    %v3181 = vpop.f32.mrf.mxu0
    %v3182 = vadd.f32 0.0, %v3181
    %v3183 = vpop.f32.mrf.mxu0
    %v3184 = vadd.f32 0.0, %v3183
    %3185 = vmatmul.bf16.gmra.mxu0 %v2894
    %v3186 = vpop.f32.mrf.mxu0
    %v3187 = vadd.f32 0.0, %v3186
    %v3188 = vpop.f32.mrf.mxu0
    %v3189 = vadd.f32 0.0, %v3188
    %3190 = vmatmul.bf16.gmra.mxu0 %v2897
    %v3191 = vpop.f32.mrf.mxu0
    %v3192 = vadd.f32 0.0, %v3191
    %v3193 = vpop.f32.mrf.mxu0
    %v3194 = vadd.f32 0.0, %v3193
    %3195 = vmatmul.bf16.gmra.mxu0 %v2900
    %v3196 = vpop.f32.mrf.mxu0
    %v3197 = vadd.f32 0.0, %v3196
    %v3198 = vpop.f32.mrf.mxu0
    %v3199 = vadd.f32 0.0, %v3198
    %3200 = vmatmul.bf16.gmra.mxu0 %v2903
    %v3201 = vpop.f32.mrf.mxu0
    %v3202 = vadd.f32 0.0, %v3201
    %v3203 = vpop.f32.mrf.mxu0
    %v3204 = vadd.f32 0.0, %v3203
    %3205 = vmatmul.bf16.gmra.mxu0 %v2906
    %v3206 = vpop.f32.mrf.mxu0
    %v3207 = vadd.f32 0.0, %v3206
    %v3208 = vpop.f32.mrf.mxu0
    %v3209 = vadd.f32 0.0, %v3208
    %3210 = vmatmul.bf16.gmra.mxu0 %v2909
    %v3211 = vpop.f32.mrf.mxu0
    %v3212 = vadd.f32 0.0, %v3211
    %v3213 = vpop.f32.mrf.mxu0
    %v3214 = vadd.f32 0.0, %v3213
    %3215 = vmatmul.bf16.gmra.mxu0 %v2912
    %v3216 = vpop.f32.mrf.mxu0
    %v3217 = vadd.f32 0.0, %v3216
    %v3218 = vpop.f32.mrf.mxu0
    %v3219 = vadd.f32 0.0, %v3218
    %3220 = vmatmul.bf16.gmra.mxu0 %v2915
    %v3221 = vpop.f32.mrf.mxu0
    %v3222 = vadd.f32 0.0, %v3221
    %v3223 = vpop.f32.mrf.mxu0
    %v3224 = vadd.f32 0.0, %v3223
    %3225 = vmatmul.bf16.gmra.mxu0 %v2918
    %v3226 = vpop.f32.mrf.mxu0
    %v3227 = vadd.f32 0.0, %v3226
    %v3228 = vpop.f32.mrf.mxu0
    %v3229 = vadd.f32 0.0, %v3228
    %3230 = vmatmul.bf16.gmra.mxu0 %v2921
    %v3231 = vpop.f32.mrf.mxu0
    %v3232 = vadd.f32 0.0, %v3231
    %v3233 = vpop.f32.mrf.mxu0
    %v3234 = vadd.f32 0.0, %v3233
    %3235 = vmatmul.bf16.gmra.mxu0 %v2924
    %v3236 = vpop.f32.mrf.mxu0
    %v3237 = vadd.f32 0.0, %v3236
    %v3238 = vpop.f32.mrf.mxu0
    %v3239 = vadd.f32 0.0, %v3238
    %3240 = vmatmul.bf16.gmra.mxu0 %v2927
    %v3241 = vpop.f32.mrf.mxu0
    %v3242 = vadd.f32 0.0, %v3241
    %v3243 = vpop.f32.mrf.mxu0
    %v3244 = vadd.f32 0.0, %v3243
    %3245 = vmatmul.bf16.gmra.mxu0 %v2930
    %v3246 = vpop.f32.mrf.mxu0
    %v3247 = vadd.f32 0.0, %v3246
    %v3248 = vpop.f32.mrf.mxu0
    %v3249 = vadd.f32 0.0, %v3248
    %3250 = vmatmul.bf16.gmra.mxu0 %v2933
    %v3251 = vpop.f32.mrf.mxu0
    %v3252 = vadd.f32 0.0, %v3251
    %v3253 = vpop.f32.mrf.mxu0
    %v3254 = vadd.f32 0.0, %v3253
    %3255 = vmatmul.bf16.gmra.mxu0 %v2936
    %v3256 = vpop.f32.mrf.mxu0
    %v3257 = vadd.f32 0.0, %v3256
    %v3258 = vpop.f32.mrf.mxu0
    %v3259 = vadd.f32 0.0, %v3258
    %3260 = vmatmul.bf16.gmra.mxu0 %v2939
    %v3261 = vpop.f32.mrf.mxu0
    %v3262 = vadd.f32 0.0, %v3261
    %v3263 = vpop.f32.mrf.mxu0
    %v3264 = vadd.f32 0.0, %v3263
    %3265 = vmatmul.bf16.gmra.mxu0 %v2942
    %v3266 = vpop.f32.mrf.mxu0
    %v3267 = vadd.f32 0.0, %v3266
    %v3268 = vpop.f32.mrf.mxu0
    %v3269 = vadd.f32 0.0, %v3268
    %3270 = vmatmul.bf16.gmra.mxu0 %v2945
    %v3271 = vpop.f32.mrf.mxu0
    %v3272 = vadd.f32 0.0, %v3271
    %v3273 = vpop.f32.mrf.mxu0
    %v3274 = vadd.f32 0.0, %v3273
    %3275 = vmatmul.bf16.gmra.mxu0 %v2948
    %v3276 = vpop.f32.mrf.mxu0
    %v3277 = vadd.f32 0.0, %v3276
    %v3278 = vpop.f32.mrf.mxu0
    %v3279 = vadd.f32 0.0, %v3278
    %3280 = vmatmul.bf16.gmra.mxu0 %v2951
    %v3281 = vpop.f32.mrf.mxu0
    %v3282 = vadd.f32 0.0, %v3281
    %v3283 = vpop.f32.mrf.mxu0
    %v3284 = vadd.f32 0.0, %v3283
    %3285 = vdwg.mxu0
    %v3286 = vadd.f32 %v2535, %v2967
    %v3287 = vadd.f32 %v2536, %v2969
    %v3288 = vadd.f32 %v2537, %v2972
    %v3289 = vadd.f32 %v2538, %v2974
    %v3290 = vadd.f32 %v2539, %v2977
    %v3291 = vadd.f32 %v2540, %v2979
    %v3292 = vadd.f32 %v2541, %v2982
    %v3293 = vadd.f32 %v2542, %v2984
    %v3294 = vadd.f32 %v2543, %v2987
    %v3295 = vadd.f32 %v2544, %v2989
    %v3296 = vadd.f32 %v2545, %v2992
    %v3297 = vadd.f32 %v2546, %v2994
    %v3298 = vadd.f32 %v2547, %v2997
    %v3299 = vadd.f32 %v2548, %v2999
    %v3300 = vadd.f32 %v2549, %v3002
    %v3301 = vadd.f32 %v2550, %v3004
    %v3302 = vadd.f32 %v2551, %v3007
    %v3303 = vadd.f32 %v2552, %v3009
    %v3304 = vadd.f32 %v2553, %v3012
    %v3305 = vadd.f32 %v2554, %v3014
    %v3306 = vadd.f32 %v2555, %v3017
    %v3307 = vadd.f32 %v2556, %v3019
    %v3308 = vadd.f32 %v2557, %v3022
    %v3309 = vadd.f32 %v2558, %v3024
    %v3310 = vadd.f32 %v2559, %v3027
    %v3311 = vadd.f32 %v2560, %v3029
    %v3312 = vadd.f32 %v2561, %v3032
    %v3313 = vadd.f32 %v2562, %v3034
    %v3314 = vadd.f32 %v2563, %v3037
    %v3315 = vadd.f32 %v2564, %v3039
    %v3316 = vadd.f32 %v2565, %v3042
    %v3317 = vadd.f32 %v2566, %v3044
    %v3318 = vadd.f32 %v2567, %v3047
    %v3319 = vadd.f32 %v2568, %v3049
    %v3320 = vadd.f32 %v2569, %v3052
    %v3321 = vadd.f32 %v2570, %v3054
    %v3322 = vadd.f32 %v2571, %v3057
    %v3323 = vadd.f32 %v2572, %v3059
    %v3324 = vadd.f32 %v2573, %v3062
    %v3325 = vadd.f32 %v2574, %v3064
    %v3326 = vadd.f32 %v2575, %v3067
    %v3327 = vadd.f32 %v2576, %v3069
    %v3328 = vadd.f32 %v2577, %v3072
    %v3329 = vadd.f32 %v2578, %v3074
    %v3330 = vadd.f32 %v2579, %v3077
    %v3331 = vadd.f32 %v2580, %v3079
    %v3332 = vadd.f32 %v2581, %v3082
    %v3333 = vadd.f32 %v2582, %v3084
    %v3334 = vadd.f32 %v2583, %v3087
    %v3335 = vadd.f32 %v2584, %v3089
    %v3336 = vadd.f32 %v2585, %v3092
    %v3337 = vadd.f32 %v2586, %v3094
    %v3338 = vadd.f32 %v2587, %v3097
    %v3339 = vadd.f32 %v2588, %v3099
    %v3340 = vadd.f32 %v2589, %v3102
    %v3341 = vadd.f32 %v2590, %v3104
    %v3342 = vadd.f32 %v2591, %v3107
    %v3343 = vadd.f32 %v2592, %v3109
    %v3344 = vadd.f32 %v2593, %v3112
    %v3345 = vadd.f32 %v2594, %v3114
    %v3346 = vadd.f32 %v2595, %v3117
    %v3347 = vadd.f32 %v2596, %v3119
    %v3348 = vadd.f32 %v2597, %v3122
    %v3349 = vadd.f32 %v2598, %v3124
    %v3350 = vadd.f32 %v2599, %v3127
    %v3351 = vadd.f32 %v2600, %v3129
    %v3352 = vadd.f32 %v2601, %v3132
    %v3353 = vadd.f32 %v2602, %v3134
    %v3354 = vadd.f32 %v2603, %v3137
    %v3355 = vadd.f32 %v2604, %v3139
    %v3356 = vadd.f32 %v2605, %v3142
    %v3357 = vadd.f32 %v2606, %v3144
    %v3358 = vadd.f32 %v2607, %v3147
    %v3359 = vadd.f32 %v2608, %v3149
    %v3360 = vadd.f32 %v2609, %v3152
    %v3361 = vadd.f32 %v2610, %v3154
    %v3362 = vadd.f32 %v2611, %v3157
    %v3363 = vadd.f32 %v2612, %v3159
    %v3364 = vadd.f32 %v2613, %v3162
    %v3365 = vadd.f32 %v2614, %v3164
    %v3366 = vadd.f32 %v2615, %v3167
    %v3367 = vadd.f32 %v2616, %v3169
    %v3368 = vadd.f32 %v2617, %v3172
    %v3369 = vadd.f32 %v2618, %v3174
    %v3370 = vadd.f32 %v2619, %v3177
    %v3371 = vadd.f32 %v2620, %v3179
    %v3372 = vadd.f32 %v2621, %v3182
    %v3373 = vadd.f32 %v2622, %v3184
    %v3374 = vadd.f32 %v2623, %v3187
    %v3375 = vadd.f32 %v2624, %v3189
    %v3376 = vadd.f32 %v2625, %v3192
    %v3377 = vadd.f32 %v2626, %v3194
    %v3378 = vadd.f32 %v2627, %v3197
    %v3379 = vadd.f32 %v2628, %v3199
    %v3380 = vadd.f32 %v2629, %v3202
    %v3381 = vadd.f32 %v2630, %v3204
    %v3382 = vadd.f32 %v2631, %v3207
    %v3383 = vadd.f32 %v2632, %v3209
    %v3384 = vadd.f32 %v2633, %v3212
    %v3385 = vadd.f32 %v2634, %v3214
    %v3386 = vadd.f32 %v2635, %v3217
    %v3387 = vadd.f32 %v2636, %v3219
    %v3388 = vadd.f32 %v2637, %v3222
    %v3389 = vadd.f32 %v2638, %v3224
    %v3390 = vadd.f32 %v2639, %v3227
    %v3391 = vadd.f32 %v2640, %v3229
    %v3392 = vadd.f32 %v2641, %v3232
    %v3393 = vadd.f32 %v2642, %v3234
    %v3394 = vadd.f32 %v2643, %v3237
    %v3395 = vadd.f32 %v2644, %v3239
    %v3396 = vadd.f32 %v2645, %v3242
    %v3397 = vadd.f32 %v2646, %v3244
    %v3398 = vadd.f32 %v2647, %v3247
    %v3399 = vadd.f32 %v2648, %v3249
    %v3400 = vadd.f32 %v2649, %v3252
    %v3401 = vadd.f32 %v2650, %v3254
    %v3402 = vadd.f32 %v2651, %v3257
    %v3403 = vadd.f32 %v2652, %v3259
    %v3404 = vadd.f32 %v2653, %v3262
    %v3405 = vadd.f32 %v2654, %v3264
    %v3406 = vadd.f32 %v2655, %v3267
    %v3407 = vadd.f32 %v2656, %v3269
    %v3408 = vadd.f32 %v2657, %v3272
    %v3409 = vadd.f32 %v2658, %v3274
    %v3410 = vadd.f32 %v2659, %v3277
    %v3411 = vadd.f32 %v2660, %v3279
    %v3412 = vadd.f32 %v2661, %v3282
    %v3413 = vadd.f32 %v2662, %v3284
    %v3414 = vld [vmem:[%s8] sm:$0x1]
    %v3416 = vperm.slane %v3414, 0
    %v3418 = vadd.f32 %v3286, %v3416
    %v3419 = vadd.f32 %v3287, %v3416
    %v3420 = vadd.f32 %v3288, %v3416
    %v3421 = vadd.f32 %v3289, %v3416
    %v3422 = vadd.f32 %v3290, %v3416
    %v3423 = vadd.f32 %v3291, %v3416
    %v3424 = vadd.f32 %v3292, %v3416
    %v3425 = vadd.f32 %v3293, %v3416
    %v3426 = vadd.f32 %v3294, %v3416
    %v3427 = vadd.f32 %v3295, %v3416
    %v3428 = vadd.f32 %v3296, %v3416
    %v3429 = vadd.f32 %v3297, %v3416
    %v3430 = vadd.f32 %v3298, %v3416
    %v3431 = vadd.f32 %v3299, %v3416
    %v3432 = vadd.f32 %v3300, %v3416
    %v3433 = vadd.f32 %v3301, %v3416
    %v3434 = vadd.f32 %v3302, %v3416
    %v3435 = vadd.f32 %v3303, %v3416
    %v3436 = vadd.f32 %v3304, %v3416
    %v3437 = vadd.f32 %v3305, %v3416
    %v3438 = vadd.f32 %v3306, %v3416
    %v3439 = vadd.f32 %v3307, %v3416
    %v3440 = vadd.f32 %v3308, %v3416
    %v3441 = vadd.f32 %v3309, %v3416
    %v3442 = vadd.f32 %v3310, %v3416
    %v3443 = vadd.f32 %v3311, %v3416
    %v3444 = vadd.f32 %v3312, %v3416
    %v3445 = vadd.f32 %v3313, %v3416
    %v3446 = vadd.f32 %v3314, %v3416
    %v3447 = vadd.f32 %v3315, %v3416
    %v3448 = vadd.f32 %v3316, %v3416
    %v3449 = vadd.f32 %v3317, %v3416
    %v3450 = vadd.f32 %v3318, %v3416
    %v3451 = vadd.f32 %v3319, %v3416
    %v3452 = vadd.f32 %v3320, %v3416
    %v3453 = vadd.f32 %v3321, %v3416
    %v3454 = vadd.f32 %v3322, %v3416
    %v3455 = vadd.f32 %v3323, %v3416
    %v3456 = vadd.f32 %v3324, %v3416
    %v3457 = vadd.f32 %v3325, %v3416
    %v3458 = vadd.f32 %v3326, %v3416
    %v3459 = vadd.f32 %v3327, %v3416
    %v3460 = vadd.f32 %v3328, %v3416
    %v3461 = vadd.f32 %v3329, %v3416
    %v3462 = vadd.f32 %v3330, %v3416
    %v3463 = vadd.f32 %v3331, %v3416
    %v3464 = vadd.f32 %v3332, %v3416
    %v3465 = vadd.f32 %v3333, %v3416
    %v3466 = vadd.f32 %v3334, %v3416
    %v3467 = vadd.f32 %v3335, %v3416
    %v3468 = vadd.f32 %v3336, %v3416
    %v3469 = vadd.f32 %v3337, %v3416
    %v3470 = vadd.f32 %v3338, %v3416
    %v3471 = vadd.f32 %v3339, %v3416
    %v3472 = vadd.f32 %v3340, %v3416
    %v3473 = vadd.f32 %v3341, %v3416
    %v3474 = vadd.f32 %v3342, %v3416
    %v3475 = vadd.f32 %v3343, %v3416
    %v3476 = vadd.f32 %v3344, %v3416
    %v3477 = vadd.f32 %v3345, %v3416
    %v3478 = vadd.f32 %v3346, %v3416
    %v3479 = vadd.f32 %v3347, %v3416
    %v3480 = vadd.f32 %v3348, %v3416
    %v3481 = vadd.f32 %v3349, %v3416
    %v3482 = vadd.f32 %v3350, %v3416
    %v3483 = vadd.f32 %v3351, %v3416
    %v3484 = vadd.f32 %v3352, %v3416
    %v3485 = vadd.f32 %v3353, %v3416
    %v3486 = vadd.f32 %v3354, %v3416
    %v3487 = vadd.f32 %v3355, %v3416
    %v3488 = vadd.f32 %v3356, %v3416
    %v3489 = vadd.f32 %v3357, %v3416
    %v3490 = vadd.f32 %v3358, %v3416
    %v3491 = vadd.f32 %v3359, %v3416
    %v3492 = vadd.f32 %v3360, %v3416
    %v3493 = vadd.f32 %v3361, %v3416
    %v3494 = vadd.f32 %v3362, %v3416
    %v3495 = vadd.f32 %v3363, %v3416
    %v3496 = vadd.f32 %v3364, %v3416
    %v3497 = vadd.f32 %v3365, %v3416
    %v3498 = vadd.f32 %v3366, %v3416
    %v3499 = vadd.f32 %v3367, %v3416
    %v3500 = vadd.f32 %v3368, %v3416
    %v3501 = vadd.f32 %v3369, %v3416
    %v3502 = vadd.f32 %v3370, %v3416
    %v3503 = vadd.f32 %v3371, %v3416
    %v3504 = vadd.f32 %v3372, %v3416
    %v3505 = vadd.f32 %v3373, %v3416
    %v3506 = vadd.f32 %v3374, %v3416
    %v3507 = vadd.f32 %v3375, %v3416
    %v3508 = vadd.f32 %v3376, %v3416
    %v3509 = vadd.f32 %v3377, %v3416
    %v3510 = vadd.f32 %v3378, %v3416
    %v3511 = vadd.f32 %v3379, %v3416
    %v3512 = vadd.f32 %v3380, %v3416
    %v3513 = vadd.f32 %v3381, %v3416
    %v3514 = vadd.f32 %v3382, %v3416
    %v3515 = vadd.f32 %v3383, %v3416
    %v3516 = vadd.f32 %v3384, %v3416
    %v3517 = vadd.f32 %v3385, %v3416
    %v3518 = vadd.f32 %v3386, %v3416
    %v3519 = vadd.f32 %v3387, %v3416
    %v3520 = vadd.f32 %v3388, %v3416
    %v3521 = vadd.f32 %v3389, %v3416
    %v3522 = vadd.f32 %v3390, %v3416
    %v3523 = vadd.f32 %v3391, %v3416
    %v3524 = vadd.f32 %v3392, %v3416
    %v3525 = vadd.f32 %v3393, %v3416
    %v3526 = vadd.f32 %v3394, %v3416
    %v3527 = vadd.f32 %v3395, %v3416
    %v3528 = vadd.f32 %v3396, %v3416
    %v3529 = vadd.f32 %v3397, %v3416
    %v3530 = vadd.f32 %v3398, %v3416
    %v3531 = vadd.f32 %v3399, %v3416
    %v3532 = vadd.f32 %v3400, %v3416
    %v3533 = vadd.f32 %v3401, %v3416
    %v3534 = vadd.f32 %v3402, %v3416
    %v3535 = vadd.f32 %v3403, %v3416
    %v3536 = vadd.f32 %v3404, %v3416
    %v3537 = vadd.f32 %v3405, %v3416
    %v3538 = vadd.f32 %v3406, %v3416
    %v3539 = vadd.f32 %v3407, %v3416
    %v3540 = vadd.f32 %v3408, %v3416
    %v3541 = vadd.f32 %v3409, %v3416
    %v3542 = vadd.f32 %v3410, %v3416
    %v3543 = vadd.f32 %v3411, %v3416
    %v3544 = vadd.f32 %v3412, %v3416
    %v3545 = vadd.f32 %v3413, %v3416
    %v3546 = vmax.f32 %v3418, 0.0
    %v3547 = vmax.f32 %v3419, 0.0
    %v3548 = vmax.f32 %v3420, 0.0
    %v3549 = vmax.f32 %v3421, 0.0
    %v3550 = vmax.f32 %v3422, 0.0
    %v3551 = vmax.f32 %v3423, 0.0
    %v3552 = vmax.f32 %v3424, 0.0
    %v3553 = vmax.f32 %v3425, 0.0
    %v3554 = vmax.f32 %v3426, 0.0
    %v3555 = vmax.f32 %v3427, 0.0
    %v3556 = vmax.f32 %v3428, 0.0
    %v3557 = vmax.f32 %v3429, 0.0
    %v3558 = vmax.f32 %v3430, 0.0
    %v3559 = vmax.f32 %v3431, 0.0
    %v3560 = vmax.f32 %v3432, 0.0
    %v3561 = vmax.f32 %v3433, 0.0
    %v3562 = vmax.f32 %v3434, 0.0
    %v3563 = vmax.f32 %v3435, 0.0
    %v3564 = vmax.f32 %v3436, 0.0
    %v3565 = vmax.f32 %v3437, 0.0
    %v3566 = vmax.f32 %v3438, 0.0
    %v3567 = vmax.f32 %v3439, 0.0
    %v3568 = vmax.f32 %v3440, 0.0
    %v3569 = vmax.f32 %v3441, 0.0
    %v3570 = vmax.f32 %v3442, 0.0
    %v3571 = vmax.f32 %v3443, 0.0
    %v3572 = vmax.f32 %v3444, 0.0
    %v3573 = vmax.f32 %v3445, 0.0
    %v3574 = vmax.f32 %v3446, 0.0
    %v3575 = vmax.f32 %v3447, 0.0
    %v3576 = vmax.f32 %v3448, 0.0
    %v3577 = vmax.f32 %v3449, 0.0
    %v3578 = vmax.f32 %v3450, 0.0
    %v3579 = vmax.f32 %v3451, 0.0
    %v3580 = vmax.f32 %v3452, 0.0
    %v3581 = vmax.f32 %v3453, 0.0
    %v3582 = vmax.f32 %v3454, 0.0
    %v3583 = vmax.f32 %v3455, 0.0
    %v3584 = vmax.f32 %v3456, 0.0
    %v3585 = vmax.f32 %v3457, 0.0
    %v3586 = vmax.f32 %v3458, 0.0
    %v3587 = vmax.f32 %v3459, 0.0
    %v3588 = vmax.f32 %v3460, 0.0
    %v3589 = vmax.f32 %v3461, 0.0
    %v3590 = vmax.f32 %v3462, 0.0
    %v3591 = vmax.f32 %v3463, 0.0
    %v3592 = vmax.f32 %v3464, 0.0
    %v3593 = vmax.f32 %v3465, 0.0
    %v3594 = vmax.f32 %v3466, 0.0
    %v3595 = vmax.f32 %v3467, 0.0
    %v3596 = vmax.f32 %v3468, 0.0
    %v3597 = vmax.f32 %v3469, 0.0
    %v3598 = vmax.f32 %v3470, 0.0
    %v3599 = vmax.f32 %v3471, 0.0
    %v3600 = vmax.f32 %v3472, 0.0
    %v3601 = vmax.f32 %v3473, 0.0
    %v3602 = vmax.f32 %v3474, 0.0
    %v3603 = vmax.f32 %v3475, 0.0
    %v3604 = vmax.f32 %v3476, 0.0
    %v3605 = vmax.f32 %v3477, 0.0
    %v3606 = vmax.f32 %v3478, 0.0
    %v3607 = vmax.f32 %v3479, 0.0
    %v3608 = vmax.f32 %v3480, 0.0
    %v3609 = vmax.f32 %v3481, 0.0
    %v3610 = vmax.f32 %v3482, 0.0
    %v3611 = vmax.f32 %v3483, 0.0
    %v3612 = vmax.f32 %v3484, 0.0
    %v3613 = vmax.f32 %v3485, 0.0
    %v3614 = vmax.f32 %v3486, 0.0
    %v3615 = vmax.f32 %v3487, 0.0
    %v3616 = vmax.f32 %v3488, 0.0
    %v3617 = vmax.f32 %v3489, 0.0
    %v3618 = vmax.f32 %v3490, 0.0
    %v3619 = vmax.f32 %v3491, 0.0
    %v3620 = vmax.f32 %v3492, 0.0
    %v3621 = vmax.f32 %v3493, 0.0
    %v3622 = vmax.f32 %v3494, 0.0
    %v3623 = vmax.f32 %v3495, 0.0
    %v3624 = vmax.f32 %v3496, 0.0
    %v3625 = vmax.f32 %v3497, 0.0
    %v3626 = vmax.f32 %v3498, 0.0
    %v3627 = vmax.f32 %v3499, 0.0
    %v3628 = vmax.f32 %v3500, 0.0
    %v3629 = vmax.f32 %v3501, 0.0
    %v3630 = vmax.f32 %v3502, 0.0
    %v3631 = vmax.f32 %v3503, 0.0
    %v3632 = vmax.f32 %v3504, 0.0
    %v3633 = vmax.f32 %v3505, 0.0
    %v3634 = vmax.f32 %v3506, 0.0
    %v3635 = vmax.f32 %v3507, 0.0
    %v3636 = vmax.f32 %v3508, 0.0
    %v3637 = vmax.f32 %v3509, 0.0
    %v3638 = vmax.f32 %v3510, 0.0
    %v3639 = vmax.f32 %v3511, 0.0
    %v3640 = vmax.f32 %v3512, 0.0
    %v3641 = vmax.f32 %v3513, 0.0
    %v3642 = vmax.f32 %v3514, 0.0
    %v3643 = vmax.f32 %v3515, 0.0
    %v3644 = vmax.f32 %v3516, 0.0
    %v3645 = vmax.f32 %v3517, 0.0
    %v3646 = vmax.f32 %v3518, 0.0
    %v3647 = vmax.f32 %v3519, 0.0
    %v3648 = vmax.f32 %v3520, 0.0
    %v3649 = vmax.f32 %v3521, 0.0
    %v3650 = vmax.f32 %v3522, 0.0
    %v3651 = vmax.f32 %v3523, 0.0
    %v3652 = vmax.f32 %v3524, 0.0
    %v3653 = vmax.f32 %v3525, 0.0
    %v3654 = vmax.f32 %v3526, 0.0
    %v3655 = vmax.f32 %v3527, 0.0
    %v3656 = vmax.f32 %v3528, 0.0
    %v3657 = vmax.f32 %v3529, 0.0
    %v3658 = vmax.f32 %v3530, 0.0
    %v3659 = vmax.f32 %v3531, 0.0
    %v3660 = vmax.f32 %v3532, 0.0
    %v3661 = vmax.f32 %v3533, 0.0
    %v3662 = vmax.f32 %v3534, 0.0
    %v3663 = vmax.f32 %v3535, 0.0
    %v3664 = vmax.f32 %v3536, 0.0
    %v3665 = vmax.f32 %v3537, 0.0
    %v3666 = vmax.f32 %v3538, 0.0
    %v3667 = vmax.f32 %v3539, 0.0
    %v3668 = vmax.f32 %v3540, 0.0
    %v3669 = vmax.f32 %v3541, 0.0
    %v3670 = vmax.f32 %v3542, 0.0
    %v3671 = vmax.f32 %v3543, 0.0
    %v3672 = vmax.f32 %v3544, 0.0
    %v3673 = vmax.f32 %v3545, 0.0
    %v3674 = vpack.c.bf16 %v3547, %v3546
    %v3675 = vpack.c.bf16 %v3549, %v3548
    %v3676 = vpack.c.bf16 %v3551, %v3550
    %v3677 = vpack.c.bf16 %v3553, %v3552
    %v3678 = vpack.c.bf16 %v3555, %v3554
    %v3679 = vpack.c.bf16 %v3557, %v3556
    %v3680 = vpack.c.bf16 %v3559, %v3558
    %v3681 = vpack.c.bf16 %v3561, %v3560
    %v3682 = vpack.c.bf16 %v3563, %v3562
    %v3683 = vpack.c.bf16 %v3565, %v3564
    %v3684 = vpack.c.bf16 %v3567, %v3566
    %v3685 = vpack.c.bf16 %v3569, %v3568
    %v3686 = vpack.c.bf16 %v3571, %v3570
    %v3687 = vpack.c.bf16 %v3573, %v3572
    %v3688 = vpack.c.bf16 %v3575, %v3574
    %v3689 = vpack.c.bf16 %v3577, %v3576
    %v3690 = vpack.c.bf16 %v3579, %v3578
    %v3691 = vpack.c.bf16 %v3581, %v3580
    %v3692 = vpack.c.bf16 %v3583, %v3582
    %v3693 = vpack.c.bf16 %v3585, %v3584
    %v3694 = vpack.c.bf16 %v3587, %v3586
    %v3695 = vpack.c.bf16 %v3589, %v3588
    %v3696 = vpack.c.bf16 %v3591, %v3590
    %v3697 = vpack.c.bf16 %v3593, %v3592
    %v3698 = vpack.c.bf16 %v3595, %v3594
    %v3699 = vpack.c.bf16 %v3597, %v3596
    %v3700 = vpack.c.bf16 %v3599, %v3598
    %v3701 = vpack.c.bf16 %v3601, %v3600
    %v3702 = vpack.c.bf16 %v3603, %v3602
    %v3703 = vpack.c.bf16 %v3605, %v3604
    %v3704 = vpack.c.bf16 %v3607, %v3606
    %v3705 = vpack.c.bf16 %v3609, %v3608
    %v3706 = vpack.c.bf16 %v3611, %v3610
    %v3707 = vpack.c.bf16 %v3613, %v3612
    %v3708 = vpack.c.bf16 %v3615, %v3614
    %v3709 = vpack.c.bf16 %v3617, %v3616
    %v3710 = vpack.c.bf16 %v3619, %v3618
    %v3711 = vpack.c.bf16 %v3621, %v3620
    %v3712 = vpack.c.bf16 %v3623, %v3622
    %v3713 = vpack.c.bf16 %v3625, %v3624
    %v3714 = vpack.c.bf16 %v3627, %v3626
    %v3715 = vpack.c.bf16 %v3629, %v3628
    %v3716 = vpack.c.bf16 %v3631, %v3630
    %v3717 = vpack.c.bf16 %v3633, %v3632
    %v3718 = vpack.c.bf16 %v3635, %v3634
    %v3719 = vpack.c.bf16 %v3637, %v3636
    %v3720 = vpack.c.bf16 %v3639, %v3638
    %v3721 = vpack.c.bf16 %v3641, %v3640
    %v3722 = vpack.c.bf16 %v3643, %v3642
    %v3723 = vpack.c.bf16 %v3645, %v3644
    %v3724 = vpack.c.bf16 %v3647, %v3646
    %v3725 = vpack.c.bf16 %v3649, %v3648
    %v3726 = vpack.c.bf16 %v3651, %v3650
    %v3727 = vpack.c.bf16 %v3653, %v3652
    %v3728 = vpack.c.bf16 %v3655, %v3654
    %v3729 = vpack.c.bf16 %v3657, %v3656
    %v3730 = vpack.c.bf16 %v3659, %v3658
    %v3731 = vpack.c.bf16 %v3661, %v3660
    %v3732 = vpack.c.bf16 %v3663, %v3662
    %v3733 = vpack.c.bf16 %v3665, %v3664
    %v3734 = vpack.c.bf16 %v3667, %v3666
    %v3735 = vpack.c.bf16 %v3669, %v3668
    %v3736 = vpack.c.bf16 %v3671, %v3670
    %v3737 = vpack.c.bf16 %v3673, %v3672
    %v3738 = vld [vmem:[%s9] sm:$0xf]
    %v3739 = vld [vmem:[%s9 + $0x4] sm:$0xf]
    %v3740 = vld [vmem:[%s9 + $0x8] sm:$0xf]
    %v3741 = vld [vmem:[%s9 + $0xc] sm:$0xf]
    %v3742 = vld [vmem:[%s10] sm:$0x1]
    %v3744 = vperm.slane %v3742, 0
    %v3750 = vunpack.c.l.b16 %v3738
    %v3751 = vunpack.c.l.b16 %v3739
    %v3752 = vunpack.c.l.b16 %v3740
    %v3753 = vunpack.c.l.b16 %v3741
    %v3754 = vpack.c.b16 %v3751, %v3750
    %v3755 = vpack.c.b16 %v3753, %v3752
    %vm3758 = vcmask 261120
    %v3760 = vsel %vm3758, %v3674, 0
    %v3763 = vsel %vm3758, %v3675, 0
    %v3766 = vsel %vm3758, %v3676, 0
    %v3769 = vsel %vm3758, %v3677, 0
    %v3772 = vsel %vm3758, %v3678, 0
    %v3775 = vsel %vm3758, %v3679, 0
    %v3778 = vsel %vm3758, %v3680, 0
    %v3781 = vsel %vm3758, %v3681, 0
    %v3784 = vsel %vm3758, %v3682, 0
    %v3787 = vsel %vm3758, %v3683, 0
    %v3790 = vsel %vm3758, %v3684, 0
    %v3793 = vsel %vm3758, %v3685, 0
    %v3796 = vsel %vm3758, %v3686, 0
    %v3799 = vsel %vm3758, %v3687, 0
    %v3802 = vsel %vm3758, %v3688, 0
    %v3805 = vsel %vm3758, %v3689, 0
    %v3808 = vsel %vm3758, %v3690, 0
    %v3811 = vsel %vm3758, %v3691, 0
    %v3814 = vsel %vm3758, %v3692, 0
    %v3817 = vsel %vm3758, %v3693, 0
    %v3820 = vsel %vm3758, %v3694, 0
    %v3823 = vsel %vm3758, %v3695, 0
    %v3826 = vsel %vm3758, %v3696, 0
    %v3829 = vsel %vm3758, %v3697, 0
    %v3832 = vsel %vm3758, %v3698, 0
    %v3835 = vsel %vm3758, %v3699, 0
    %v3838 = vsel %vm3758, %v3700, 0
    %v3841 = vsel %vm3758, %v3701, 0
    %v3844 = vsel %vm3758, %v3702, 0
    %v3847 = vsel %vm3758, %v3703, 0
    %v3850 = vsel %vm3758, %v3704, 0
    %v3853 = vsel %vm3758, %v3705, 0
    %v3856 = vsel %vm3758, %v3706, 0
    %v3859 = vsel %vm3758, %v3707, 0
    %v3862 = vsel %vm3758, %v3708, 0
    %v3865 = vsel %vm3758, %v3709, 0
    %v3868 = vsel %vm3758, %v3710, 0
    %v3871 = vsel %vm3758, %v3711, 0
    %v3874 = vsel %vm3758, %v3712, 0
    %v3877 = vsel %vm3758, %v3713, 0
    %v3880 = vsel %vm3758, %v3714, 0
    %v3883 = vsel %vm3758, %v3715, 0
    %v3886 = vsel %vm3758, %v3716, 0
    %v3889 = vsel %vm3758, %v3717, 0
    %v3892 = vsel %vm3758, %v3718, 0
    %v3895 = vsel %vm3758, %v3719, 0
    %v3898 = vsel %vm3758, %v3720, 0
    %v3901 = vsel %vm3758, %v3721, 0
    %v3904 = vsel %vm3758, %v3722, 0
    %v3907 = vsel %vm3758, %v3723, 0
    %v3910 = vsel %vm3758, %v3724, 0
    %v3913 = vsel %vm3758, %v3725, 0
    %v3916 = vsel %vm3758, %v3726, 0
    %v3919 = vsel %vm3758, %v3727, 0
    %v3922 = vsel %vm3758, %v3728, 0
    %v3925 = vsel %vm3758, %v3729, 0
    %v3928 = vsel %vm3758, %v3730, 0
    %v3931 = vsel %vm3758, %v3731, 0
    %v3934 = vsel %vm3758, %v3732, 0
    %v3937 = vsel %vm3758, %v3733, 0
    %v3940 = vsel %vm3758, %v3734, 0
    %v3943 = vsel %vm3758, %v3735, 0
    %v3946 = vsel %vm3758, %v3736, 0
    %v3949 = vsel %vm3758, %v3737, 0
    %3951 = vmatpush.bf16.msra.mxu0 0
    %3952 = vmatpush.bf16.msra.mxu0 0
    %3953 = vmatpush.bf16.msra.mxu0 0
    %3954 = vmatpush.bf16.msra.mxu0 0
    %3955 = vmatpush.bf16.msra.mxu0 0
    %3956 = vmatpush.bf16.msra.mxu0 0
    %3957 = vmatpush.bf16.msra.mxu0 %v3755
    %3958 = vmatpush.bf16.msra.mxu0 %v3754
    %3959 = vmatmul.bf16.gmra.mxu0 %v3760
    %v3960 = vpop.f32.mrf.mxu0
    %v3961 = vadd.f32 %v3744, %v3960
    %v3962 = vpop.f32.mrf.mxu0
    %v3963 = vadd.f32 %v3744, %v3962
    %3964 = vmatmul.bf16.gmra.mxu0 %v3763
    %v3965 = vpop.f32.mrf.mxu0
    %v3966 = vadd.f32 %v3744, %v3965
    %v3967 = vpop.f32.mrf.mxu0
    %v3968 = vadd.f32 %v3744, %v3967
    %3969 = vmatmul.bf16.gmra.mxu0 %v3766
    %v3970 = vpop.f32.mrf.mxu0
    %v3971 = vadd.f32 %v3744, %v3970
    %v3972 = vpop.f32.mrf.mxu0
    %v3973 = vadd.f32 %v3744, %v3972
    %3974 = vmatmul.bf16.gmra.mxu0 %v3769
    %v3975 = vpop.f32.mrf.mxu0
    %v3976 = vadd.f32 %v3744, %v3975
    %v3977 = vpop.f32.mrf.mxu0
    %v3978 = vadd.f32 %v3744, %v3977
    %3979 = vmatmul.bf16.gmra.mxu0 %v3772
    %v3980 = vpop.f32.mrf.mxu0
    %v3981 = vadd.f32 %v3744, %v3980
    %v3982 = vpop.f32.mrf.mxu0
    %v3983 = vadd.f32 %v3744, %v3982
    %3984 = vmatmul.bf16.gmra.mxu0 %v3775
    %v3985 = vpop.f32.mrf.mxu0
    %v3986 = vadd.f32 %v3744, %v3985
    %v3987 = vpop.f32.mrf.mxu0
    %v3988 = vadd.f32 %v3744, %v3987
    %3989 = vmatmul.bf16.gmra.mxu0 %v3778
    %v3990 = vpop.f32.mrf.mxu0
    %v3991 = vadd.f32 %v3744, %v3990
    %v3992 = vpop.f32.mrf.mxu0
    %v3993 = vadd.f32 %v3744, %v3992
    %3994 = vmatmul.bf16.gmra.mxu0 %v3781
    %v3995 = vpop.f32.mrf.mxu0
    %v3996 = vadd.f32 %v3744, %v3995
    %v3997 = vpop.f32.mrf.mxu0
    %v3998 = vadd.f32 %v3744, %v3997
    %3999 = vmatmul.bf16.gmra.mxu0 %v3784
    %v4000 = vpop.f32.mrf.mxu0
    %v4001 = vadd.f32 %v3744, %v4000
    %v4002 = vpop.f32.mrf.mxu0
    %v4003 = vadd.f32 %v3744, %v4002
    %4004 = vmatmul.bf16.gmra.mxu0 %v3787
    %v4005 = vpop.f32.mrf.mxu0
    %v4006 = vadd.f32 %v3744, %v4005
    %v4007 = vpop.f32.mrf.mxu0
    %v4008 = vadd.f32 %v3744, %v4007
    %4009 = vmatmul.bf16.gmra.mxu0 %v3790
    %v4010 = vpop.f32.mrf.mxu0
    %v4011 = vadd.f32 %v3744, %v4010
    %v4012 = vpop.f32.mrf.mxu0
    %v4013 = vadd.f32 %v3744, %v4012
    %4014 = vmatmul.bf16.gmra.mxu0 %v3793
    %v4015 = vpop.f32.mrf.mxu0
    %v4016 = vadd.f32 %v3744, %v4015
    %v4017 = vpop.f32.mrf.mxu0
    %v4018 = vadd.f32 %v3744, %v4017
    %4019 = vmatmul.bf16.gmra.mxu0 %v3796
    %v4020 = vpop.f32.mrf.mxu0
    %v4021 = vadd.f32 %v3744, %v4020
    %v4022 = vpop.f32.mrf.mxu0
    %v4023 = vadd.f32 %v3744, %v4022
    %4024 = vmatmul.bf16.gmra.mxu0 %v3799
    %v4025 = vpop.f32.mrf.mxu0
    %v4026 = vadd.f32 %v3744, %v4025
    %v4027 = vpop.f32.mrf.mxu0
    %v4028 = vadd.f32 %v3744, %v4027
    %4029 = vmatmul.bf16.gmra.mxu0 %v3802
    %v4030 = vpop.f32.mrf.mxu0
    %v4031 = vadd.f32 %v3744, %v4030
    %v4032 = vpop.f32.mrf.mxu0
    %v4033 = vadd.f32 %v3744, %v4032
    %4034 = vmatmul.bf16.gmra.mxu0 %v3805
    %v4035 = vpop.f32.mrf.mxu0
    %v4036 = vadd.f32 %v3744, %v4035
    %v4037 = vpop.f32.mrf.mxu0
    %v4038 = vadd.f32 %v3744, %v4037
    %4039 = vmatmul.bf16.gmra.mxu0 %v3808
    %v4040 = vpop.f32.mrf.mxu0
    %v4041 = vadd.f32 %v3744, %v4040
    %v4042 = vpop.f32.mrf.mxu0
    %v4043 = vadd.f32 %v3744, %v4042
    %4044 = vmatmul.bf16.gmra.mxu0 %v3811
    %v4045 = vpop.f32.mrf.mxu0
    %v4046 = vadd.f32 %v3744, %v4045
    %v4047 = vpop.f32.mrf.mxu0
    %v4048 = vadd.f32 %v3744, %v4047
    %4049 = vmatmul.bf16.gmra.mxu0 %v3814
    %v4050 = vpop.f32.mrf.mxu0
    %v4051 = vadd.f32 %v3744, %v4050
    %v4052 = vpop.f32.mrf.mxu0
    %v4053 = vadd.f32 %v3744, %v4052
    %4054 = vmatmul.bf16.gmra.mxu0 %v3817
    %v4055 = vpop.f32.mrf.mxu0
    %v4056 = vadd.f32 %v3744, %v4055
    %v4057 = vpop.f32.mrf.mxu0
    %v4058 = vadd.f32 %v3744, %v4057
    %4059 = vmatmul.bf16.gmra.mxu0 %v3820
    %v4060 = vpop.f32.mrf.mxu0
    %v4061 = vadd.f32 %v3744, %v4060
    %v4062 = vpop.f32.mrf.mxu0
    %v4063 = vadd.f32 %v3744, %v4062
    %4064 = vmatmul.bf16.gmra.mxu0 %v3823
    %v4065 = vpop.f32.mrf.mxu0
    %v4066 = vadd.f32 %v3744, %v4065
    %v4067 = vpop.f32.mrf.mxu0
    %v4068 = vadd.f32 %v3744, %v4067
    %4069 = vmatmul.bf16.gmra.mxu0 %v3826
    %v4070 = vpop.f32.mrf.mxu0
    %v4071 = vadd.f32 %v3744, %v4070
    %v4072 = vpop.f32.mrf.mxu0
    %v4073 = vadd.f32 %v3744, %v4072
    %4074 = vmatmul.bf16.gmra.mxu0 %v3829
    %v4075 = vpop.f32.mrf.mxu0
    %v4076 = vadd.f32 %v3744, %v4075
    %v4077 = vpop.f32.mrf.mxu0
    %v4078 = vadd.f32 %v3744, %v4077
    %4079 = vmatmul.bf16.gmra.mxu0 %v3832
    %v4080 = vpop.f32.mrf.mxu0
    %v4081 = vadd.f32 %v3744, %v4080
    %v4082 = vpop.f32.mrf.mxu0
    %v4083 = vadd.f32 %v3744, %v4082
    %4084 = vmatmul.bf16.gmra.mxu0 %v3835
    %v4085 = vpop.f32.mrf.mxu0
    %v4086 = vadd.f32 %v3744, %v4085
    %v4087 = vpop.f32.mrf.mxu0
    %v4088 = vadd.f32 %v3744, %v4087
    %4089 = vmatmul.bf16.gmra.mxu0 %v3838
    %v4090 = vpop.f32.mrf.mxu0
    %v4091 = vadd.f32 %v3744, %v4090
    %v4092 = vpop.f32.mrf.mxu0
    %v4093 = vadd.f32 %v3744, %v4092
    %4094 = vmatmul.bf16.gmra.mxu0 %v3841
    %v4095 = vpop.f32.mrf.mxu0
    %v4096 = vadd.f32 %v3744, %v4095
    %v4097 = vpop.f32.mrf.mxu0
    %v4098 = vadd.f32 %v3744, %v4097
    %4099 = vmatmul.bf16.gmra.mxu0 %v3844
    %v4100 = vpop.f32.mrf.mxu0
    %v4101 = vadd.f32 %v3744, %v4100
    %v4102 = vpop.f32.mrf.mxu0
    %v4103 = vadd.f32 %v3744, %v4102
    %4104 = vmatmul.bf16.gmra.mxu0 %v3847
    %v4105 = vpop.f32.mrf.mxu0
    %v4106 = vadd.f32 %v3744, %v4105
    %v4107 = vpop.f32.mrf.mxu0
    %v4108 = vadd.f32 %v3744, %v4107
    %4109 = vmatmul.bf16.gmra.mxu0 %v3850
    %v4110 = vpop.f32.mrf.mxu0
    %v4111 = vadd.f32 %v3744, %v4110
    %v4112 = vpop.f32.mrf.mxu0
    %v4113 = vadd.f32 %v3744, %v4112
    %4114 = vmatmul.bf16.gmra.mxu0 %v3853
    %v4115 = vpop.f32.mrf.mxu0
    %v4116 = vadd.f32 %v3744, %v4115
    %v4117 = vpop.f32.mrf.mxu0
    %v4118 = vadd.f32 %v3744, %v4117
    %4119 = vmatmul.bf16.gmra.mxu0 %v3856
    %v4120 = vpop.f32.mrf.mxu0
    %v4121 = vadd.f32 %v3744, %v4120
    %v4122 = vpop.f32.mrf.mxu0
    %v4123 = vadd.f32 %v3744, %v4122
    %4124 = vmatmul.bf16.gmra.mxu0 %v3859
    %v4125 = vpop.f32.mrf.mxu0
    %v4126 = vadd.f32 %v3744, %v4125
    %v4127 = vpop.f32.mrf.mxu0
    %v4128 = vadd.f32 %v3744, %v4127
    %4129 = vmatmul.bf16.gmra.mxu0 %v3862
    %v4130 = vpop.f32.mrf.mxu0
    %v4131 = vadd.f32 %v3744, %v4130
    %v4132 = vpop.f32.mrf.mxu0
    %v4133 = vadd.f32 %v3744, %v4132
    %4134 = vmatmul.bf16.gmra.mxu0 %v3865
    %v4135 = vpop.f32.mrf.mxu0
    %v4136 = vadd.f32 %v3744, %v4135
    %v4137 = vpop.f32.mrf.mxu0
    %v4138 = vadd.f32 %v3744, %v4137
    %4139 = vmatmul.bf16.gmra.mxu0 %v3868
    %v4140 = vpop.f32.mrf.mxu0
    %v4141 = vadd.f32 %v3744, %v4140
    %v4142 = vpop.f32.mrf.mxu0
    %v4143 = vadd.f32 %v3744, %v4142
    %4144 = vmatmul.bf16.gmra.mxu0 %v3871
    %v4145 = vpop.f32.mrf.mxu0
    %v4146 = vadd.f32 %v3744, %v4145
    %v4147 = vpop.f32.mrf.mxu0
    %v4148 = vadd.f32 %v3744, %v4147
    %4149 = vmatmul.bf16.gmra.mxu0 %v3874
    %v4150 = vpop.f32.mrf.mxu0
    %v4151 = vadd.f32 %v3744, %v4150
    %v4152 = vpop.f32.mrf.mxu0
    %v4153 = vadd.f32 %v3744, %v4152
    %4154 = vmatmul.bf16.gmra.mxu0 %v3877
    %v4155 = vpop.f32.mrf.mxu0
    %v4156 = vadd.f32 %v3744, %v4155
    %v4157 = vpop.f32.mrf.mxu0
    %v4158 = vadd.f32 %v3744, %v4157
    %4159 = vmatmul.bf16.gmra.mxu0 %v3880
    %v4160 = vpop.f32.mrf.mxu0
    %v4161 = vadd.f32 %v3744, %v4160
    %v4162 = vpop.f32.mrf.mxu0
    %v4163 = vadd.f32 %v3744, %v4162
    %4164 = vmatmul.bf16.gmra.mxu0 %v3883
    %v4165 = vpop.f32.mrf.mxu0
    %v4166 = vadd.f32 %v3744, %v4165
    %v4167 = vpop.f32.mrf.mxu0
    %v4168 = vadd.f32 %v3744, %v4167
    %4169 = vmatmul.bf16.gmra.mxu0 %v3886
    %v4170 = vpop.f32.mrf.mxu0
    %v4171 = vadd.f32 %v3744, %v4170
    %v4172 = vpop.f32.mrf.mxu0
    %v4173 = vadd.f32 %v3744, %v4172
    %4174 = vmatmul.bf16.gmra.mxu0 %v3889
    %v4175 = vpop.f32.mrf.mxu0
    %v4176 = vadd.f32 %v3744, %v4175
    %v4177 = vpop.f32.mrf.mxu0
    %v4178 = vadd.f32 %v3744, %v4177
    %4179 = vmatmul.bf16.gmra.mxu0 %v3892
    %v4180 = vpop.f32.mrf.mxu0
    %v4181 = vadd.f32 %v3744, %v4180
    %v4182 = vpop.f32.mrf.mxu0
    %v4183 = vadd.f32 %v3744, %v4182
    %4184 = vmatmul.bf16.gmra.mxu0 %v3895
    %v4185 = vpop.f32.mrf.mxu0
    %v4186 = vadd.f32 %v3744, %v4185
    %v4187 = vpop.f32.mrf.mxu0
    %v4188 = vadd.f32 %v3744, %v4187
    %4189 = vmatmul.bf16.gmra.mxu0 %v3898
    %v4190 = vpop.f32.mrf.mxu0
    %v4191 = vadd.f32 %v3744, %v4190
    %v4192 = vpop.f32.mrf.mxu0
    %v4193 = vadd.f32 %v3744, %v4192
    %4194 = vmatmul.bf16.gmra.mxu0 %v3901
    %v4195 = vpop.f32.mrf.mxu0
    %v4196 = vadd.f32 %v3744, %v4195
    %v4197 = vpop.f32.mrf.mxu0
    %v4198 = vadd.f32 %v3744, %v4197
    %4199 = vmatmul.bf16.gmra.mxu0 %v3904
    %v4200 = vpop.f32.mrf.mxu0
    %v4201 = vadd.f32 %v3744, %v4200
    %v4202 = vpop.f32.mrf.mxu0
    %v4203 = vadd.f32 %v3744, %v4202
    %4204 = vmatmul.bf16.gmra.mxu0 %v3907
    %v4205 = vpop.f32.mrf.mxu0
    %v4206 = vadd.f32 %v3744, %v4205
    %v4207 = vpop.f32.mrf.mxu0
    %v4208 = vadd.f32 %v3744, %v4207
    %4209 = vmatmul.bf16.gmra.mxu0 %v3910
    %v4210 = vpop.f32.mrf.mxu0
    %v4211 = vadd.f32 %v3744, %v4210
    %v4212 = vpop.f32.mrf.mxu0
    %v4213 = vadd.f32 %v3744, %v4212
    %4214 = vmatmul.bf16.gmra.mxu0 %v3913
    %v4215 = vpop.f32.mrf.mxu0
    %v4216 = vadd.f32 %v3744, %v4215
    %v4217 = vpop.f32.mrf.mxu0
    %v4218 = vadd.f32 %v3744, %v4217
    %4219 = vmatmul.bf16.gmra.mxu0 %v3916
    %v4220 = vpop.f32.mrf.mxu0
    %v4221 = vadd.f32 %v3744, %v4220
    %v4222 = vpop.f32.mrf.mxu0
    %v4223 = vadd.f32 %v3744, %v4222
    %4224 = vmatmul.bf16.gmra.mxu0 %v3919
    %v4225 = vpop.f32.mrf.mxu0
    %v4226 = vadd.f32 %v3744, %v4225
    %v4227 = vpop.f32.mrf.mxu0
    %v4228 = vadd.f32 %v3744, %v4227
    %4229 = vmatmul.bf16.gmra.mxu0 %v3922
    %v4230 = vpop.f32.mrf.mxu0
    %v4231 = vadd.f32 %v3744, %v4230
    %v4232 = vpop.f32.mrf.mxu0
    %v4233 = vadd.f32 %v3744, %v4232
    %4234 = vmatmul.bf16.gmra.mxu0 %v3925
    %v4235 = vpop.f32.mrf.mxu0
    %v4236 = vadd.f32 %v3744, %v4235
    %v4237 = vpop.f32.mrf.mxu0
    %v4238 = vadd.f32 %v3744, %v4237
    %4239 = vmatmul.bf16.gmra.mxu0 %v3928
    %v4240 = vpop.f32.mrf.mxu0
    %v4241 = vadd.f32 %v3744, %v4240
    %v4242 = vpop.f32.mrf.mxu0
    %v4243 = vadd.f32 %v3744, %v4242
    %4244 = vmatmul.bf16.gmra.mxu0 %v3931
    %v4245 = vpop.f32.mrf.mxu0
    %v4246 = vadd.f32 %v3744, %v4245
    %v4247 = vpop.f32.mrf.mxu0
    %v4248 = vadd.f32 %v3744, %v4247
    %4249 = vmatmul.bf16.gmra.mxu0 %v3934
    %v4250 = vpop.f32.mrf.mxu0
    %v4251 = vadd.f32 %v3744, %v4250
    %v4252 = vpop.f32.mrf.mxu0
    %v4253 = vadd.f32 %v3744, %v4252
    %4254 = vmatmul.bf16.gmra.mxu0 %v3937
    %v4255 = vpop.f32.mrf.mxu0
    %v4256 = vadd.f32 %v3744, %v4255
    %v4257 = vpop.f32.mrf.mxu0
    %v4258 = vadd.f32 %v3744, %v4257
    %4259 = vmatmul.bf16.gmra.mxu0 %v3940
    %v4260 = vpop.f32.mrf.mxu0
    %v4261 = vadd.f32 %v3744, %v4260
    %v4262 = vpop.f32.mrf.mxu0
    %v4263 = vadd.f32 %v3744, %v4262
    %4264 = vmatmul.bf16.gmra.mxu0 %v3943
    %v4265 = vpop.f32.mrf.mxu0
    %v4266 = vadd.f32 %v3744, %v4265
    %v4267 = vpop.f32.mrf.mxu0
    %v4268 = vadd.f32 %v3744, %v4267
    %4269 = vmatmul.bf16.gmra.mxu0 %v3946
    %v4270 = vpop.f32.mrf.mxu0
    %v4271 = vadd.f32 %v3744, %v4270
    %v4272 = vpop.f32.mrf.mxu0
    %v4273 = vadd.f32 %v3744, %v4272
    %4274 = vmatmul.bf16.gmra.mxu0 %v3949
    %v4275 = vpop.f32.mrf.mxu0
    %v4276 = vadd.f32 %v3744, %v4275
    %v4277 = vpop.f32.mrf.mxu0
    %v4278 = vadd.f32 %v3744, %v4277
    %4279 = vdwg.mxu0
    %v4280 = vpack.c.bf16 %v3961, %v3961
    %v4281 = vpack.c.bf16 %v3963, %v3963
    %v4282 = vpack.c.bf16 %v3966, %v3966
    %v4283 = vpack.c.bf16 %v3968, %v3968
    %v4284 = vpack.c.bf16 %v3971, %v3971
    %v4285 = vpack.c.bf16 %v3973, %v3973
    %v4286 = vpack.c.bf16 %v3976, %v3976
    %v4287 = vpack.c.bf16 %v3978, %v3978
    %v4288 = vpack.c.bf16 %v3981, %v3981
    %v4289 = vpack.c.bf16 %v3983, %v3983
    %v4290 = vpack.c.bf16 %v3986, %v3986
    %v4291 = vpack.c.bf16 %v3988, %v3988
    %v4292 = vpack.c.bf16 %v3991, %v3991
    %v4293 = vpack.c.bf16 %v3993, %v3993
    %v4294 = vpack.c.bf16 %v3996, %v3996
    %v4295 = vpack.c.bf16 %v3998, %v3998
    %v4296 = vpack.c.bf16 %v4001, %v4001
    %v4297 = vpack.c.bf16 %v4003, %v4003
    %v4298 = vpack.c.bf16 %v4006, %v4006
    %v4299 = vpack.c.bf16 %v4008, %v4008
    %v4300 = vpack.c.bf16 %v4011, %v4011
    %v4301 = vpack.c.bf16 %v4013, %v4013
    %v4302 = vpack.c.bf16 %v4016, %v4016
    %v4303 = vpack.c.bf16 %v4018, %v4018
    %v4304 = vpack.c.bf16 %v4021, %v4021
    %v4305 = vpack.c.bf16 %v4023, %v4023
    %v4306 = vpack.c.bf16 %v4026, %v4026
    %v4307 = vpack.c.bf16 %v4028, %v4028
    %v4308 = vpack.c.bf16 %v4031, %v4031
    %v4309 = vpack.c.bf16 %v4033, %v4033
    %v4310 = vpack.c.bf16 %v4036, %v4036
    %v4311 = vpack.c.bf16 %v4038, %v4038
    %v4312 = vpack.c.bf16 %v4041, %v4041
    %v4313 = vpack.c.bf16 %v4043, %v4043
    %v4314 = vpack.c.bf16 %v4046, %v4046
    %v4315 = vpack.c.bf16 %v4048, %v4048
    %v4316 = vpack.c.bf16 %v4051, %v4051
    %v4317 = vpack.c.bf16 %v4053, %v4053
    %v4318 = vpack.c.bf16 %v4056, %v4056
    %v4319 = vpack.c.bf16 %v4058, %v4058
    %v4320 = vpack.c.bf16 %v4061, %v4061
    %v4321 = vpack.c.bf16 %v4063, %v4063
    %v4322 = vpack.c.bf16 %v4066, %v4066
    %v4323 = vpack.c.bf16 %v4068, %v4068
    %v4324 = vpack.c.bf16 %v4071, %v4071
    %v4325 = vpack.c.bf16 %v4073, %v4073
    %v4326 = vpack.c.bf16 %v4076, %v4076
    %v4327 = vpack.c.bf16 %v4078, %v4078
    %v4328 = vpack.c.bf16 %v4081, %v4081
    %v4329 = vpack.c.bf16 %v4083, %v4083
    %v4330 = vpack.c.bf16 %v4086, %v4086
    %v4331 = vpack.c.bf16 %v4088, %v4088
    %v4332 = vpack.c.bf16 %v4091, %v4091
    %v4333 = vpack.c.bf16 %v4093, %v4093
    %v4334 = vpack.c.bf16 %v4096, %v4096
    %v4335 = vpack.c.bf16 %v4098, %v4098
    %v4336 = vpack.c.bf16 %v4101, %v4101
    %v4337 = vpack.c.bf16 %v4103, %v4103
    %v4338 = vpack.c.bf16 %v4106, %v4106
    %v4339 = vpack.c.bf16 %v4108, %v4108
    %v4340 = vpack.c.bf16 %v4111, %v4111
    %v4341 = vpack.c.bf16 %v4113, %v4113
    %v4342 = vpack.c.bf16 %v4116, %v4116
    %v4343 = vpack.c.bf16 %v4118, %v4118
    %v4344 = vpack.c.bf16 %v4121, %v4121
    %v4345 = vpack.c.bf16 %v4123, %v4123
    %v4346 = vpack.c.bf16 %v4126, %v4126
    %v4347 = vpack.c.bf16 %v4128, %v4128
    %v4348 = vpack.c.bf16 %v4131, %v4131
    %v4349 = vpack.c.bf16 %v4133, %v4133
    %v4350 = vpack.c.bf16 %v4136, %v4136
    %v4351 = vpack.c.bf16 %v4138, %v4138
    %v4352 = vpack.c.bf16 %v4141, %v4141
    %v4353 = vpack.c.bf16 %v4143, %v4143
    %v4354 = vpack.c.bf16 %v4146, %v4146
    %v4355 = vpack.c.bf16 %v4148, %v4148
    %v4356 = vpack.c.bf16 %v4151, %v4151
    %v4357 = vpack.c.bf16 %v4153, %v4153
    %v4358 = vpack.c.bf16 %v4156, %v4156
    %v4359 = vpack.c.bf16 %v4158, %v4158
    %v4360 = vpack.c.bf16 %v4161, %v4161
    %v4361 = vpack.c.bf16 %v4163, %v4163
    %v4362 = vpack.c.bf16 %v4166, %v4166
    %v4363 = vpack.c.bf16 %v4168, %v4168
    %v4364 = vpack.c.bf16 %v4171, %v4171
    %v4365 = vpack.c.bf16 %v4173, %v4173
    %v4366 = vpack.c.bf16 %v4176, %v4176
    %v4367 = vpack.c.bf16 %v4178, %v4178
    %v4368 = vpack.c.bf16 %v4181, %v4181
    %v4369 = vpack.c.bf16 %v4183, %v4183
    %v4370 = vpack.c.bf16 %v4186, %v4186
    %v4371 = vpack.c.bf16 %v4188, %v4188
    %v4372 = vpack.c.bf16 %v4191, %v4191
    %v4373 = vpack.c.bf16 %v4193, %v4193
    %v4374 = vpack.c.bf16 %v4196, %v4196
    %v4375 = vpack.c.bf16 %v4198, %v4198
    %v4376 = vpack.c.bf16 %v4201, %v4201
    %v4377 = vpack.c.bf16 %v4203, %v4203
    %v4378 = vpack.c.bf16 %v4206, %v4206
    %v4379 = vpack.c.bf16 %v4208, %v4208
    %v4380 = vpack.c.bf16 %v4211, %v4211
    %v4381 = vpack.c.bf16 %v4213, %v4213
    %v4382 = vpack.c.bf16 %v4216, %v4216
    %v4383 = vpack.c.bf16 %v4218, %v4218
    %v4384 = vpack.c.bf16 %v4221, %v4221
    %v4385 = vpack.c.bf16 %v4223, %v4223
    %v4386 = vpack.c.bf16 %v4226, %v4226
    %v4387 = vpack.c.bf16 %v4228, %v4228
    %v4388 = vpack.c.bf16 %v4231, %v4231
    %v4389 = vpack.c.bf16 %v4233, %v4233
    %v4390 = vpack.c.bf16 %v4236, %v4236
    %v4391 = vpack.c.bf16 %v4238, %v4238
    %v4392 = vpack.c.bf16 %v4241, %v4241
    %v4393 = vpack.c.bf16 %v4243, %v4243
    %v4394 = vpack.c.bf16 %v4246, %v4246
    %v4395 = vpack.c.bf16 %v4248, %v4248
    %v4396 = vpack.c.bf16 %v4251, %v4251
    %v4397 = vpack.c.bf16 %v4253, %v4253
    %v4398 = vpack.c.bf16 %v4256, %v4256
    %v4399 = vpack.c.bf16 %v4258, %v4258
    %v4400 = vpack.c.bf16 %v4261, %v4261
    %v4401 = vpack.c.bf16 %v4263, %v4263
    %v4402 = vpack.c.bf16 %v4266, %v4266
    %v4403 = vpack.c.bf16 %v4268, %v4268
    %v4404 = vpack.c.bf16 %v4271, %v4271
    %v4405 = vpack.c.bf16 %v4273, %v4273
    %v4406 = vpack.c.bf16 %v4276, %v4276
    %v4407 = vpack.c.bf16 %v4278, %v4278
    %vm4408 = vcmask 125952
    %4409 = vst.msk [vmem:[%s98] sm:$0xf] %vm4408, %v4280
    %4410 = vst.msk [vmem:[%s98 + $0x4] sm:$0xf] %vm4408, %v4281
    %4411 = vst.msk [vmem:[%s98 + $0x8] sm:$0xf] %vm4408, %v4282
    %4412 = vst.msk [vmem:[%s98 + $0xc] sm:$0xf] %vm4408, %v4283
    %4413 = vst.msk [vmem:[%s98 + $0x10] sm:$0xf] %vm4408, %v4284
    %4414 = vst.msk [vmem:[%s98 + $0x14] sm:$0xf] %vm4408, %v4285
    %4415 = vst.msk [vmem:[%s98 + $0x18] sm:$0xf] %vm4408, %v4286
    %4416 = vst.msk [vmem:[%s98 + $0x1c] sm:$0xf] %vm4408, %v4287
    %4417 = vst.msk [vmem:[%s98 + $0x20] sm:$0xf] %vm4408, %v4288
    %4418 = vst.msk [vmem:[%s98 + $0x24] sm:$0xf] %vm4408, %v4289
    %4419 = vst.msk [vmem:[%s98 + $0x28] sm:$0xf] %vm4408, %v4290
    %4420 = vst.msk [vmem:[%s98 + $0x2c] sm:$0xf] %vm4408, %v4291
    %4421 = vst.msk [vmem:[%s98 + $0x30] sm:$0xf] %vm4408, %v4292
    %4422 = vst.msk [vmem:[%s98 + $0x34] sm:$0xf] %vm4408, %v4293
    %4423 = vst.msk [vmem:[%s98 + $0x38] sm:$0xf] %vm4408, %v4294
    %4424 = vst.msk [vmem:[%s98 + $0x3c] sm:$0xf] %vm4408, %v4295
    %4425 = vst.msk [vmem:[%s98 + $0x40] sm:$0xf] %vm4408, %v4296
    %4426 = vst.msk [vmem:[%s98 + $0x44] sm:$0xf] %vm4408, %v4297
    %4427 = vst.msk [vmem:[%s98 + $0x48] sm:$0xf] %vm4408, %v4298
    %4428 = vst.msk [vmem:[%s98 + $0x4c] sm:$0xf] %vm4408, %v4299
    %4429 = vst.msk [vmem:[%s98 + $0x50] sm:$0xf] %vm4408, %v4300
    %4430 = vst.msk [vmem:[%s98 + $0x54] sm:$0xf] %vm4408, %v4301
    %4431 = vst.msk [vmem:[%s98 + $0x58] sm:$0xf] %vm4408, %v4302
    %4432 = vst.msk [vmem:[%s98 + $0x5c] sm:$0xf] %vm4408, %v4303
    %4433 = vst.msk [vmem:[%s98 + $0x60] sm:$0xf] %vm4408, %v4304
    %4434 = vst.msk [vmem:[%s98 + $0x64] sm:$0xf] %vm4408, %v4305
    %4435 = vst.msk [vmem:[%s98 + $0x68] sm:$0xf] %vm4408, %v4306
    %4436 = vst.msk [vmem:[%s98 + $0x6c] sm:$0xf] %vm4408, %v4307
    %4437 = vst.msk [vmem:[%s98 + $0x70] sm:$0xf] %vm4408, %v4308
    %4438 = vst.msk [vmem:[%s98 + $0x74] sm:$0xf] %vm4408, %v4309
    %4439 = vst.msk [vmem:[%s98 + $0x78] sm:$0xf] %vm4408, %v4310
    %4440 = vst.msk [vmem:[%s98 + $0x7c] sm:$0xf] %vm4408, %v4311
    %4441 = vst.msk [vmem:[%s98 + $0x80] sm:$0xf] %vm4408, %v4312
    %4442 = vst.msk [vmem:[%s98 + $0x84] sm:$0xf] %vm4408, %v4313
    %4443 = vst.msk [vmem:[%s98 + $0x88] sm:$0xf] %vm4408, %v4314
    %4444 = vst.msk [vmem:[%s98 + $0x8c] sm:$0xf] %vm4408, %v4315
    %4445 = vst.msk [vmem:[%s98 + $0x90] sm:$0xf] %vm4408, %v4316
    %4446 = vst.msk [vmem:[%s98 + $0x94] sm:$0xf] %vm4408, %v4317
    %4447 = vst.msk [vmem:[%s98 + $0x98] sm:$0xf] %vm4408, %v4318
    %4448 = vst.msk [vmem:[%s98 + $0x9c] sm:$0xf] %vm4408, %v4319
    %4449 = vst.msk [vmem:[%s98 + $0xa0] sm:$0xf] %vm4408, %v4320
    %4450 = vst.msk [vmem:[%s98 + $0xa4] sm:$0xf] %vm4408, %v4321
    %4451 = vst.msk [vmem:[%s98 + $0xa8] sm:$0xf] %vm4408, %v4322
    %4452 = vst.msk [vmem:[%s98 + $0xac] sm:$0xf] %vm4408, %v4323
    %4453 = vst.msk [vmem:[%s98 + $0xb0] sm:$0xf] %vm4408, %v4324
    %4454 = vst.msk [vmem:[%s98 + $0xb4] sm:$0xf] %vm4408, %v4325
    %4455 = vst.msk [vmem:[%s98 + $0xb8] sm:$0xf] %vm4408, %v4326
    %4456 = vst.msk [vmem:[%s98 + $0xbc] sm:$0xf] %vm4408, %v4327
    %4457 = vst.msk [vmem:[%s98 + $0xc0] sm:$0xf] %vm4408, %v4328
    %4458 = vst.msk [vmem:[%s98 + $0xc4] sm:$0xf] %vm4408, %v4329
    %4459 = vst.msk [vmem:[%s98 + $0xc8] sm:$0xf] %vm4408, %v4330
    %4460 = vst.msk [vmem:[%s98 + $0xcc] sm:$0xf] %vm4408, %v4331
    %4461 = vst.msk [vmem:[%s98 + $0xd0] sm:$0xf] %vm4408, %v4332
    %4462 = vst.msk [vmem:[%s98 + $0xd4] sm:$0xf] %vm4408, %v4333
    %4463 = vst.msk [vmem:[%s98 + $0xd8] sm:$0xf] %vm4408, %v4334
    %4464 = vst.msk [vmem:[%s98 + $0xdc] sm:$0xf] %vm4408, %v4335
    %4465 = vst.msk [vmem:[%s98 + $0xe0] sm:$0xf] %vm4408, %v4336
    %4466 = vst.msk [vmem:[%s98 + $0xe4] sm:$0xf] %vm4408, %v4337
    %4467 = vst.msk [vmem:[%s98 + $0xe8] sm:$0xf] %vm4408, %v4338
    %4468 = vst.msk [vmem:[%s98 + $0xec] sm:$0xf] %vm4408, %v4339
    %4469 = vst.msk [vmem:[%s98 + $0xf0] sm:$0xf] %vm4408, %v4340
    %4470 = vst.msk [vmem:[%s98 + $0xf4] sm:$0xf] %vm4408, %v4341
    %4471 = vst.msk [vmem:[%s98 + $0xf8] sm:$0xf] %vm4408, %v4342
    %4472 = vst.msk [vmem:[%s98 + $0xfc] sm:$0xf] %vm4408, %v4343
    %4473 = vst.msk [vmem:[%s98 + $0x100] sm:$0xf] %vm4408, %v4344
    %4474 = vst.msk [vmem:[%s98 + $0x104] sm:$0xf] %vm4408, %v4345
    %4475 = vst.msk [vmem:[%s98 + $0x108] sm:$0xf] %vm4408, %v4346
    %4476 = vst.msk [vmem:[%s98 + $0x10c] sm:$0xf] %vm4408, %v4347
    %4477 = vst.msk [vmem:[%s98 + $0x110] sm:$0xf] %vm4408, %v4348
    %4478 = vst.msk [vmem:[%s98 + $0x114] sm:$0xf] %vm4408, %v4349
    %4479 = vst.msk [vmem:[%s98 + $0x118] sm:$0xf] %vm4408, %v4350
    %4480 = vst.msk [vmem:[%s98 + $0x11c] sm:$0xf] %vm4408, %v4351
    %4481 = vst.msk [vmem:[%s98 + $0x120] sm:$0xf] %vm4408, %v4352
    %4482 = vst.msk [vmem:[%s98 + $0x124] sm:$0xf] %vm4408, %v4353
    %4483 = vst.msk [vmem:[%s98 + $0x128] sm:$0xf] %vm4408, %v4354
    %4484 = vst.msk [vmem:[%s98 + $0x12c] sm:$0xf] %vm4408, %v4355
    %4485 = vst.msk [vmem:[%s98 + $0x130] sm:$0xf] %vm4408, %v4356
    %4486 = vst.msk [vmem:[%s98 + $0x134] sm:$0xf] %vm4408, %v4357
    %4487 = vst.msk [vmem:[%s98 + $0x138] sm:$0xf] %vm4408, %v4358
    %4488 = vst.msk [vmem:[%s98 + $0x13c] sm:$0xf] %vm4408, %v4359
    %4489 = vst.msk [vmem:[%s98 + $0x140] sm:$0xf] %vm4408, %v4360
    %4490 = vst.msk [vmem:[%s98 + $0x144] sm:$0xf] %vm4408, %v4361
    %4491 = vst.msk [vmem:[%s98 + $0x148] sm:$0xf] %vm4408, %v4362
    %4492 = vst.msk [vmem:[%s98 + $0x14c] sm:$0xf] %vm4408, %v4363
    %4493 = vst.msk [vmem:[%s98 + $0x150] sm:$0xf] %vm4408, %v4364
    %4494 = vst.msk [vmem:[%s98 + $0x154] sm:$0xf] %vm4408, %v4365
    %4495 = vst.msk [vmem:[%s98 + $0x158] sm:$0xf] %vm4408, %v4366
    %4496 = vst.msk [vmem:[%s98 + $0x15c] sm:$0xf] %vm4408, %v4367
    %4497 = vst.msk [vmem:[%s98 + $0x160] sm:$0xf] %vm4408, %v4368
    %4498 = vst.msk [vmem:[%s98 + $0x164] sm:$0xf] %vm4408, %v4369
    %4499 = vst.msk [vmem:[%s98 + $0x168] sm:$0xf] %vm4408, %v4370
    %4500 = vst.msk [vmem:[%s98 + $0x16c] sm:$0xf] %vm4408, %v4371
    %4501 = vst.msk [vmem:[%s98 + $0x170] sm:$0xf] %vm4408, %v4372
    %4502 = vst.msk [vmem:[%s98 + $0x174] sm:$0xf] %vm4408, %v4373
    %4503 = vst.msk [vmem:[%s98 + $0x178] sm:$0xf] %vm4408, %v4374
    %4504 = vst.msk [vmem:[%s98 + $0x17c] sm:$0xf] %vm4408, %v4375
    %4505 = vst.msk [vmem:[%s98 + $0x180] sm:$0xf] %vm4408, %v4376
    %4506 = vst.msk [vmem:[%s98 + $0x184] sm:$0xf] %vm4408, %v4377
    %4507 = vst.msk [vmem:[%s98 + $0x188] sm:$0xf] %vm4408, %v4378
    %4508 = vst.msk [vmem:[%s98 + $0x18c] sm:$0xf] %vm4408, %v4379
    %4509 = vst.msk [vmem:[%s98 + $0x190] sm:$0xf] %vm4408, %v4380
    %4510 = vst.msk [vmem:[%s98 + $0x194] sm:$0xf] %vm4408, %v4381
    %4511 = vst.msk [vmem:[%s98 + $0x198] sm:$0xf] %vm4408, %v4382
    %4512 = vst.msk [vmem:[%s98 + $0x19c] sm:$0xf] %vm4408, %v4383
    %4513 = vst.msk [vmem:[%s98 + $0x1a0] sm:$0xf] %vm4408, %v4384
    %4514 = vst.msk [vmem:[%s98 + $0x1a4] sm:$0xf] %vm4408, %v4385
    %4515 = vst.msk [vmem:[%s98 + $0x1a8] sm:$0xf] %vm4408, %v4386
    %4516 = vst.msk [vmem:[%s98 + $0x1ac] sm:$0xf] %vm4408, %v4387
    %4517 = vst.msk [vmem:[%s98 + $0x1b0] sm:$0xf] %vm4408, %v4388
    %4518 = vst.msk [vmem:[%s98 + $0x1b4] sm:$0xf] %vm4408, %v4389
    %4519 = vst.msk [vmem:[%s98 + $0x1b8] sm:$0xf] %vm4408, %v4390
    %4520 = vst.msk [vmem:[%s98 + $0x1bc] sm:$0xf] %vm4408, %v4391
    %4521 = vst.msk [vmem:[%s98 + $0x1c0] sm:$0xf] %vm4408, %v4392
    %4522 = vst.msk [vmem:[%s98 + $0x1c4] sm:$0xf] %vm4408, %v4393
    %4523 = vst.msk [vmem:[%s98 + $0x1c8] sm:$0xf] %vm4408, %v4394
    %4524 = vst.msk [vmem:[%s98 + $0x1cc] sm:$0xf] %vm4408, %v4395
    %4525 = vst.msk [vmem:[%s98 + $0x1d0] sm:$0xf] %vm4408, %v4396
    %4526 = vst.msk [vmem:[%s98 + $0x1d4] sm:$0xf] %vm4408, %v4397
    %4527 = vst.msk [vmem:[%s98 + $0x1d8] sm:$0xf] %vm4408, %v4398
    %4528 = vst.msk [vmem:[%s98 + $0x1dc] sm:$0xf] %vm4408, %v4399
    %4529 = vst.msk [vmem:[%s98 + $0x1e0] sm:$0xf] %vm4408, %v4400
    %4530 = vst.msk [vmem:[%s98 + $0x1e4] sm:$0xf] %vm4408, %v4401
    %4531 = vst.msk [vmem:[%s98 + $0x1e8] sm:$0xf] %vm4408, %v4402
    %4532 = vst.msk [vmem:[%s98 + $0x1ec] sm:$0xf] %vm4408, %v4403
    %4533 = vst.msk [vmem:[%s98 + $0x1f0] sm:$0xf] %vm4408, %v4404
    %4534 = vst.msk [vmem:[%s98 + $0x1f4] sm:$0xf] %vm4408, %v4405
    %4535 = vst.msk [vmem:[%s98 + $0x1f8] sm:$0xf] %vm4408, %v4406
    %4536 = vst.msk [vmem:[%s98 + $0x1fc] sm:$0xf] %vm4408, %v4407
    %v4537 = vld [vmem:[#allocation5] sm:$0xff]
    %v4666 = vunpack.c.l.b16 %v4280
    %v4667 = vunpack.c.l.b16 %v4281
    %v4668 = vunpack.c.l.b16 %v4282
    %v4669 = vunpack.c.l.b16 %v4283
    %v4670 = vunpack.c.l.b16 %v4284
    %v4671 = vunpack.c.l.b16 %v4285
    %v4672 = vunpack.c.l.b16 %v4286
    %v4673 = vunpack.c.l.b16 %v4287
    %v4674 = vunpack.c.l.b16 %v4288
    %v4675 = vunpack.c.l.b16 %v4289
    %v4676 = vunpack.c.l.b16 %v4290
    %v4677 = vunpack.c.l.b16 %v4291
    %v4678 = vunpack.c.l.b16 %v4292
    %v4679 = vunpack.c.l.b16 %v4293
    %v4680 = vunpack.c.l.b16 %v4294
    %v4681 = vunpack.c.l.b16 %v4295
    %v4682 = vunpack.c.l.b16 %v4296
    %v4683 = vunpack.c.l.b16 %v4297
    %v4684 = vunpack.c.l.b16 %v4298
    %v4685 = vunpack.c.l.b16 %v4299
    %v4686 = vunpack.c.l.b16 %v4300
    %v4687 = vunpack.c.l.b16 %v4301
    %v4688 = vunpack.c.l.b16 %v4302
    %v4689 = vunpack.c.l.b16 %v4303
    %v4690 = vunpack.c.l.b16 %v4304
    %v4691 = vunpack.c.l.b16 %v4305
    %v4692 = vunpack.c.l.b16 %v4306
    %v4693 = vunpack.c.l.b16 %v4307
    %v4694 = vunpack.c.l.b16 %v4308
    %v4695 = vunpack.c.l.b16 %v4309
    %v4696 = vunpack.c.l.b16 %v4310
    %v4697 = vunpack.c.l.b16 %v4311
    %v4698 = vunpack.c.l.b16 %v4312
    %v4699 = vunpack.c.l.b16 %v4313
    %v4700 = vunpack.c.l.b16 %v4314
    %v4701 = vunpack.c.l.b16 %v4315
    %v4702 = vunpack.c.l.b16 %v4316
    %v4703 = vunpack.c.l.b16 %v4317
    %v4704 = vunpack.c.l.b16 %v4318
    %v4705 = vunpack.c.l.b16 %v4319
    %v4706 = vunpack.c.l.b16 %v4320
    %v4707 = vunpack.c.l.b16 %v4321
    %v4708 = vunpack.c.l.b16 %v4322
    %v4709 = vunpack.c.l.b16 %v4323
    %v4710 = vunpack.c.l.b16 %v4324
    %v4711 = vunpack.c.l.b16 %v4325
    %v4712 = vunpack.c.l.b16 %v4326
    %v4713 = vunpack.c.l.b16 %v4327
    %v4714 = vunpack.c.l.b16 %v4328
    %v4715 = vunpack.c.l.b16 %v4329
    %v4716 = vunpack.c.l.b16 %v4330
    %v4717 = vunpack.c.l.b16 %v4331
    %v4718 = vunpack.c.l.b16 %v4332
    %v4719 = vunpack.c.l.b16 %v4333
    %v4720 = vunpack.c.l.b16 %v4334
    %v4721 = vunpack.c.l.b16 %v4335
    %v4722 = vunpack.c.l.b16 %v4336
    %v4723 = vunpack.c.l.b16 %v4337
    %v4724 = vunpack.c.l.b16 %v4338
    %v4725 = vunpack.c.l.b16 %v4339
    %v4726 = vunpack.c.l.b16 %v4340
    %v4727 = vunpack.c.l.b16 %v4341
    %v4728 = vunpack.c.l.b16 %v4342
    %v4729 = vunpack.c.l.b16 %v4343
    %v4730 = vunpack.c.l.b16 %v4344
    %v4731 = vunpack.c.l.b16 %v4345
    %v4732 = vunpack.c.l.b16 %v4346
    %v4733 = vunpack.c.l.b16 %v4347
    %v4734 = vunpack.c.l.b16 %v4348
    %v4735 = vunpack.c.l.b16 %v4349
    %v4736 = vunpack.c.l.b16 %v4350
    %v4737 = vunpack.c.l.b16 %v4351
    %v4738 = vunpack.c.l.b16 %v4352
    %v4739 = vunpack.c.l.b16 %v4353
    %v4740 = vunpack.c.l.b16 %v4354
    %v4741 = vunpack.c.l.b16 %v4355
    %v4742 = vunpack.c.l.b16 %v4356
    %v4743 = vunpack.c.l.b16 %v4357
    %v4744 = vunpack.c.l.b16 %v4358
    %v4745 = vunpack.c.l.b16 %v4359
    %v4746 = vunpack.c.l.b16 %v4360
    %v4747 = vunpack.c.l.b16 %v4361
    %v4748 = vunpack.c.l.b16 %v4362
    %v4749 = vunpack.c.l.b16 %v4363
    %v4750 = vunpack.c.l.b16 %v4364
    %v4751 = vunpack.c.l.b16 %v4365
    %v4752 = vunpack.c.l.b16 %v4366
    %v4753 = vunpack.c.l.b16 %v4367
    %v4754 = vunpack.c.l.b16 %v4368
    %v4755 = vunpack.c.l.b16 %v4369
    %v4756 = vunpack.c.l.b16 %v4370
    %v4757 = vunpack.c.l.b16 %v4371
    %v4758 = vunpack.c.l.b16 %v4372
    %v4759 = vunpack.c.l.b16 %v4373
    %v4760 = vunpack.c.l.b16 %v4374
    %v4761 = vunpack.c.l.b16 %v4375
    %v4762 = vunpack.c.l.b16 %v4376
    %v4763 = vunpack.c.l.b16 %v4377
    %v4764 = vunpack.c.l.b16 %v4378
    %v4765 = vunpack.c.l.b16 %v4379
    %v4766 = vunpack.c.l.b16 %v4380
    %v4767 = vunpack.c.l.b16 %v4381
    %v4768 = vunpack.c.l.b16 %v4382
    %v4769 = vunpack.c.l.b16 %v4383
    %v4770 = vunpack.c.l.b16 %v4384
    %v4771 = vunpack.c.l.b16 %v4385
    %v4772 = vunpack.c.l.b16 %v4386
    %v4773 = vunpack.c.l.b16 %v4387
    %v4774 = vunpack.c.l.b16 %v4388
    %v4775 = vunpack.c.l.b16 %v4389
    %v4776 = vunpack.c.l.b16 %v4390
    %v4777 = vunpack.c.l.b16 %v4391
    %v4778 = vunpack.c.l.b16 %v4392
    %v4779 = vunpack.c.l.b16 %v4393
    %v4780 = vunpack.c.l.b16 %v4394
    %v4781 = vunpack.c.l.b16 %v4395
    %v4782 = vunpack.c.l.b16 %v4396
    %v4783 = vunpack.c.l.b16 %v4397
    %v4784 = vunpack.c.l.b16 %v4398
    %v4785 = vunpack.c.l.b16 %v4399
    %v4786 = vunpack.c.l.b16 %v4400
    %v4787 = vunpack.c.l.b16 %v4401
    %v4788 = vunpack.c.l.b16 %v4402
    %v4789 = vunpack.c.l.b16 %v4403
    %v4790 = vunpack.c.l.b16 %v4404
    %v4791 = vunpack.c.l.b16 %v4405
    %v4792 = vunpack.c.l.b16 %v4406
    %v4793 = vunpack.c.l.b16 %v4407
    %v4794 = vpack.c.b16 %v4667, %v4666
    %v4795 = vpack.c.b16 %v4669, %v4668
    %v4796 = vpack.c.b16 %v4671, %v4670
    %v4797 = vpack.c.b16 %v4673, %v4672
    %v4798 = vpack.c.b16 %v4675, %v4674
    %v4799 = vpack.c.b16 %v4677, %v4676
    %v4800 = vpack.c.b16 %v4679, %v4678
    %v4801 = vpack.c.b16 %v4681, %v4680
    %v4802 = vpack.c.b16 %v4683, %v4682
    %v4803 = vpack.c.b16 %v4685, %v4684
    %v4804 = vpack.c.b16 %v4687, %v4686
    %v4805 = vpack.c.b16 %v4689, %v4688
    %v4806 = vpack.c.b16 %v4691, %v4690
    %v4807 = vpack.c.b16 %v4693, %v4692
    %v4808 = vpack.c.b16 %v4695, %v4694
    %v4809 = vpack.c.b16 %v4697, %v4696
    %v4810 = vpack.c.b16 %v4699, %v4698
    %v4811 = vpack.c.b16 %v4701, %v4700
    %v4812 = vpack.c.b16 %v4703, %v4702
    %v4813 = vpack.c.b16 %v4705, %v4704
    %v4814 = vpack.c.b16 %v4707, %v4706
    %v4815 = vpack.c.b16 %v4709, %v4708
    %v4816 = vpack.c.b16 %v4711, %v4710
    %v4817 = vpack.c.b16 %v4713, %v4712
    %v4818 = vpack.c.b16 %v4715, %v4714
    %v4819 = vpack.c.b16 %v4717, %v4716
    %v4820 = vpack.c.b16 %v4719, %v4718
    %v4821 = vpack.c.b16 %v4721, %v4720
    %v4822 = vpack.c.b16 %v4723, %v4722
    %v4823 = vpack.c.b16 %v4725, %v4724
    %v4824 = vpack.c.b16 %v4727, %v4726
    %v4825 = vpack.c.b16 %v4729, %v4728
    %v4826 = vpack.c.b16 %v4731, %v4730
    %v4827 = vpack.c.b16 %v4733, %v4732
    %v4828 = vpack.c.b16 %v4735, %v4734
    %v4829 = vpack.c.b16 %v4737, %v4736
    %v4830 = vpack.c.b16 %v4739, %v4738
    %v4831 = vpack.c.b16 %v4741, %v4740
    %v4832 = vpack.c.b16 %v4743, %v4742
    %v4833 = vpack.c.b16 %v4745, %v4744
    %v4834 = vpack.c.b16 %v4747, %v4746
    %v4835 = vpack.c.b16 %v4749, %v4748
    %v4836 = vpack.c.b16 %v4751, %v4750
    %v4837 = vpack.c.b16 %v4753, %v4752
    %v4838 = vpack.c.b16 %v4755, %v4754
    %v4839 = vpack.c.b16 %v4757, %v4756
    %v4840 = vpack.c.b16 %v4759, %v4758
    %v4841 = vpack.c.b16 %v4761, %v4760
    %v4842 = vpack.c.b16 %v4763, %v4762
    %v4843 = vpack.c.b16 %v4765, %v4764
    %v4844 = vpack.c.b16 %v4767, %v4766
    %v4845 = vpack.c.b16 %v4769, %v4768
    %v4846 = vpack.c.b16 %v4771, %v4770
    %v4847 = vpack.c.b16 %v4773, %v4772
    %v4848 = vpack.c.b16 %v4775, %v4774
    %v4849 = vpack.c.b16 %v4777, %v4776
    %v4850 = vpack.c.b16 %v4779, %v4778
    %v4851 = vpack.c.b16 %v4781, %v4780
    %v4852 = vpack.c.b16 %v4783, %v4782
    %v4853 = vpack.c.b16 %v4785, %v4784
    %v4854 = vpack.c.b16 %v4787, %v4786
    %v4855 = vpack.c.b16 %v4789, %v4788
    %v4856 = vpack.c.b16 %v4791, %v4790
    %v4857 = vpack.c.b16 %v4793, %v4792
    %4922 = vmatpush.bf16.msra.mxu0 %v4801
    %4923 = vmatpush.bf16.msra.mxu0 %v4800
    %4924 = vmatpush.bf16.msra.mxu0 %v4799
    %4925 = vmatpush.bf16.msra.mxu0 %v4798
    %4926 = vmatpush.bf16.msra.mxu0 %v4797
    %4927 = vmatpush.bf16.msra.mxu0 %v4796
    %4928 = vmatpush.bf16.msra.mxu0 %v4795
    %4929 = vmatpush.bf16.msra.mxu0 %v4794
    %4930 = vmatmul.bf16.gmra.mxu0 %v265
    %v4931 = vpop.f32.mrf.mxu0
    %v4932 = vadd.f32 0.0, %v4931
    %v4933 = vpop.f32.mrf.mxu0
    %4934 = vdwg.mxu0
    %4935 = vmatpush.bf16.msra.mxu0 %v4809
    %4936 = vmatpush.bf16.msra.mxu0 %v4808
    %4937 = vmatpush.bf16.msra.mxu0 %v4807
    %4938 = vmatpush.bf16.msra.mxu0 %v4806
    %4939 = vmatpush.bf16.msra.mxu0 %v4805
    %4940 = vmatpush.bf16.msra.mxu0 %v4804
    %4941 = vmatpush.bf16.msra.mxu0 %v4803
    %4942 = vmatpush.bf16.msra.mxu0 %v4802
    %4943 = vmatmul.bf16.gmra.mxu0 %v266
    %v4944 = vpop.f32.mrf.mxu0
    %v4945 = vadd.f32 %v4932, %v4944
    %v4946 = vpop.f32.mrf.mxu0
    %4947 = vdwg.mxu0
    %4948 = vmatpush.bf16.msra.mxu0 %v4817
    %4949 = vmatpush.bf16.msra.mxu0 %v4816
    %4950 = vmatpush.bf16.msra.mxu0 %v4815
    %4951 = vmatpush.bf16.msra.mxu0 %v4814
    %4952 = vmatpush.bf16.msra.mxu0 %v4813
    %4953 = vmatpush.bf16.msra.mxu0 %v4812
    %4954 = vmatpush.bf16.msra.mxu0 %v4811
    %4955 = vmatpush.bf16.msra.mxu0 %v4810
    %4956 = vmatmul.bf16.gmra.mxu0 %v267
    %v4957 = vpop.f32.mrf.mxu0
    %v4958 = vadd.f32 %v4945, %v4957
    %v4959 = vpop.f32.mrf.mxu0
    %4960 = vdwg.mxu0
    %4961 = vmatpush.bf16.msra.mxu0 %v4825
    %4962 = vmatpush.bf16.msra.mxu0 %v4824
    %4963 = vmatpush.bf16.msra.mxu0 %v4823
    %4964 = vmatpush.bf16.msra.mxu0 %v4822
    %4965 = vmatpush.bf16.msra.mxu0 %v4821
    %4966 = vmatpush.bf16.msra.mxu0 %v4820
    %4967 = vmatpush.bf16.msra.mxu0 %v4819
    %4968 = vmatpush.bf16.msra.mxu0 %v4818
    %4969 = vmatmul.bf16.gmra.mxu0 %v268
    %v4970 = vpop.f32.mrf.mxu0
    %v4971 = vadd.f32 %v4958, %v4970
    %v4972 = vpop.f32.mrf.mxu0
    %4973 = vdwg.mxu0
    %4974 = vmatpush.bf16.msra.mxu0 %v4833
    %4975 = vmatpush.bf16.msra.mxu0 %v4832
    %4976 = vmatpush.bf16.msra.mxu0 %v4831
    %4977 = vmatpush.bf16.msra.mxu0 %v4830
    %4978 = vmatpush.bf16.msra.mxu0 %v4829
    %4979 = vmatpush.bf16.msra.mxu0 %v4828
    %4980 = vmatpush.bf16.msra.mxu0 %v4827
    %4981 = vmatpush.bf16.msra.mxu0 %v4826
    %4982 = vmatmul.bf16.gmra.mxu0 %v269
    %v4983 = vpop.f32.mrf.mxu0
    %v4984 = vadd.f32 %v4971, %v4983
    %v4985 = vpop.f32.mrf.mxu0
    %4986 = vdwg.mxu0
    %4987 = vmatpush.bf16.msra.mxu0 %v4841
    %4988 = vmatpush.bf16.msra.mxu0 %v4840
    %4989 = vmatpush.bf16.msra.mxu0 %v4839
    %4990 = vmatpush.bf16.msra.mxu0 %v4838
    %4991 = vmatpush.bf16.msra.mxu0 %v4837
    %4992 = vmatpush.bf16.msra.mxu0 %v4836
    %4993 = vmatpush.bf16.msra.mxu0 %v4835
    %4994 = vmatpush.bf16.msra.mxu0 %v4834
    %4995 = vmatmul.bf16.gmra.mxu0 %v270
    %v4996 = vpop.f32.mrf.mxu0
    %v4997 = vadd.f32 %v4984, %v4996
    %v4998 = vpop.f32.mrf.mxu0
    %4999 = vdwg.mxu0
    %5000 = vmatpush.bf16.msra.mxu0 %v4849
    %5001 = vmatpush.bf16.msra.mxu0 %v4848
    %5002 = vmatpush.bf16.msra.mxu0 %v4847
    %5003 = vmatpush.bf16.msra.mxu0 %v4846
    %5004 = vmatpush.bf16.msra.mxu0 %v4845
    %5005 = vmatpush.bf16.msra.mxu0 %v4844
    %5006 = vmatpush.bf16.msra.mxu0 %v4843
    %5007 = vmatpush.bf16.msra.mxu0 %v4842
    %5008 = vmatmul.bf16.gmra.mxu0 %v271
    %v5009 = vpop.f32.mrf.mxu0
    %v5010 = vadd.f32 %v4997, %v5009
    %v5011 = vpop.f32.mrf.mxu0
    %5012 = vdwg.mxu0
    %5013 = vmatpush.bf16.msra.mxu0 %v4857
    %5014 = vmatpush.bf16.msra.mxu0 %v4856
    %5015 = vmatpush.bf16.msra.mxu0 %v4855
    %5016 = vmatpush.bf16.msra.mxu0 %v4854
    %5017 = vmatpush.bf16.msra.mxu0 %v4853
    %5018 = vmatpush.bf16.msra.mxu0 %v4852
    %5019 = vmatpush.bf16.msra.mxu0 %v4851
    %5020 = vmatpush.bf16.msra.mxu0 %v4850
    %5021 = vmatmul.bf16.gmra.mxu0 %v272
    %v5022 = vpop.f32.mrf.mxu0
    %v5023 = vadd.f32 %v5010, %v5022
    %v5024 = vpop.f32.mrf.mxu0
    %5025 = vdwg.mxu0
    %v5026 = vadd.f32 %v4537, %v5023
    %vm5027 = vcmask 130048
    %5028 = vst.msk [vmem:[#allocation5] sm:$0xff] %vm5027, %v5026
    %v5029 = vld [vmem:[#allocation7] sm:$0x3]
    %5030 = vmatpush.bf16.msra.mxu0 %v4801
    %5031 = vmatpush.bf16.msra.mxu0 %v4800
    %5032 = vmatpush.bf16.msra.mxu0 %v4799
    %5033 = vmatpush.bf16.msra.mxu0 %v4798
    %5034 = vmatpush.bf16.msra.mxu0 %v4797
    %5035 = vmatpush.bf16.msra.mxu0 %v4796
    %5036 = vmatpush.bf16.msra.mxu0 %v4795
    %5037 = vmatpush.bf16.msra.mxu0 %v4794
    %5038 = vmatmul.bf16.gmra.mxu0 %v305
    %v5039 = vpop.f32.mrf.mxu0
    %v5040 = vadd.f32 0.0, %v5039
    %v5041 = vpop.f32.mrf.mxu0
    %5042 = vdwg.mxu0
    %5043 = vmatpush.bf16.msra.mxu0 %v4809
    %5044 = vmatpush.bf16.msra.mxu0 %v4808
    %5045 = vmatpush.bf16.msra.mxu0 %v4807
    %5046 = vmatpush.bf16.msra.mxu0 %v4806
    %5047 = vmatpush.bf16.msra.mxu0 %v4805
    %5048 = vmatpush.bf16.msra.mxu0 %v4804
    %5049 = vmatpush.bf16.msra.mxu0 %v4803
    %5050 = vmatpush.bf16.msra.mxu0 %v4802
    %5051 = vmatmul.bf16.gmra.mxu0 %v306
    %v5052 = vpop.f32.mrf.mxu0
    %v5053 = vadd.f32 %v5040, %v5052
    %v5054 = vpop.f32.mrf.mxu0
    %5055 = vdwg.mxu0
    %5056 = vmatpush.bf16.msra.mxu0 %v4817
    %5057 = vmatpush.bf16.msra.mxu0 %v4816
    %5058 = vmatpush.bf16.msra.mxu0 %v4815
    %5059 = vmatpush.bf16.msra.mxu0 %v4814
    %5060 = vmatpush.bf16.msra.mxu0 %v4813
    %5061 = vmatpush.bf16.msra.mxu0 %v4812
    %5062 = vmatpush.bf16.msra.mxu0 %v4811
    %5063 = vmatpush.bf16.msra.mxu0 %v4810
    %5064 = vmatmul.bf16.gmra.mxu0 %v307
    %v5065 = vpop.f32.mrf.mxu0
    %v5066 = vadd.f32 %v5053, %v5065
    %v5067 = vpop.f32.mrf.mxu0
    %5068 = vdwg.mxu0
    %5069 = vmatpush.bf16.msra.mxu0 %v4825
    %5070 = vmatpush.bf16.msra.mxu0 %v4824
    %5071 = vmatpush.bf16.msra.mxu0 %v4823
    %5072 = vmatpush.bf16.msra.mxu0 %v4822
    %5073 = vmatpush.bf16.msra.mxu0 %v4821
    %5074 = vmatpush.bf16.msra.mxu0 %v4820
    %5075 = vmatpush.bf16.msra.mxu0 %v4819
    %5076 = vmatpush.bf16.msra.mxu0 %v4818
    %5077 = vmatmul.bf16.gmra.mxu0 %v308
    %v5078 = vpop.f32.mrf.mxu0
    %v5079 = vadd.f32 %v5066, %v5078
    %v5080 = vpop.f32.mrf.mxu0
    %5081 = vdwg.mxu0
    %5082 = vmatpush.bf16.msra.mxu0 %v4833
    %5083 = vmatpush.bf16.msra.mxu0 %v4832
    %5084 = vmatpush.bf16.msra.mxu0 %v4831
    %5085 = vmatpush.bf16.msra.mxu0 %v4830
    %5086 = vmatpush.bf16.msra.mxu0 %v4829
    %5087 = vmatpush.bf16.msra.mxu0 %v4828
    %5088 = vmatpush.bf16.msra.mxu0 %v4827
    %5089 = vmatpush.bf16.msra.mxu0 %v4826
    %5090 = vmatmul.bf16.gmra.mxu0 %v309
    %v5091 = vpop.f32.mrf.mxu0
    %v5092 = vadd.f32 %v5079, %v5091
    %v5093 = vpop.f32.mrf.mxu0
    %5094 = vdwg.mxu0
    %5095 = vmatpush.bf16.msra.mxu0 %v4841
    %5096 = vmatpush.bf16.msra.mxu0 %v4840
    %5097 = vmatpush.bf16.msra.mxu0 %v4839
    %5098 = vmatpush.bf16.msra.mxu0 %v4838
    %5099 = vmatpush.bf16.msra.mxu0 %v4837
    %5100 = vmatpush.bf16.msra.mxu0 %v4836
    %5101 = vmatpush.bf16.msra.mxu0 %v4835
    %5102 = vmatpush.bf16.msra.mxu0 %v4834
    %5103 = vmatmul.bf16.gmra.mxu0 %v310
    %v5104 = vpop.f32.mrf.mxu0
    %v5105 = vadd.f32 %v5092, %v5104
    %v5106 = vpop.f32.mrf.mxu0
    %5107 = vdwg.mxu0
    %5108 = vmatpush.bf16.msra.mxu0 %v4849
    %5109 = vmatpush.bf16.msra.mxu0 %v4848
    %5110 = vmatpush.bf16.msra.mxu0 %v4847
    %5111 = vmatpush.bf16.msra.mxu0 %v4846
    %5112 = vmatpush.bf16.msra.mxu0 %v4845
    %5113 = vmatpush.bf16.msra.mxu0 %v4844
    %5114 = vmatpush.bf16.msra.mxu0 %v4843
    %5115 = vmatpush.bf16.msra.mxu0 %v4842
    %5116 = vmatmul.bf16.gmra.mxu0 %v311
    %v5117 = vpop.f32.mrf.mxu0
    %v5118 = vadd.f32 %v5105, %v5117
    %v5119 = vpop.f32.mrf.mxu0
    %5120 = vdwg.mxu0
    %5121 = vmatpush.bf16.msra.mxu0 %v4857
    %5122 = vmatpush.bf16.msra.mxu0 %v4856
    %5123 = vmatpush.bf16.msra.mxu0 %v4855
    %5124 = vmatpush.bf16.msra.mxu0 %v4854
    %5125 = vmatpush.bf16.msra.mxu0 %v4853
    %5126 = vmatpush.bf16.msra.mxu0 %v4852
    %5127 = vmatpush.bf16.msra.mxu0 %v4851
    %5128 = vmatpush.bf16.msra.mxu0 %v4850
    %5129 = vmatmul.bf16.gmra.mxu0 %v312
    %v5130 = vpop.f32.mrf.mxu0
    %v5131 = vadd.f32 %v5118, %v5130
    %v5132 = vpop.f32.mrf.mxu0
    %5133 = vdwg.mxu0
    %v5134 = vadd.f32 %v5029, %v5131
    %vm5135 = vcmask 123904
    %5136 = vst.msk [vmem:[#allocation7] sm:$0x3] %vm5135, %v5134
    %s5137 = sadd.s32 0, 0
    %s5138 = smul.u32 128, %s5137
    %p5139 = scmp.lt.s32.totalorder %s5138, 127
    %s5140 = scalar_select %p5139, %s5138, 127
    %s5141 = smul.addr %s5140, 4
    %s5142 = scalar_lea.vmem %s11, %s5141
    // Predicated region
    $region50: #{tpu_custom_call.1} parent=1 // pred_check
      _
    $region51: #{tpu_custom_call.1} parent=1 // pred_check_branch
      %5144 = sbr.rel (0) target = $region53
    $region52: #{tpu_custom_call.1} parent=1 // pred_region
      %s5145 = sadd.s32 0, 0
      %s5146 = smul.u32 128, %s5145
    $region53: #{tpu_custom_call.1} parent=1 // pred_fallthru
      _
    // Predicated region
    $region54: #{tpu_custom_call.1} parent=1 // pred_check
      _
    $region55: #{tpu_custom_call.1} parent=1 // pred_check_branch
      %5148 = sbr.rel (0) target = $region57
    $region56: #{tpu_custom_call.1} parent=1 // pred_region
      %5150 = vsyncadd [#allocation6], 0
      %s5152 = sshll.u32 [#allocation5], 4
      %s5153 = int_to_ptr.vmem [resolvable:$true] %s5152
      %s5154 = sshll.u32 %s12, 4
      %s5155 = int_to_ptr.hbm [resolvable:$true] %s5154
      %5157 = dma.vmem_to_hbm [thread:$0]  %s5153, 128, %s5155, [#allocation6]
    $region57: #{tpu_custom_call.1} parent=1 // pred_fallthru
      _
    // Predicated region
    $region58: #{tpu_custom_call.1} parent=1 // pred_check
      _
    $region59: #{tpu_custom_call.1} parent=1 // pred_check_branch
      %5159 = sbr.rel (0) target = $region61
    $region60: #{tpu_custom_call.1} parent=1 // pred_region
      %5161 = vsyncadd [#allocation8], 0
      %s5163 = sshll.u32 [#allocation7], 4
      %s5164 = int_to_ptr.vmem [resolvable:$true] %s5163
      %s5165 = sshll.u32 %s13, 4
      %s5166 = int_to_ptr.hbm [resolvable:$true] %s5165
      %5168 = dma.vmem_to_hbm [thread:$0]  %s5164, 32, %s5166, [#allocation8]
    $region61: #{tpu_custom_call.1} parent=1 // pred_fallthru
      _
    // Predicated region
    $region62: #{tpu_custom_call.1} parent=1 // pred_check
      _
    $region63: #{tpu_custom_call.1} parent=1 // pred_check_branch
      %5170 = sbr.rel (0) target = $region65
    $region64: #{tpu_custom_call.1} parent=1 // pred_region
      %s5171 = sadd.s32 0, 0
      %s5172 = smul.u32 128, %s5171
      %p5173 = scmp.lt.s32.totalorder %s5172, 127
      %s5174 = scalar_select %p5173, %s5172, 127
      %s5175 = smul.addr %s5174, 4
      %s5176 = scalar_lea.vmem %s11, %s5175
    $region65: #{tpu_custom_call.1} parent=1 // pred_fallthru
      _
    // Predicated region
    $region66: #{tpu_custom_call.1} parent=1 // pred_check
      _
    $region67: #{tpu_custom_call.1} parent=1 // pred_check_branch
      %5178 = sbr.rel (0) target = $region69
    $region68: #{tpu_custom_call.1} parent=1 // pred_region
      %5180 = dma.done [#allocation6], 128
    $region69: #{tpu_custom_call.1} parent=1 // pred_fallthru
      _
    // Predicated region
    $region70: #{tpu_custom_call.1} parent=1 // pred_check
      _
    $region71: #{tpu_custom_call.1} parent=1 // pred_check_branch
      %5182 = sbr.rel (0) target = $region73
    $region72: #{tpu_custom_call.1} parent=1 // pred_region
      %5184 = dma.done [#allocation8], 32
    $region73: #{tpu_custom_call.1} parent=1 // pred_fallthru
      _
    %5185 = vsyncpa [#allocation6], 1
    %5186 = vsyncpa [#allocation8], 1

</llo_original>
